<compile_context>
chip_gen: v5e
topology: v5e:2x2
jax: 0.10.0
libtpu: 0.0.40
codegen_flags: <defaults>
</compile_context>

<pallas_src>
import jax
import jax.numpy as jnp
from jax import lax
from jax.experimental import pallas as pl
from jax.experimental.pallas import tpu as pltpu


# --------------------------------------------------------------------------
# Fused Pallas kernel: 1x1 conv+BN -> (upsample + attention fuse) -> 3x3 conv+BN
# --------------------------------------------------------------------------

def _make_abf_kernel(fuse, H, W, Cin, Cmid, Cout):
    def kernel(*refs):
        if fuse:
            (x_ref, y_ref, sel_ref, w1_ref, b1_ref, watt_ref, batt_ref,
             w2_ref, b2_ref, out_ref, xmid_ref, xpad_ref) = refs
        else:
            (x_ref, w1_ref, b1_ref, w2_ref, b2_ref,
             out_ref, xmid_ref, xpad_ref) = refs

        # ---- 1x1 conv + folded BN (scale already folded into w1) ----
        x = x_ref[0].reshape(H * W, Cin)
        x1 = jnp.dot(x, w1_ref[...],
                     preferred_element_type=jnp.float32) + b1_ref[...]

        if fuse:
            # Nearest upsample of the small y image, as an exact 0/1 selection
            # matmul done entirely in VMEM (no HBM y_up tensor).
            y_src = y_ref[0].reshape(-1, Cmid)              # (Hy*Wy, Cmid)
            y_up = jnp.dot(sel_ref[...], y_src,
                           preferred_element_type=jnp.float32)  # (H*W, Cmid)

            # Attention logits via VPU multiply + lane reduction instead of a
            # nearly-empty 2-column MXU matmul.
            wr = watt_ref[...]                   # rows: [wx0, wy0, wx1, wy1]
            b = batt_ref[...]                    # (1, 2)
            s0 = (jnp.sum(x1 * wr[0:1, :] + y_up * wr[1:2, :],
                          axis=-1, keepdims=True) + b[0:1, 0:1])
            s1 = (jnp.sum(x1 * wr[2:3, :] + y_up * wr[3:4, :],
                          axis=-1, keepdims=True) + b[0:1, 1:2])
            x1 = x1 * jax.nn.sigmoid(s0) + y_up * jax.nn.sigmoid(s1)

        xmid_ref[...] = x1.reshape(1, H, W, Cmid).astype(xmid_ref.dtype)

        # ---- 3x3 conv + folded BN; zero padding built in VMEM scratch ----
        xpad_ref[...] = jnp.zeros((H + 2, W + 2, Cmid), jnp.float32)
        xpad_ref[1:H + 1, 1:W + 1, :] = x1.reshape(H, W, Cmid)
        xp = xpad_ref[...]

        acc = jnp.zeros((H * W, Cout), jnp.float32)
        # TODO(synk): a per-dy channel-concat patch (K = 3*Cmid) would improve
        #             MXU cadence further; kept as 9 shifted matmuls for
        #             lowering robustness.
        for dy in range(3):
            for dx in range(3):
                patch = xp[dy:dy + H, dx:dx + W, :].reshape(H * W, Cmid)
                acc = acc + jnp.dot(patch, w2_ref[dy, dx],
                                    preferred_element_type=jnp.float32)
        out_ref[...] = (acc + b2_ref[...]).reshape(1, H, W, Cout).astype(out_ref.dtype)

    return kernel


# --------------------------------------------------------------------------
# Public wrapper (NCHW in / NCHW out, like the PyTorch module)
# --------------------------------------------------------------------------

def abf_forward(x, y=None, shape=None, *, params):
    """ABF forward. x: (N, Cin, H, W) NCHW; returns (conv2_out, fused_mid)."""
    N, Cin, H, W = x.shape
    fuse = params["w_att"] is not None
    Cmid = params["w1"].shape[0]
    Cout = params["w2"].shape[0]

    x_nhwc = jnp.transpose(x, (0, 2, 3, 1))                 # (N, H, W, Cin)

    # Fold BN scales into the conv weights on the host (kernels only add bias).
    w1s = params["w1"][:, :, 0, 0].T * params["bn1_scale"][None, :]   # (Cin, Cmid)
    b1 = params["bn1_bias"][None, :]                                   # (1, Cmid)
    w2t = (jnp.transpose(params["w2"], (2, 3, 1, 0))
           * params["bn2_scale"][None, None, None, :])                 # (3,3,Cmid,Cout)
    b2 = params["bn2_bias"][None, :]                                   # (1, Cout)

    inputs = [x_nhwc]
    in_specs = [pl.BlockSpec((1, H, W, Cin), lambda n: (n, 0, 0, 0))]

    if fuse:
        assert shape == H and shape == W, "attention fuse expects shape == H == W"
        y_nhwc = jnp.transpose(y, (0, 2, 3, 1))             # (N, Hy, Wy, Cmid)
        Hy, Wy = y_nhwc.shape[1], y_nhwc.shape[2]
        # Exact integer nearest indexing (matches PyTorch: src = floor(dst*in/out)).
        ri = (jnp.arange(H, dtype=jnp.int32) * Hy) // H
        ci = (jnp.arange(W, dtype=jnp.int32) * Wy) // W
        src = (ri[:, None] * Wy + ci[None, :]).reshape(H * W)
        sel = (src[:, None] ==
               jnp.arange(Hy * Wy, dtype=jnp.int32)[None, :]).astype(x.dtype)

        w_att = params["w_att"][:, :, 0, 0]                 # (2, 2*Cmid)
        watt = jnp.stack([w_att[0, :Cmid], w_att[0, Cmid:],
                          w_att[1, :Cmid], w_att[1, Cmid:]], axis=0)  # (4, Cmid)
        batt = params["b_att"][None, :]                     # (1, 2)

        inputs += [y_nhwc, sel]
        in_specs += [pl.BlockSpec((1, Hy, Wy, Cmid), lambda n: (n, 0, 0, 0)),
                     pl.BlockSpec((H * W, Hy * Wy), lambda n: (0, 0))]

    inputs += [w1s, b1]
    in_specs += [pl.BlockSpec((Cin, Cmid), lambda n: (0, 0)),
                 pl.BlockSpec((1, Cmid), lambda n: (0, 0))]
    if fuse:
        inputs += [watt, batt]
        in_specs += [pl.BlockSpec((4, Cmid), lambda n: (0, 0)),
                     pl.BlockSpec((1, 2), lambda n: (0, 0))]
    inputs += [w2t, b2]
    in_specs += [pl.BlockSpec((3, 3, Cmid, Cout), lambda n: (0, 0, 0, 0)),
                 pl.BlockSpec((1, Cout), lambda n: (0, 0))]

    kernel = _make_abf_kernel(fuse, H, W, Cin, Cmid, Cout)

    y_out, x_mid = pl.pallas_call(
        kernel,
        out_shape=(jax.ShapeDtypeStruct((N, H, W, Cout), x.dtype),
                   jax.ShapeDtypeStruct((N, H, W, Cmid), x.dtype)),
        grid_spec=pltpu.PrefetchScalarGridSpec(
            num_scalar_prefetch=0,
            grid=(N,),
            in_specs=in_specs,
            out_specs=[pl.BlockSpec((1, H, W, Cout), lambda n: (n, 0, 0, 0)),
                       pl.BlockSpec((1, H, W, Cmid), lambda n: (n, 0, 0, 0))],
            scratch_shapes=[pltpu.VMEM((H + 2, W + 2, Cmid), jnp.float32)]),
        compiler_params=pltpu.CompilerParams(
            dimension_semantics=("parallel",),
            vmem_limit_bytes=48 * 1024 * 1024),   # explicit budget (fits v5e/v6e/v7x)
    )(*inputs)

    return jnp.transpose(y_out, (0, 3, 1, 2)), jnp.transpose(x_mid, (0, 3, 1, 2))


# --------------------------------------------------------------------------
# Parameter setup + pure-JAX reference (correctness check only)
# --------------------------------------------------------------------------

def init_params(key, in_channel, mid_channel, out_channel, fuse=True):
    ks = jax.random.split(key, 12)

    def kaiming_uniform(k, shape, fan_in, a):
        gain = (2.0 / (1.0 + a * a)) ** 0.5
        bound = gain * (3.0 / fan_in) ** 0.5
        return jax.random.uniform(k, shape, jnp.float32, -bound, bound)

    eps = 1e-5

    def bn_fold(kg, kb, km, kv, c):
        gamma = 1.0 + 0.1 * jax.random.normal(kg, (c,), jnp.float32)
        beta = 0.1 * jax.random.normal(kb, (c,), jnp.float32)
        mean = 0.1 * jax.random.normal(km, (c,), jnp.float32)
        var = jnp.abs(jax.random.normal(kv, (c,), jnp.float32)) + 0.5
        scale = gamma / jnp.sqrt(var + eps)
        return scale, beta - mean * scale

    p = {
        "w1": kaiming_uniform(ks[0], (mid_channel, in_channel, 1, 1),
                              in_channel, 1.0),
        "w2": kaiming_uniform(ks[1], (out_channel, mid_channel, 3, 3),
                              mid_channel * 9, 1.0),
    }
    p["bn1_scale"], p["bn1_bias"] = bn_fold(ks[2], ks[3], ks[4], ks[5], mid_channel)
    p["bn2_scale"], p["bn2_bias"] = bn_fold(ks[6], ks[7], ks[8], ks[9], out_channel)
    if fuse:
        fan_in = 2 * mid_channel
        p["w_att"] = kaiming_uniform(ks[10], (2, 2 * mid_channel, 1, 1),
                                     fan_in, 5.0 ** 0.5)
        b_bound = 1.0 / fan_in ** 0.5
        p["b_att"] = jax.random.uniform(ks[11], (2,), jnp.float32, -b_bound, b_bound)
    else:
        p["w_att"] = None
        p["b_att"] = None
    return p


def nearest_resize_nchw(y, out_h, out_w):
    # Integer nearest indexing: src = (dst * in) // out  (matches PyTorch nearest)
    Hin, Win = y.shape[2], y.shape[3]
    ri = (jnp.arange(out_h) * Hin) // out_h
    ci = (jnp.arange(out_w) * Win) // out_w
    return y[:, :, ri][:, :, :, ci]


def abf_reference(x, y, params, shape):
    dn = ("NCHW", "OIHW", "NCHW")
    x1 = lax.conv_general_dilated(x, params["w1"], (1, 1), "VALID",
                                  dimension_numbers=dn)
    x1 = (x1 * params["bn1_scale"][None, :, None, None]
          + params["bn1_bias"][None, :, None, None])
    if params["w_att"] is not None:
        y_up = nearest_resize_nchw(y, shape, shape)
        z = lax.conv_general_dilated(jnp.concatenate([x1, y_up], axis=1),
                                     params["w_att"], (1, 1), "VALID",
                                     dimension_numbers=dn)
        z = jax.nn.sigmoid(z + params["b_att"][None, :, None, None])
        x1 = x1 * z[:, 0:1] + y_up * z[:, 1:2]
    y2 = lax.conv_general_dilated(x1, params["w2"], (1, 1),
                                  ((1, 1), (1, 1)), dimension_numbers=dn)
    y2 = (y2 * params["bn2_scale"][None, :, None, None]
          + params["bn2_bias"][None, :, None, None])
    return y2, x1


if __name__ == "__main__":
    key = jax.random.PRNGKey(0)
    N, Cin, Cmid, Cout, H, W = 2, 16, 32, 32, 16, 16
    kx, ky, kp, kp2 = jax.random.split(key, 4)
    x = jax.random.normal(kx, (N, Cin, H, W), jnp.float32)
    y = jax.random.normal(ky, (N, Cmid, 8, 8), jnp.float32)  # coarse residual input

    # --- fuse=True path (1x1 conv + nearest upsample + attention + 3x3 conv) ---
    params = init_params(kp, Cin, Cmid, Cout, fuse=True)
    y_out, x_mid = abf_forward(x, y, shape=H, params=params)
    jax.block_until_ready((y_out, x_mid))
    y_ref, x_ref = abf_reference(x, y, params, H)
    assert y_out.shape == (N, Cout, H, W) and x_mid.shape == (N, Cmid, H, W)
    assert jnp.allclose(x_mid, x_ref, atol=5e-2, rtol=5e-2), \
        float(jnp.max(jnp.abs(x_mid - x_ref)))
    assert jnp.allclose(y_out, y_ref, atol=5e-2, rtol=5e-2), \
        float(jnp.max(jnp.abs(y_out - y_ref)))

    # --- fuse=False path (1x1 conv + 3x3 conv only) ---
    params_nf = init_params(kp2, Cin, Cmid, Cout, fuse=False)
    y_out2, x_mid2 = abf_forward(x, params=params_nf)
    jax.block_until_ready((y_out2, x_mid2))
    y_ref2, x_ref2 = abf_reference(x, None, params_nf, None)
    assert jnp.allclose(x_mid2, x_ref2, atol=5e-2, rtol=5e-2), \
        float(jnp.max(jnp.abs(x_mid2 - x_ref2)))
    assert jnp.allclose(y_out2, y_ref2, atol=5e-2, rtol=5e-2), \
        float(jnp.max(jnp.abs(y_out2 - y_ref2)))

    print("KERNEL_OK")
</pallas_src>

<mosaic_0001>
module attributes {stable_mosaic.version = 11 : i64} {
  func.func @kernel(%arg0: i32, %arg1: memref<1x16x16x16xf32, #tpu.memory_space<vmem>>, %arg2: memref<1x8x8x32xf32, #tpu.memory_space<vmem>>, %arg3: memref<256x64xf32, #tpu.memory_space<vmem>>, %arg4: memref<16x32xf32, #tpu.memory_space<vmem>>, %arg5: memref<1x32xf32, #tpu.memory_space<vmem>>, %arg6: memref<4x32xf32, #tpu.memory_space<vmem>>, %arg7: memref<1x2xf32, #tpu.memory_space<vmem>>, %arg8: memref<3x3x32x32xf32, #tpu.memory_space<vmem>>, %arg9: memref<1x32xf32, #tpu.memory_space<vmem>>, %arg10: memref<1x16x16x32xf32, #tpu.memory_space<vmem>>, %arg11: memref<1x16x16x32xf32, #tpu.memory_space<vmem>>, %arg12: memref<18x18x32xf32, #tpu.memory_space<vmem>>) attributes {dimension_semantics = [#tpu.dimension_semantics<parallel>], iteration_bounds = array<i64: 2>, scalar_prefetch = 0 : i64, scratch_operands = 1 : i64, tpu.core_type = #tpu.core_type<tc>, window_params = [{transform_indices = @transform_0, window_bounds = array<i64: 1, 16, 16, 16>}, {transform_indices = @transform_1, window_bounds = array<i64: 1, 8, 8, 32>}, {pipeline_mode = #tpu.pipeline_mode<synchronous>, transform_indices = @transform_2, window_bounds = array<i64: 256, 64>}, {pipeline_mode = #tpu.pipeline_mode<synchronous>, transform_indices = @transform_3, window_bounds = array<i64: 16, 32>}, {pipeline_mode = #tpu.pipeline_mode<synchronous>, transform_indices = @transform_4, window_bounds = array<i64: 1, 32>}, {pipeline_mode = #tpu.pipeline_mode<synchronous>, transform_indices = @transform_5, window_bounds = array<i64: 4, 32>}, {pipeline_mode = #tpu.pipeline_mode<synchronous>, transform_indices = @transform_6, window_bounds = array<i64: 1, 2>}, {pipeline_mode = #tpu.pipeline_mode<synchronous>, transform_indices = @transform_7, window_bounds = array<i64: 3, 3, 32, 32>}, {pipeline_mode = #tpu.pipeline_mode<synchronous>, transform_indices = @transform_8, window_bounds = array<i64: 1, 32>}, {transform_indices = @transform_9, window_bounds = array<i64: 1, 16, 16, 32>}, {transform_indices = @transform_10, window_bounds = array<i64: 1, 16, 16, 32>}]} {
    %c0 = arith.constant 0 : index
    %c0_0 = arith.constant 0 : index
    %c0_1 = arith.constant 0 : index
    %c0_2 = arith.constant 0 : index
    %0 = vector.load %arg1[%c0, %c0_0, %c0_1, %c0_2] : memref<1x16x16x16xf32, #tpu.memory_space<vmem>>, vector<1x16x16x16xf32>
    %1 = vector.shape_cast %0 : vector<1x16x16x16xf32> to vector<16x16x16xf32>
    %2 = vector.shape_cast %1 : vector<16x16x16xf32> to vector<256x16xf32>
    %c0_3 = arith.constant 0 : index
    %c0_4 = arith.constant 0 : index
    %3 = vector.load %arg4[%c0_3, %c0_4] : memref<16x32xf32, #tpu.memory_space<vmem>>, vector<16x32xf32>
    %cst = arith.constant dense<0.000000e+00> : vector<256x32xf32>
    %4 = tpu.matmul %2, %3, %cst {dimension_numbers = #tpu.dot_dimension_numbers<[1], [0], [0], [1], [0, 0, 1, 1], [], []>} : vector<256x16xf32>, vector<16x32xf32>, vector<256x32xf32> -> vector<256x32xf32>
    %c0_5 = arith.constant 0 : index
    %c0_6 = arith.constant 0 : index
    %5 = vector.load %arg5[%c0_5, %c0_6] : memref<1x32xf32, #tpu.memory_space<vmem>>, vector<1x32xf32>
    %6 = vector.broadcast %5 : vector<1x32xf32> to vector<256x32xf32>
    %7 = arith.addf %4, %6 : vector<256x32xf32>
    %c0_7 = arith.constant 0 : index
    %c0_8 = arith.constant 0 : index
    %c0_9 = arith.constant 0 : index
    %c0_10 = arith.constant 0 : index
    %8 = vector.load %arg2[%c0_7, %c0_8, %c0_9, %c0_10] : memref<1x8x8x32xf32, #tpu.memory_space<vmem>>, vector<1x8x8x32xf32>
    %9 = vector.shape_cast %8 : vector<1x8x8x32xf32> to vector<8x8x32xf32>
    %10 = vector.shape_cast %9 : vector<8x8x32xf32> to vector<64x32xf32>
    %c0_11 = arith.constant 0 : index
    %c0_12 = arith.constant 0 : index
    %11 = vector.load %arg3[%c0_11, %c0_12] : memref<256x64xf32, #tpu.memory_space<vmem>>, vector<256x64xf32>
    %cst_13 = arith.constant dense<0.000000e+00> : vector<256x32xf32>
    %12 = tpu.matmul %11, %10, %cst_13 {dimension_numbers = #tpu.dot_dimension_numbers<[1], [0], [0], [1], [0, 0, 1, 1], [], []>} : vector<256x64xf32>, vector<64x32xf32>, vector<256x32xf32> -> vector<256x32xf32>
    %c0_14 = arith.constant 0 : index
    %c0_15 = arith.constant 0 : index
    %13 = vector.load %arg6[%c0_14, %c0_15] : memref<4x32xf32, #tpu.memory_space<vmem>>, vector<4x32xf32>
    %c0_16 = arith.constant 0 : index
    %c0_17 = arith.constant 0 : index
    %14 = vector.load %arg7[%c0_16, %c0_17] : memref<1x2xf32, #tpu.memory_space<vmem>>, vector<1x2xf32>
    %15 = vector.extract_strided_slice %13 {offsets = [0, 0], sizes = [1, 32], strides = [1, 1]} : vector<4x32xf32> to vector<1x32xf32>
    %16 = vector.broadcast %15 : vector<1x32xf32> to vector<256x32xf32>
    %17 = arith.mulf %7, %16 : vector<256x32xf32>
    %18 = vector.extract_strided_slice %13 {offsets = [1, 0], sizes = [1, 32], strides = [1, 1]} : vector<4x32xf32> to vector<1x32xf32>
    %19 = vector.broadcast %18 : vector<1x32xf32> to vector<256x32xf32>
    %20 = arith.mulf %12, %19 : vector<256x32xf32>
    %21 = arith.addf %17, %20 : vector<256x32xf32>
    %cst_18 = arith.constant dense<0.000000e+00> : vector<256xf32>
    %22 = vector.multi_reduction <add>, %21, %cst_18 [1] : vector<256x32xf32> to vector<256xf32>
    %23 = vector.shape_cast %22 : vector<256xf32> to vector<256x1xf32>
    %24 = vector.extract_strided_slice %14 {offsets = [0, 0], sizes = [1, 1], strides = [1, 1]} : vector<1x2xf32> to vector<1x1xf32>
    %25 = vector.broadcast %24 : vector<1x1xf32> to vector<256x1xf32>
    %26 = arith.addf %23, %25 : vector<256x1xf32>
    %27 = vector.extract_strided_slice %13 {offsets = [2, 0], sizes = [1, 32], strides = [1, 1]} : vector<4x32xf32> to vector<1x32xf32>
    %28 = vector.broadcast %27 : vector<1x32xf32> to vector<256x32xf32>
    %29 = arith.mulf %7, %28 : vector<256x32xf32>
    %30 = vector.extract_strided_slice %13 {offsets = [3, 0], sizes = [1, 32], strides = [1, 1]} : vector<4x32xf32> to vector<1x32xf32>
    %31 = vector.broadcast %30 : vector<1x32xf32> to vector<256x32xf32>
    %32 = arith.mulf %12, %31 : vector<256x32xf32>
    %33 = arith.addf %29, %32 : vector<256x32xf32>
    %cst_19 = arith.constant dense<0.000000e+00> : vector<256xf32>
    %34 = vector.multi_reduction <add>, %33, %cst_19 [1] : vector<256x32xf32> to vector<256xf32>
    %35 = vector.shape_cast %34 : vector<256xf32> to vector<256x1xf32>
    %36 = vector.extract_strided_slice %14 {offsets = [0, 1], sizes = [1, 1], strides = [1, 1]} : vector<1x2xf32> to vector<1x1xf32>
    %37 = vector.broadcast %36 : vector<1x1xf32> to vector<256x1xf32>
    %38 = arith.addf %35, %37 : vector<256x1xf32>
    %39 = arith.negf %26 : vector<256x1xf32>
    %40 = math.exp %39 : vector<256x1xf32>
    %cst_20 = arith.constant 1.000000e+00 : f32
    %41 = vector.broadcast %cst_20 : f32 to vector<256x1xf32>
    %42 = arith.addf %41, %40 : vector<256x1xf32>
    %43 = arith.divf %41, %42 : vector<256x1xf32>
    %44 = vector.broadcast %43 : vector<256x1xf32> to vector<256x32xf32>
    %45 = arith.mulf %7, %44 : vector<256x32xf32>
    %46 = arith.negf %38 : vector<256x1xf32>
    %47 = math.exp %46 : vector<256x1xf32>
    %cst_21 = arith.constant 1.000000e+00 : f32
    %48 = vector.broadcast %cst_21 : f32 to vector<256x1xf32>
    %49 = arith.addf %48, %47 : vector<256x1xf32>
    %50 = arith.divf %48, %49 : vector<256x1xf32>
    %51 = vector.broadcast %50 : vector<256x1xf32> to vector<256x32xf32>
    %52 = arith.mulf %12, %51 : vector<256x32xf32>
    %53 = arith.addf %45, %52 : vector<256x32xf32>
    %54 = vector.shape_cast %53 : vector<256x32xf32> to vector<1x16x16x32xf32>
    %c0_22 = arith.constant 0 : index
    %c0_23 = arith.constant 0 : index
    %c0_24 = arith.constant 0 : index
    %c0_25 = arith.constant 0 : index
    %55 = vector.load %arg11[%c0_22, %c0_23, %c0_24, %c0_25] : memref<1x16x16x32xf32, #tpu.memory_space<vmem>>, vector<1x16x16x32xf32>
    tpu.vector_store %arg11[%c0_22, %c0_23, %c0_24, %c0_25], %54 {strides = array<i32>} : memref<1x16x16x32xf32, #tpu.memory_space<vmem>>, vector<1x16x16x32xf32>,
    %cst_26 = arith.constant 0.000000e+00 : f32
    %56 = vector.broadcast %cst_26 : f32 to vector<18x18x32xf32>
    %c0_27 = arith.constant 0 : index
    %c0_28 = arith.constant 0 : index
    %c0_29 = arith.constant 0 : index
    %57 = vector.load %arg12[%c0_27, %c0_28, %c0_29] : memref<18x18x32xf32, #tpu.memory_space<vmem>>, vector<18x18x32xf32>
    tpu.vector_store %arg12[%c0_27, %c0_28, %c0_29], %56 {strides = array<i32>} : memref<18x18x32xf32, #tpu.memory_space<vmem>>, vector<18x18x32xf32>,
    %58 = vector.shape_cast %53 : vector<256x32xf32> to vector<16x16x32xf32>
    %c1 = arith.constant 1 : index
    %c1_30 = arith.constant 1 : index
    %c0_31 = arith.constant 0 : index
    %59 = vector.load %arg12[%c1, %c1_30, %c0_31] : memref<18x18x32xf32, #tpu.memory_space<vmem>>, vector<16x16x32xf32>
    tpu.vector_store %arg12[%c1, %c1_30, %c0_31], %58 {strides = array<i32>} : memref<18x18x32xf32, #tpu.memory_space<vmem>>, vector<16x16x32xf32>,
    %c0_32 = arith.constant 0 : index
    %c0_33 = arith.constant 0 : index
    %c0_34 = arith.constant 0 : index
    %60 = vector.load %arg12[%c0_32, %c0_33, %c0_34] : memref<18x18x32xf32, #tpu.memory_space<vmem>>, vector<18x18x32xf32>
    %cst_35 = arith.constant 0.000000e+00 : f32
    %61 = vector.broadcast %cst_35 : f32 to vector<256x32xf32>
    %62 = vector.extract_strided_slice %60 {offsets = [0, 0, 0], sizes = [16, 16, 32], strides = [1, 1, 1]} : vector<18x18x32xf32> to vector<16x16x32xf32>
    %63 = vector.shape_cast %62 : vector<16x16x32xf32> to vector<256x32xf32>
    %c0_36 = arith.constant 0 : index
    %c0_37 = arith.constant 0 : index
    %c0_38 = arith.constant 0 : index
    %c0_39 = arith.constant 0 : index
    %64 = vector.load %arg8[%c0_36, %c0_37, %c0_38, %c0_39] : memref<3x3x32x32xf32, #tpu.memory_space<vmem>>, vector<1x1x32x32xf32>
    %65 = vector.shape_cast %64 : vector<1x1x32x32xf32> to vector<32x32xf32>
    %cst_40 = arith.constant dense<0.000000e+00> : vector<256x32xf32>
    %66 = tpu.matmul %63, %65, %cst_40 {dimension_numbers = #tpu.dot_dimension_numbers<[1], [0], [0], [1], [0, 0, 1, 1], [], []>} : vector<256x32xf32>, vector<32x32xf32>, vector<256x32xf32> -> vector<256x32xf32>
    %67 = arith.addf %61, %66 : vector<256x32xf32>
    %68 = vector.extract_strided_slice %60 {offsets = [0, 1, 0], sizes = [16, 16, 32], strides = [1, 1, 1]} : vector<18x18x32xf32> to vector<16x16x32xf32>
    %69 = vector.shape_cast %68 : vector<16x16x32xf32> to vector<256x32xf32>
    %c0_41 = arith.constant 0 : index
    %c1_42 = arith.constant 1 : index
    %c0_43 = arith.constant 0 : index
    %c0_44 = arith.constant 0 : index
    %70 = vector.load %arg8[%c0_41, %c1_42, %c0_43, %c0_44] : memref<3x3x32x32xf32, #tpu.memory_space<vmem>>, vector<1x1x32x32xf32>
    %71 = vector.shape_cast %70 : vector<1x1x32x32xf32> to vector<32x32xf32>
    %cst_45 = arith.constant dense<0.000000e+00> : vector<256x32xf32>
    %72 = tpu.matmul %69, %71, %cst_45 {dimension_numbers = #tpu.dot_dimension_numbers<[1], [0], [0], [1], [0, 0, 1, 1], [], []>} : vector<256x32xf32>, vector<32x32xf32>, vector<256x32xf32> -> vector<256x32xf32>
    %73 = arith.addf %67, %72 : vector<256x32xf32>
    %74 = vector.extract_strided_slice %60 {offsets = [0, 2, 0], sizes = [16, 16, 32], strides = [1, 1, 1]} : vector<18x18x32xf32> to vector<16x16x32xf32>
    %75 = vector.shape_cast %74 : vector<16x16x32xf32> to vector<256x32xf32>
    %c0_46 = arith.constant 0 : index
    %c2 = arith.constant 2 : index
    %c0_47 = arith.constant 0 : index
    %c0_48 = arith.constant 0 : index
    %76 = vector.load %arg8[%c0_46, %c2, %c0_47, %c0_48] : memref<3x3x32x32xf32, #tpu.memory_space<vmem>>, vector<1x1x32x32xf32>
    %77 = vector.shape_cast %76 : vector<1x1x32x32xf32> to vector<32x32xf32>
    %cst_49 = arith.constant dense<0.000000e+00> : vector<256x32xf32>
    %78 = tpu.matmul %75, %77, %cst_49 {dimension_numbers = #tpu.dot_dimension_numbers<[1], [0], [0], [1], [0, 0, 1, 1], [], []>} : vector<256x32xf32>, vector<32x32xf32>, vector<256x32xf32> -> vector<256x32xf32>
    %79 = arith.addf %73, %78 : vector<256x32xf32>
    %80 = vector.extract_strided_slice %60 {offsets = [1, 0, 0], sizes = [16, 16, 32], strides = [1, 1, 1]} : vector<18x18x32xf32> to vector<16x16x32xf32>
    %81 = vector.shape_cast %80 : vector<16x16x32xf32> to vector<256x32xf32>
    %c1_50 = arith.constant 1 : index
    %c0_51 = arith.constant 0 : index
    %c0_52 = arith.constant 0 : index
    %c0_53 = arith.constant 0 : index
    %82 = vector.load %arg8[%c1_50, %c0_51, %c0_52, %c0_53] : memref<3x3x32x32xf32, #tpu.memory_space<vmem>>, vector<1x1x32x32xf32>
    %83 = vector.shape_cast %82 : vector<1x1x32x32xf32> to vector<32x32xf32>
    %cst_54 = arith.constant dense<0.000000e+00> : vector<256x32xf32>
    %84 = tpu.matmul %81, %83, %cst_54 {dimension_numbers = #tpu.dot_dimension_numbers<[1], [0], [0], [1], [0, 0, 1, 1], [], []>} : vector<256x32xf32>, vector<32x32xf32>, vector<256x32xf32> -> vector<256x32xf32>
    %85 = arith.addf %79, %84 : vector<256x32xf32>
    %86 = vector.extract_strided_slice %60 {offsets = [1, 1, 0], sizes = [16, 16, 32], strides = [1, 1, 1]} : vector<18x18x32xf32> to vector<16x16x32xf32>
    %87 = vector.shape_cast %86 : vector<16x16x32xf32> to vector<256x32xf32>
    %c1_55 = arith.constant 1 : index
    %c1_56 = arith.constant 1 : index
    %c0_57 = arith.constant 0 : index
    %c0_58 = arith.constant 0 : index
    %88 = vector.load %arg8[%c1_55, %c1_56, %c0_57, %c0_58] : memref<3x3x32x32xf32, #tpu.memory_space<vmem>>, vector<1x1x32x32xf32>
    %89 = vector.shape_cast %88 : vector<1x1x32x32xf32> to vector<32x32xf32>
    %cst_59 = arith.constant dense<0.000000e+00> : vector<256x32xf32>
    %90 = tpu.matmul %87, %89, %cst_59 {dimension_numbers = #tpu.dot_dimension_numbers<[1], [0], [0], [1], [0, 0, 1, 1], [], []>} : vector<256x32xf32>, vector<32x32xf32>, vector<256x32xf32> -> vector<256x32xf32>
    %91 = arith.addf %85, %90 : vector<256x32xf32>
    %92 = vector.extract_strided_slice %60 {offsets = [1, 2, 0], sizes = [16, 16, 32], strides = [1, 1, 1]} : vector<18x18x32xf32> to vector<16x16x32xf32>
    %93 = vector.shape_cast %92 : vector<16x16x32xf32> to vector<256x32xf32>
    %c1_60 = arith.constant 1 : index
    %c2_61 = arith.constant 2 : index
    %c0_62 = arith.constant 0 : index
    %c0_63 = arith.constant 0 : index
    %94 = vector.load %arg8[%c1_60, %c2_61, %c0_62, %c0_63] : memref<3x3x32x32xf32, #tpu.memory_space<vmem>>, vector<1x1x32x32xf32>
    %95 = vector.shape_cast %94 : vector<1x1x32x32xf32> to vector<32x32xf32>
    %cst_64 = arith.constant dense<0.000000e+00> : vector<256x32xf32>
    %96 = tpu.matmul %93, %95, %cst_64 {dimension_numbers = #tpu.dot_dimension_numbers<[1], [0], [0], [1], [0, 0, 1, 1], [], []>} : vector<256x32xf32>, vector<32x32xf32>, vector<256x32xf32> -> vector<256x32xf32>
    %97 = arith.addf %91, %96 : vector<256x32xf32>
    %98 = vector.extract_strided_slice %60 {offsets = [2, 0, 0], sizes = [16, 16, 32], strides = [1, 1, 1]} : vector<18x18x32xf32> to vector<16x16x32xf32>
    %99 = vector.shape_cast %98 : vector<16x16x32xf32> to vector<256x32xf32>
    %c2_65 = arith.constant 2 : index
    %c0_66 = arith.constant 0 : index
    %c0_67 = arith.constant 0 : index
    %c0_68 = arith.constant 0 : index
    %100 = vector.load %arg8[%c2_65, %c0_66, %c0_67, %c0_68] : memref<3x3x32x32xf32, #tpu.memory_space<vmem>>, vector<1x1x32x32xf32>
    %101 = vector.shape_cast %100 : vector<1x1x32x32xf32> to vector<32x32xf32>
    %cst_69 = arith.constant dense<0.000000e+00> : vector<256x32xf32>
    %102 = tpu.matmul %99, %101, %cst_69 {dimension_numbers = #tpu.dot_dimension_numbers<[1], [0], [0], [1], [0, 0, 1, 1], [], []>} : vector<256x32xf32>, vector<32x32xf32>, vector<256x32xf32> -> vector<256x32xf32>
    %103 = arith.addf %97, %102 : vector<256x32xf32>
    %104 = vector.extract_strided_slice %60 {offsets = [2, 1, 0], sizes = [16, 16, 32], strides = [1, 1, 1]} : vector<18x18x32xf32> to vector<16x16x32xf32>
    %105 = vector.shape_cast %104 : vector<16x16x32xf32> to vector<256x32xf32>
    %c2_70 = arith.constant 2 : index
    %c1_71 = arith.constant 1 : index
    %c0_72 = arith.constant 0 : index
    %c0_73 = arith.constant 0 : index
    %106 = vector.load %arg8[%c2_70, %c1_71, %c0_72, %c0_73] : memref<3x3x32x32xf32, #tpu.memory_space<vmem>>, vector<1x1x32x32xf32>
    %107 = vector.shape_cast %106 : vector<1x1x32x32xf32> to vector<32x32xf32>
    %cst_74 = arith.constant dense<0.000000e+00> : vector<256x32xf32>
    %108 = tpu.matmul %105, %107, %cst_74 {dimension_numbers = #tpu.dot_dimension_numbers<[1], [0], [0], [1], [0, 0, 1, 1], [], []>} : vector<256x32xf32>, vector<32x32xf32>, vector<256x32xf32> -> vector<256x32xf32>
    %109 = arith.addf %103, %108 : vector<256x32xf32>
    %110 = vector.extract_strided_slice %60 {offsets = [2, 2, 0], sizes = [16, 16, 32], strides = [1, 1, 1]} : vector<18x18x32xf32> to vector<16x16x32xf32>
    %111 = vector.shape_cast %110 : vector<16x16x32xf32> to vector<256x32xf32>
    %c2_75 = arith.constant 2 : index
    %c2_76 = arith.constant 2 : index
    %c0_77 = arith.constant 0 : index
    %c0_78 = arith.constant 0 : index
    %112 = vector.load %arg8[%c2_75, %c2_76, %c0_77, %c0_78] : memref<3x3x32x32xf32, #tpu.memory_space<vmem>>, vector<1x1x32x32xf32>
    %113 = vector.shape_cast %112 : vector<1x1x32x32xf32> to vector<32x32xf32>
    %cst_79 = arith.constant dense<0.000000e+00> : vector<256x32xf32>
    %114 = tpu.matmul %111, %113, %cst_79 {dimension_numbers = #tpu.dot_dimension_numbers<[1], [0], [0], [1], [0, 0, 1, 1], [], []>} : vector<256x32xf32>, vector<32x32xf32>, vector<256x32xf32> -> vector<256x32xf32>
    %115 = arith.addf %109, %114 : vector<256x32xf32>
    %c0_80 = arith.constant 0 : index
    %c0_81 = arith.constant 0 : index
    %116 = vector.load %arg9[%c0_80, %c0_81] : memref<1x32xf32, #tpu.memory_space<vmem>>, vector<1x32xf32>
    %117 = vector.broadcast %116 : vector<1x32xf32> to vector<256x32xf32>
    %118 = arith.addf %115, %117 : vector<256x32xf32>
    %119 = vector.shape_cast %118 : vector<256x32xf32> to vector<1x16x16x32xf32>
    %c0_82 = arith.constant 0 : index
    %c0_83 = arith.constant 0 : index
    %c0_84 = arith.constant 0 : index
    %c0_85 = arith.constant 0 : index
    %120 = vector.load %arg10[%c0_82, %c0_83, %c0_84, %c0_85] : memref<1x16x16x32xf32, #tpu.memory_space<vmem>>, vector<1x16x16x32xf32>
    tpu.vector_store %arg10[%c0_82, %c0_83, %c0_84, %c0_85], %119 {strides = array<i32>} : memref<1x16x16x32xf32, #tpu.memory_space<vmem>>, vector<1x16x16x32xf32>,
    return
  }
  func.func @transform_0(%arg0: i32) -> (i32, i32, i32, i32) {
    %c0_i32 = arith.constant 0 : i32
    %c0_i32_0 = arith.constant 0 : i32
    %c0_i32_1 = arith.constant 0 : i32
    %c0_i32_2 = arith.constant 0 : i32
    return %arg0, %c0_i32, %c0_i32_0, %c0_i32_1 : i32, i32, i32, i32
  }
  func.func @transform_1(%arg0: i32) -> (i32, i32, i32, i32) {
    %c0_i32 = arith.constant 0 : i32
    %c0_i32_0 = arith.constant 0 : i32
    %c0_i32_1 = arith.constant 0 : i32
    %c0_i32_2 = arith.constant 0 : i32
    return %arg0, %c0_i32, %c0_i32_0, %c0_i32_1 : i32, i32, i32, i32
  }
  func.func @transform_2(%arg0: i32) -> (i32, i32) {
    %c0_i32 = arith.constant 0 : i32
    %c0_i32_0 = arith.constant 0 : i32
    %c0_i32_1 = arith.constant 0 : i32
    return %c0_i32, %c0_i32_0 : i32, i32
  }
  func.func @transform_3(%arg0: i32) -> (i32, i32) {
    %c0_i32 = arith.constant 0 : i32
    %c0_i32_0 = arith.constant 0 : i32
    %c0_i32_1 = arith.constant 0 : i32
    return %c0_i32, %c0_i32_0 : i32, i32
  }
  func.func @transform_4(%arg0: i32) -> (i32, i32) {
    %c0_i32 = arith.constant 0 : i32
    %c0_i32_0 = arith.constant 0 : i32
    %c0_i32_1 = arith.constant 0 : i32
    return %c0_i32, %c0_i32_0 : i32, i32
  }
  func.func @transform_5(%arg0: i32) -> (i32, i32) {
    %c0_i32 = arith.constant 0 : i32
    %c0_i32_0 = arith.constant 0 : i32
    %c0_i32_1 = arith.constant 0 : i32
    return %c0_i32, %c0_i32_0 : i32, i32
  }
  func.func @transform_6(%arg0: i32) -> (i32, i32) {
    %c0_i32 = arith.constant 0 : i32
    %c0_i32_0 = arith.constant 0 : i32
    %c0_i32_1 = arith.constant 0 : i32
    return %c0_i32, %c0_i32_0 : i32, i32
  }
  func.func @transform_7(%arg0: i32) -> (i32, i32, i32, i32) {
    %c0_i32 = arith.constant 0 : i32
    %c0_i32_0 = arith.constant 0 : i32
    %c0_i32_1 = arith.constant 0 : i32
    %c0_i32_2 = arith.constant 0 : i32
    %c0_i32_3 = arith.constant 0 : i32
    return %c0_i32, %c0_i32_0, %c0_i32_1, %c0_i32_2 : i32, i32, i32, i32
  }
  func.func @transform_8(%arg0: i32) -> (i32, i32) {
    %c0_i32 = arith.constant 0 : i32
    %c0_i32_0 = arith.constant 0 : i32
    %c0_i32_1 = arith.constant 0 : i32
    return %c0_i32, %c0_i32_0 : i32, i32
  }
  func.func @transform_9(%arg0: i32) -> (i32, i32, i32, i32) {
    %c0_i32 = arith.constant 0 : i32
    %c0_i32_0 = arith.constant 0 : i32
    %c0_i32_1 = arith.constant 0 : i32
    %c0_i32_2 = arith.constant 0 : i32
    return %arg0, %c0_i32, %c0_i32_0, %c0_i32_1 : i32, i32, i32, i32
  }
  func.func @transform_10(%arg0: i32) -> (i32, i32, i32, i32) {
    %c0_i32 = arith.constant 0 : i32
    %c0_i32_0 = arith.constant 0 : i32
    %c0_i32_1 = arith.constant 0 : i32
    %c0_i32_2 = arith.constant 0 : i32
    return %arg0, %c0_i32, %c0_i32_0, %c0_i32_1 : i32, i32, i32, i32
  }
}

</mosaic_0001>

<llo_original>
// kernel: tpu_custom_call.1
$region0: #{tpu_custom_call.1}
  #allocation0 [shape = 'u32[]', space=smem, size = 0x4, offset = 0x4, fixed_abs, tag = 'smem constant byte address 0x4 - core index']
  #allocation1 [shape = 'u32[72,128]{1,0:T(1,128)}', space=vmem, size = 0x9000, scoped, tag = 'internal scratch']
  #allocation2 [shape = 'f32[18,18,32]{2,1,0:T(8,128)}', space=vmem, size = 0x36000, scoped, tag = 'scratch operand']
  %s0 = inlined_call_operand.hbm [shape: f32[2,16,16,16], index: 0, kind: input, shape index: {}]
  %s1 = inlined_call_operand.hbm [shape: f32[2,8,8,32], index: 1, kind: input, shape index: {}]
  %s2 = inlined_call_operand.vmem [shape: f32[256,64], index: 2, kind: input, shape index: {}]
  %s3 = inlined_call_operand.vmem [shape: f32[16,32], index: 3, kind: input, shape index: {}]
  %s4 = inlined_call_operand.vmem [shape: f32[1,32], index: 4, kind: input, shape index: {}]
  %s5 = inlined_call_operand.vmem [shape: f32[4,32], index: 5, kind: input, shape index: {}]
  %s6 = inlined_call_operand.vmem [shape: f32[1,2], index: 6, kind: input, shape index: {}]
  %s7 = inlined_call_operand.vmem [shape: f32[3,3,32,32], index: 7, kind: input, shape index: {}]
  %s8 = inlined_call_operand.vmem [shape: f32[1,32], index: 8, kind: input, shape index: {}]
  %s9 = inlined_call_operand.hbm [shape: f32[2,16,16,32], index: 9, kind: output, shape index: {0}]
  %s10 = inlined_call_operand.hbm [shape: f32[2,16,16,32], index: 10, kind: output, shape index: {1}]
  %11 = xla_tuple %s9, %s10
  %s12 = sld [smem:[#allocation0]]
  $region85: #{tpu_custom_call.1} parent=0
    _
  %s14 = ssub.s32 1, %s12
  %s15 = scalar_select 0, %s14, %s12
  $region1: #{tpu_custom_call.1} parent=0
    #allocation3 [shape = 'u8[262144]{0}', space=vmem, size = 0x40000, scoped, tag = 'input window, operand 0']
    #allocation4 [shape = 's32[2]{0}', space=sflag, size = 0x8, scoped, tag = 'scoped memory for tpu_custom_call.1']
    #allocation5 [shape = 's32[2]{0}', space=sflag, size = 0x8, scoped, tag = 'scoped memory for tpu_custom_call.1']
    #allocation6 [shape = 'u8[65536]{0}', space=vmem, size = 0x10000, scoped, tag = 'input window, operand 1']
    #allocation7 [shape = 's32[2]{0}', space=sflag, size = 0x8, scoped, tag = 'scoped memory for tpu_custom_call.1']
    #allocation8 [shape = 'u8[262144]{0}', space=vmem, size = 0x40000, scoped, tag = 'output window, operand 0']
    #allocation9 [shape = 'u8[262144]{0}', space=vmem, size = 0x40000, scoped, tag = 'output window, operand 1']
    #allocation10 [shape = 's32[2]{0}', space=sflag, size = 0x8, scoped, tag = 'scoped memory for tpu_custom_call.1']
    %16 = vsyncpa [#allocation4], 0
    %s17 = scalar_lea.sflag [#allocation4], 1
    %18 = vsyncpa %s17, 0
    %19 = vsyncpa [#allocation7], 0
    %s20 = scalar_lea.sflag [#allocation7], 1
    %21 = vsyncpa %s20, 0
    %22 = vsyncpa [#allocation5], 0
    %s23 = scalar_lea.sflag [#allocation5], 1
    %24 = vsyncpa %s23, 0
    %25 = vsyncpa [#allocation10], 0
    %s26 = scalar_lea.sflag [#allocation10], 1
    %27 = vsyncpa %s26, 0
    loop: start=0, step=1, limit=4
    $region2: #{tpu_custom_call.1} parent=1 // loop_pre_header
      _
    $region3: #{tpu_custom_call.1} parent=1 // loop_header
      %s29 = sphi 0, %s33
      %p30 = scmp.ge.s32.totalorder %s29, 4
      %s39 = sphi 0, %s41
      %s42 = sphi 0, %s39
      %s43 = sphi 0, %s42
      %s59 = sphi 0, %s43
      %s65 = sphi 0, %s67
      %s68 = sphi 0, %s65
      %s69 = sphi 0, %s68
      %s85 = sphi 0, %s69
      %s89 = sphi 0, %s89
      %s91 = sphi 0, %s89
      %s92 = sphi 0, %s91
      %s106 = sphi 0, %s92
      %s110 = sphi 0, %s110
      %s112 = sphi 0, %s110
      %s113 = sphi 0, %s112
      %s127 = sphi 0, %s113
      %s131 = sphi 0, %s131
      %s133 = sphi 0, %s131
      %s134 = sphi 0, %s133
      %s148 = sphi 0, %s134
      %s152 = sphi 0, %s152
      %s154 = sphi 0, %s152
      %s155 = sphi 0, %s154
      %s169 = sphi 0, %s155
      %s173 = sphi 0, %s173
      %s175 = sphi 0, %s173
      %s176 = sphi 0, %s175
      %s190 = sphi 0, %s176
      %s194 = sphi 0, %s194
      %s196 = sphi 0, %s194
      %s197 = sphi 0, %s196
      %s211 = sphi 0, %s197
      %s215 = sphi 0, %s215
      %s217 = sphi 0, %s215
      %s218 = sphi 0, %s217
      %s232 = sphi 0, %s218
      %s238 = sphi 0, %s240
      %s241 = sphi 0, %s238
      %s242 = sphi 0, %s241
      %s258 = sphi 0, %s242
      %s264 = sphi 0, %s266
      %s267 = sphi 0, %s264
      %s268 = sphi 0, %s267
      %s284 = sphi 0, %s268
    $region4: #{tpu_custom_call.1} parent=1 // loop_header_branch
      %32 = sbr.rel (%p30) target = $region8
    $region5: #{tpu_custom_call.1} parent=1 // loop_body
      %s34 = ssub.s32 %s29, 1
      %s35 = ssub.s32 %s29, 2
      %s36 = sadd.s32 %s29, 1
      %s37 = ssub.s32 %s29, %s36
      %p38 = scmp.eq.s32.totalorder %s37, 0
      %s40 = sadd.s32 %s39, 1
      %s41 = scalar_select %p38, %s39, %s40
      %p44 = pneg %p38
      %p45 = scmp.eq.s32.totalorder %s29, 1
      %p46 = por %p44, %p45
      %p47 = scmp.ne.s32.totalorder %s39, %s42
      %p48 = scmp.eq.s32.totalorder %s29, 0
      %p49 = por %p47, %p48
      %p50 = scmp.ne.s32.totalorder %s39, %s42
      %p51 = scmp.eq.s32.totalorder %s34, 1
      %p52 = por %p50, %p51
      %p53 = scmp.ne.s32.totalorder %s42, %s43
      %p54 = scmp.eq.s32.totalorder %s34, 0
      %p55 = por %p53, %p54
      %p56 = scmp.ne.s32.totalorder %s42, %s43
      %p57 = scmp.eq.s32.totalorder %s35, 1
      %p58 = por %p56, %p57
      %p60 = scmp.ne.s32.totalorder %s43, %s59
      %p61 = scmp.eq.s32.totalorder %s35, 0
      %p62 = por %p60, %p61
      %s63 = ssub.s32 %s29, %s36
      %p64 = scmp.eq.s32.totalorder %s63, 0
      %s66 = sadd.s32 %s65, 1
      %s67 = scalar_select %p64, %s65, %s66
      %p70 = pneg %p64
      %p71 = scmp.eq.s32.totalorder %s29, 1
      %p72 = por %p70, %p71
      %p73 = scmp.ne.s32.totalorder %s65, %s68
      %p74 = scmp.eq.s32.totalorder %s29, 0
      %p75 = por %p73, %p74
      %p76 = scmp.ne.s32.totalorder %s65, %s68
      %p77 = scmp.eq.s32.totalorder %s34, 1
      %p78 = por %p76, %p77
      %p79 = scmp.ne.s32.totalorder %s68, %s69
      %p80 = scmp.eq.s32.totalorder %s34, 0
      %p81 = por %p79, %p80
      %p82 = scmp.ne.s32.totalorder %s68, %s69
      %p83 = scmp.eq.s32.totalorder %s35, 1
      %p84 = por %p82, %p83
      %p86 = scmp.ne.s32.totalorder %s69, %s85
      %p87 = scmp.eq.s32.totalorder %s35, 0
      %p88 = por %p86, %p87
      %s90 = sadd.s32 %s89, 1
      %p93 = scmp.eq.s32.totalorder %s29, 1
      %p94 = scmp.ne.s32.totalorder %s89, %s91
      %p95 = scmp.eq.s32.totalorder %s29, 0
      %p96 = por %p94, %p95
      %p97 = scmp.ne.s32.totalorder %s89, %s91
      %p98 = scmp.eq.s32.totalorder %s34, 1
      %p99 = por %p97, %p98
      %p100 = scmp.ne.s32.totalorder %s91, %s92
      %p101 = scmp.eq.s32.totalorder %s34, 0
      %p102 = por %p100, %p101
      %p103 = scmp.ne.s32.totalorder %s91, %s92
      %p104 = scmp.eq.s32.totalorder %s35, 1
      %p105 = por %p103, %p104
      %p107 = scmp.ne.s32.totalorder %s92, %s106
      %p108 = scmp.eq.s32.totalorder %s35, 0
      %p109 = por %p107, %p108
      %s111 = sadd.s32 %s110, 1
      %p114 = scmp.eq.s32.totalorder %s29, 1
      %p115 = scmp.ne.s32.totalorder %s110, %s112
      %p116 = scmp.eq.s32.totalorder %s29, 0
      %p117 = por %p115, %p116
      %p118 = scmp.ne.s32.totalorder %s110, %s112
      %p119 = scmp.eq.s32.totalorder %s34, 1
      %p120 = por %p118, %p119
      %p121 = scmp.ne.s32.totalorder %s112, %s113
      %p122 = scmp.eq.s32.totalorder %s34, 0
      %p123 = por %p121, %p122
      %p124 = scmp.ne.s32.totalorder %s112, %s113
      %p125 = scmp.eq.s32.totalorder %s35, 1
      %p126 = por %p124, %p125
      %p128 = scmp.ne.s32.totalorder %s113, %s127
      %p129 = scmp.eq.s32.totalorder %s35, 0
      %p130 = por %p128, %p129
      %s132 = sadd.s32 %s131, 1
      %p135 = scmp.eq.s32.totalorder %s29, 1
      %p136 = scmp.ne.s32.totalorder %s131, %s133
      %p137 = scmp.eq.s32.totalorder %s29, 0
      %p138 = por %p136, %p137
      %p139 = scmp.ne.s32.totalorder %s131, %s133
      %p140 = scmp.eq.s32.totalorder %s34, 1
      %p141 = por %p139, %p140
      %p142 = scmp.ne.s32.totalorder %s133, %s134
      %p143 = scmp.eq.s32.totalorder %s34, 0
      %p144 = por %p142, %p143
      %p145 = scmp.ne.s32.totalorder %s133, %s134
      %p146 = scmp.eq.s32.totalorder %s35, 1
      %p147 = por %p145, %p146
      %p149 = scmp.ne.s32.totalorder %s134, %s148
      %p150 = scmp.eq.s32.totalorder %s35, 0
      %p151 = por %p149, %p150
      %s153 = sadd.s32 %s152, 1
      %p156 = scmp.eq.s32.totalorder %s29, 1
      %p157 = scmp.ne.s32.totalorder %s152, %s154
      %p158 = scmp.eq.s32.totalorder %s29, 0
      %p159 = por %p157, %p158
      %p160 = scmp.ne.s32.totalorder %s152, %s154
      %p161 = scmp.eq.s32.totalorder %s34, 1
      %p162 = por %p160, %p161
      %p163 = scmp.ne.s32.totalorder %s154, %s155
      %p164 = scmp.eq.s32.totalorder %s34, 0
      %p165 = por %p163, %p164
      %p166 = scmp.ne.s32.totalorder %s154, %s155
      %p167 = scmp.eq.s32.totalorder %s35, 1
      %p168 = por %p166, %p167
      %p170 = scmp.ne.s32.totalorder %s155, %s169
      %p171 = scmp.eq.s32.totalorder %s35, 0
      %p172 = por %p170, %p171
      %s174 = sadd.s32 %s173, 1
      %p177 = scmp.eq.s32.totalorder %s29, 1
      %p178 = scmp.ne.s32.totalorder %s173, %s175
      %p179 = scmp.eq.s32.totalorder %s29, 0
      %p180 = por %p178, %p179
      %p181 = scmp.ne.s32.totalorder %s173, %s175
      %p182 = scmp.eq.s32.totalorder %s34, 1
      %p183 = por %p181, %p182
      %p184 = scmp.ne.s32.totalorder %s175, %s176
      %p185 = scmp.eq.s32.totalorder %s34, 0
      %p186 = por %p184, %p185
      %p187 = scmp.ne.s32.totalorder %s175, %s176
      %p188 = scmp.eq.s32.totalorder %s35, 1
      %p189 = por %p187, %p188
      %p191 = scmp.ne.s32.totalorder %s176, %s190
      %p192 = scmp.eq.s32.totalorder %s35, 0
      %p193 = por %p191, %p192
      %s195 = sadd.s32 %s194, 1
      %p198 = scmp.eq.s32.totalorder %s29, 1
      %p199 = scmp.ne.s32.totalorder %s194, %s196
      %p200 = scmp.eq.s32.totalorder %s29, 0
      %p201 = por %p199, %p200
      %p202 = scmp.ne.s32.totalorder %s194, %s196
      %p203 = scmp.eq.s32.totalorder %s34, 1
      %p204 = por %p202, %p203
      %p205 = scmp.ne.s32.totalorder %s196, %s197
      %p206 = scmp.eq.s32.totalorder %s34, 0
      %p207 = por %p205, %p206
      %p208 = scmp.ne.s32.totalorder %s196, %s197
      %p209 = scmp.eq.s32.totalorder %s35, 1
      %p210 = por %p208, %p209
      %p212 = scmp.ne.s32.totalorder %s197, %s211
      %p213 = scmp.eq.s32.totalorder %s35, 0
      %p214 = por %p212, %p213
      %s216 = sadd.s32 %s215, 1
      %p219 = scmp.eq.s32.totalorder %s29, 1
      %p220 = scmp.ne.s32.totalorder %s215, %s217
      %p221 = scmp.eq.s32.totalorder %s29, 0
      %p222 = por %p220, %p221
      %p223 = scmp.ne.s32.totalorder %s215, %s217
      %p224 = scmp.eq.s32.totalorder %s34, 1
      %p225 = por %p223, %p224
      %p226 = scmp.ne.s32.totalorder %s217, %s218
      %p227 = scmp.eq.s32.totalorder %s34, 0
      %p228 = por %p226, %p227
      %p229 = scmp.ne.s32.totalorder %s217, %s218
      %p230 = scmp.eq.s32.totalorder %s35, 1
      %p231 = por %p229, %p230
      %p233 = scmp.ne.s32.totalorder %s218, %s232
      %p234 = scmp.eq.s32.totalorder %s35, 0
      %p235 = por %p233, %p234
      %s236 = ssub.s32 %s29, %s36
      %p237 = scmp.eq.s32.totalorder %s236, 0
      %s239 = sadd.s32 %s238, 1
      %s240 = scalar_select %p237, %s238, %s239
      %p243 = pneg %p237
      %p244 = scmp.eq.s32.totalorder %s29, 1
      %p245 = por %p243, %p244
      %p246 = scmp.ne.s32.totalorder %s238, %s241
      %p247 = scmp.eq.s32.totalorder %s29, 0
      %p248 = por %p246, %p247
      %p249 = scmp.ne.s32.totalorder %s238, %s241
      %p250 = scmp.eq.s32.totalorder %s34, 1
      %p251 = por %p249, %p250
      %p252 = scmp.ne.s32.totalorder %s241, %s242
      %p253 = scmp.eq.s32.totalorder %s34, 0
      %p254 = por %p252, %p253
      %p255 = scmp.ne.s32.totalorder %s241, %s242
      %p256 = scmp.eq.s32.totalorder %s35, 1
      %p257 = por %p255, %p256
      %p259 = scmp.ne.s32.totalorder %s242, %s258
      %p260 = scmp.eq.s32.totalorder %s35, 0
      %p261 = por %p259, %p260
      %s262 = ssub.s32 %s29, %s36
      %p263 = scmp.eq.s32.totalorder %s262, 0
      %s265 = sadd.s32 %s264, 1
      %s266 = scalar_select %p263, %s264, %s265
      %p269 = pneg %p263
      %p270 = scmp.eq.s32.totalorder %s29, 1
      %p271 = por %p269, %p270
      %p272 = scmp.ne.s32.totalorder %s264, %s267
      %p273 = scmp.eq.s32.totalorder %s29, 0
      %p274 = por %p272, %p273
      %p275 = scmp.ne.s32.totalorder %s264, %s267
      %p276 = scmp.eq.s32.totalorder %s34, 1
      %p277 = por %p275, %p276
      %p278 = scmp.ne.s32.totalorder %s267, %s268
      %p279 = scmp.eq.s32.totalorder %s34, 0
      %p280 = por %p278, %p279
      %p281 = scmp.ne.s32.totalorder %s267, %s268
      %p282 = scmp.eq.s32.totalorder %s35, 1
      %p283 = por %p281, %p282
      %p285 = scmp.ne.s32.totalorder %s268, %s284
      %p286 = scmp.eq.s32.totalorder %s35, 0
      %p287 = por %p285, %p286
      %p288 = scmp.le.s32.totalorder 1, %s29
      %p289 = scmp.lt.s32.totalorder %s29, 3
      %p290 = pnand %p288, %p289
      %p291 = pneg %p290
      // Predicated region
      $region9: #{tpu_custom_call.1} parent=5 // pred_check
        _
      $region10: #{tpu_custom_call.1} parent=5 // pred_check_branch
        %293 = sbr.rel (%p290) target = $region12
      $region11: #{tpu_custom_call.1} parent=5 // pred_region
        %s294 = ssub.s32 %s29, 1
        // Predicated region
        $region13: #{tpu_custom_call.1} parent=11 // pred_check
          %p295 = pneg %p102
        $region14: #{tpu_custom_call.1} parent=11 // pred_check_branch
          %297 = sbr.rel (%p295) target = $region16
        $region15: #{tpu_custom_call.1} parent=11 // pred_region
          _
        $region16: #{tpu_custom_call.1} parent=11 // pred_fallthru
          _
        // Predicated region
        $region17: #{tpu_custom_call.1} parent=11 // pred_check
          %p298 = pneg %p123
        $region18: #{tpu_custom_call.1} parent=11 // pred_check_branch
          %300 = sbr.rel (%p298) target = $region20
        $region19: #{tpu_custom_call.1} parent=11 // pred_region
          _
        $region20: #{tpu_custom_call.1} parent=11 // pred_fallthru
          _
        // Predicated region
        $region21: #{tpu_custom_call.1} parent=11 // pred_check
          %p301 = pneg %p144
        $region22: #{tpu_custom_call.1} parent=11 // pred_check_branch
          %303 = sbr.rel (%p301) target = $region24
        $region23: #{tpu_custom_call.1} parent=11 // pred_region
          _
        $region24: #{tpu_custom_call.1} parent=11 // pred_fallthru
          _
        // Predicated region
        $region25: #{tpu_custom_call.1} parent=11 // pred_check
          %p304 = pneg %p165
        $region26: #{tpu_custom_call.1} parent=11 // pred_check_branch
          %306 = sbr.rel (%p304) target = $region28
        $region27: #{tpu_custom_call.1} parent=11 // pred_region
          _
        $region28: #{tpu_custom_call.1} parent=11 // pred_fallthru
          _
        // Predicated region
        $region29: #{tpu_custom_call.1} parent=11 // pred_check
          %p307 = pneg %p186
        $region30: #{tpu_custom_call.1} parent=11 // pred_check_branch
          %309 = sbr.rel (%p307) target = $region32
        $region31: #{tpu_custom_call.1} parent=11 // pred_region
          _
        $region32: #{tpu_custom_call.1} parent=11 // pred_fallthru
          _
        // Predicated region
        $region33: #{tpu_custom_call.1} parent=11 // pred_check
          %p310 = pneg %p207
        $region34: #{tpu_custom_call.1} parent=11 // pred_check_branch
          %312 = sbr.rel (%p310) target = $region36
        $region35: #{tpu_custom_call.1} parent=11 // pred_region
          _
        $region36: #{tpu_custom_call.1} parent=11 // pred_fallthru
          _
        // Predicated region
        $region37: #{tpu_custom_call.1} parent=11 // pred_check
          %p313 = pneg %p228
        $region38: #{tpu_custom_call.1} parent=11 // pred_check_branch
          %315 = sbr.rel (%p313) target = $region40
        $region39: #{tpu_custom_call.1} parent=11 // pred_region
          _
        $region40: #{tpu_custom_call.1} parent=11 // pred_fallthru
          _
      $region12: #{tpu_custom_call.1} parent=5 // pred_fallthru
        _
      %p316 = scmp.lt.s32.totalorder %s29, 2
      // Predicated region
      $region41: #{tpu_custom_call.1} parent=5 // pred_check
        %p317 = pneg %p316
      $region42: #{tpu_custom_call.1} parent=5 // pred_check_branch
        %319 = sbr.rel (%p317) target = $region44
      $region43: #{tpu_custom_call.1} parent=5 // pred_region
        // Predicated region
        $region45: #{tpu_custom_call.1} parent=43 // pred_check
          %p320 = pneg %p49
        $region46: #{tpu_custom_call.1} parent=43 // pred_check_branch
          %322 = sbr.rel (%p320) target = $region48
        $region47: #{tpu_custom_call.1} parent=43 // pred_region
          %s323 = sand.u32 %s39, 1
          %s324 = scalar_lea.sflag [#allocation4], %s323
          %s325 = sand.u32 %s39, 1
          %s326 = smul.addr %s325, 256
          %s327 = scalar_lea.vmem [#allocation3], %s326
          %329 = vsyncadd %s324, 0
          %s330 = smul.addr %s29, 32
          %s331 = smul.addr %s330, 8
          %s332 = scalar_lea.hbm %s0, %s331
          %s333 = sshll.u32 %s332, 4
          %s334 = int_to_ptr.hbm [resolvable:$true] %s333
          %s335 = sshll.u32 %s327, 4
          %s336 = int_to_ptr.vmem [resolvable:$true] %s335
          %341 = dma.hbm_to_vmem [thread:$0]  %s334, 4096, %s336, %s324, 128, 128, 8
        $region48: #{tpu_custom_call.1} parent=43 // pred_fallthru
          _
        // Predicated region
        $region49: #{tpu_custom_call.1} parent=43 // pred_check
          %p342 = pneg %p75
        $region50: #{tpu_custom_call.1} parent=43 // pred_check_branch
          %344 = sbr.rel (%p342) target = $region52
        $region51: #{tpu_custom_call.1} parent=43 // pred_region
          %s345 = sand.u32 %s65, 1
          %s346 = scalar_lea.sflag [#allocation7], %s345
          %s347 = sand.u32 %s65, 1
          %s348 = smul.addr %s347, 64
          %s349 = scalar_lea.vmem [#allocation6], %s348
          %351 = vsyncadd %s346, 0
          %s352 = smul.addr %s29, 8
          %s353 = smul.addr %s352, 8
          %s354 = scalar_lea.hbm %s1, %s353
          %s355 = sshll.u32 %s354, 4
          %s356 = int_to_ptr.hbm [resolvable:$true] %s355
          %s357 = sshll.u32 %s349, 4
          %s358 = int_to_ptr.vmem [resolvable:$true] %s357
          %363 = dma.hbm_to_vmem [thread:$0]  %s356, 1024, %s358, %s346, 128, 128, 8
        $region52: #{tpu_custom_call.1} parent=43 // pred_fallthru
          _
      $region44: #{tpu_custom_call.1} parent=5 // pred_fallthru
        _
      %p364 = scmp.le.s32.totalorder 1, %s29
      %p365 = scmp.lt.s32.totalorder %s29, 3
      %p366 = pnand %p364, %p365
      %p367 = pneg %p366
      // Predicated region
      $region53: #{tpu_custom_call.1} parent=5 // pred_check
        _
      $region54: #{tpu_custom_call.1} parent=5 // pred_check_branch
        %369 = sbr.rel (%p366) target = $region56
      $region55: #{tpu_custom_call.1} parent=5 // pred_region
        %s370 = ssub.s32 %s29, 1
        %s371 = sand.u32 %s42, 1
        %s372 = scalar_lea.sflag [#allocation4], %s371
        %s373 = sand.u32 %s42, 1
        %s374 = smul.addr %s373, 256
        %s375 = scalar_lea.vmem [#allocation3], %s374
        // Predicated region
        $region57: #{tpu_custom_call.1} parent=55 // pred_check
          %p376 = pneg %p55
        $region58: #{tpu_custom_call.1} parent=55 // pred_check_branch
          %378 = sbr.rel (%p376) target = $region60
        $region59: #{tpu_custom_call.1} parent=55 // pred_region
          %380 = dma.done %s372, 4096
        $region60: #{tpu_custom_call.1} parent=55 // pred_fallthru
          _
        %s381 = sand.u32 %s68, 1
        %s382 = scalar_lea.sflag [#allocation7], %s381
        %s383 = sand.u32 %s68, 1
        %s384 = smul.addr %s383, 64
        %s385 = scalar_lea.vmem [#allocation6], %s384
        // Predicated region
        $region61: #{tpu_custom_call.1} parent=55 // pred_check
          %p386 = pneg %p81
        $region62: #{tpu_custom_call.1} parent=55 // pred_check_branch
          %388 = sbr.rel (%p386) target = $region64
        $region63: #{tpu_custom_call.1} parent=55 // pred_region
          %390 = dma.done %s382, 1024
        $region64: #{tpu_custom_call.1} parent=55 // pred_fallthru
          _
        %s391 = sand.u32 %s42, 1
        %s392 = scalar_lea.sflag [#allocation4], %s391
        %s393 = sand.u32 %s42, 1
        %s394 = smul.addr %s393, 256
        %s395 = scalar_lea.vmem [#allocation3], %s394
        %p396 = pneg %p55
        %p397 = pneg %p52
        %s398 = sand.u32 %s68, 1
        %s399 = scalar_lea.sflag [#allocation7], %s398
        %s400 = sand.u32 %s68, 1
        %s401 = smul.addr %s400, 64
        %s402 = scalar_lea.vmem [#allocation6], %s401
        %p403 = pneg %p81
        %p404 = pneg %p78
        %p405 = pneg %p102
        %p406 = pneg %p99
        %p407 = pneg %p123
        %p408 = pneg %p120
        %p409 = pneg %p144
        %p410 = pneg %p141
        %p411 = pneg %p165
        %p412 = pneg %p162
        %p413 = pneg %p186
        %p414 = pneg %p183
        %p415 = pneg %p207
        %p416 = pneg %p204
        %p417 = pneg %p228
        %p418 = pneg %p225
        %p419 = pneg %p254
        %p420 = pneg %p251
        %s421 = sand.u32 %s241, 1
        %s422 = scalar_lea.sflag [#allocation5], %s421
        %s423 = sand.u32 %s241, 1
        %s424 = smul.addr %s423, 256
        %s425 = scalar_lea.vmem [#allocation8], %s424
        %p426 = pneg %p280
        %p427 = pneg %p277
        %s428 = sand.u32 %s267, 1
        %s429 = scalar_lea.sflag [#allocation10], %s428
        %s430 = sand.u32 %s267, 1
        %s431 = smul.addr %s430, 256
        %s432 = scalar_lea.vmem [#allocation9], %s431
        %v433 = vld [vmem:[%s375] sm:$0xff]
        %v434 = vld [vmem:[%s375 + $0x8] sm:$0xff]
        %v435 = vld [vmem:[%s375 + $0x10] sm:$0xff]
        %v436 = vld [vmem:[%s375 + $0x18] sm:$0xff]
        %v437 = vld [vmem:[%s375 + $0x20] sm:$0xff]
        %v438 = vld [vmem:[%s375 + $0x28] sm:$0xff]
        %v439 = vld [vmem:[%s375 + $0x30] sm:$0xff]
        %v440 = vld [vmem:[%s375 + $0x38] sm:$0xff]
        %v441 = vld [vmem:[%s375 + $0x40] sm:$0xff]
        %v442 = vld [vmem:[%s375 + $0x48] sm:$0xff]
        %v443 = vld [vmem:[%s375 + $0x50] sm:$0xff]
        %v444 = vld [vmem:[%s375 + $0x58] sm:$0xff]
        %v445 = vld [vmem:[%s375 + $0x60] sm:$0xff]
        %v446 = vld [vmem:[%s375 + $0x68] sm:$0xff]
        %v447 = vld [vmem:[%s375 + $0x70] sm:$0xff]
        %v448 = vld [vmem:[%s375 + $0x78] sm:$0xff]
        %v449 = vld [vmem:[%s375 + $0x80] sm:$0xff]
        %v450 = vld [vmem:[%s375 + $0x88] sm:$0xff]
        %v451 = vld [vmem:[%s375 + $0x90] sm:$0xff]
        %v452 = vld [vmem:[%s375 + $0x98] sm:$0xff]
        %v453 = vld [vmem:[%s375 + $0xa0] sm:$0xff]
        %v454 = vld [vmem:[%s375 + $0xa8] sm:$0xff]
        %v455 = vld [vmem:[%s375 + $0xb0] sm:$0xff]
        %v456 = vld [vmem:[%s375 + $0xb8] sm:$0xff]
        %v457 = vld [vmem:[%s375 + $0xc0] sm:$0xff]
        %v458 = vld [vmem:[%s375 + $0xc8] sm:$0xff]
        %v459 = vld [vmem:[%s375 + $0xd0] sm:$0xff]
        %v460 = vld [vmem:[%s375 + $0xd8] sm:$0xff]
        %v461 = vld [vmem:[%s375 + $0xe0] sm:$0xff]
        %v462 = vld [vmem:[%s375 + $0xe8] sm:$0xff]
        %v463 = vld [vmem:[%s375 + $0xf0] sm:$0xff]
        %v464 = vld [vmem:[%s375 + $0xf8] sm:$0xff]
        %v465 = vld [vmem:[%s3] sm:$0xff]
        %v466 = vld [vmem:[%s3 + $0x8] sm:$0xff]
        %v467 = vld [vmem:[%s4] sm:$0x1]
        %v469 = vperm.slane %v467, 0
        %vm471 = vcmask 130048
        %v473 = vsel %vm471, %v433, 0
        %v476 = vsel %vm471, %v434, 0
        %v479 = vsel %vm471, %v435, 0
        %v482 = vsel %vm471, %v436, 0
        %v485 = vsel %vm471, %v437, 0
        %v488 = vsel %vm471, %v438, 0
        %v491 = vsel %vm471, %v439, 0
        %v494 = vsel %vm471, %v440, 0
        %v497 = vsel %vm471, %v441, 0
        %v500 = vsel %vm471, %v442, 0
        %v503 = vsel %vm471, %v443, 0
        %v506 = vsel %vm471, %v444, 0
        %v509 = vsel %vm471, %v445, 0
        %v512 = vsel %vm471, %v446, 0
        %v515 = vsel %vm471, %v447, 0
        %v518 = vsel %vm471, %v448, 0
        %v521 = vsel %vm471, %v449, 0
        %v524 = vsel %vm471, %v450, 0
        %v527 = vsel %vm471, %v451, 0
        %v530 = vsel %vm471, %v452, 0
        %v533 = vsel %vm471, %v453, 0
        %v536 = vsel %vm471, %v454, 0
        %v539 = vsel %vm471, %v455, 0
        %v542 = vsel %vm471, %v456, 0
        %v545 = vsel %vm471, %v457, 0
        %v548 = vsel %vm471, %v458, 0
        %v551 = vsel %vm471, %v459, 0
        %v554 = vsel %vm471, %v460, 0
        %v557 = vsel %vm471, %v461, 0
        %v560 = vsel %vm471, %v462, 0
        %v563 = vsel %vm471, %v463, 0
        %v566 = vsel %vm471, %v464, 0
        %568 = vmatpush.msra.mxu0 0.0
        %569 = vmatpush.msra.mxu0 0.0
        %570 = vmatpush.msra.mxu0 0.0
        %571 = vmatpush.msra.mxu0 0.0
        %572 = vmatpush.msra.mxu0 0.0
        %573 = vmatpush.msra.mxu0 0.0
        %574 = vmatpush.msra.mxu0 0.0
        %575 = vmatpush.msra.mxu0 0.0
        %576 = vmatpush.msra.mxu0 0.0
        %577 = vmatpush.msra.mxu0 0.0
        %578 = vmatpush.msra.mxu0 0.0
        %579 = vmatpush.msra.mxu0 0.0
        %580 = vmatpush.msra.mxu0 0.0
        %581 = vmatpush.msra.mxu0 0.0
        %582 = vmatpush.msra.mxu0 %v466
        %583 = vmatpush.msra.mxu0 %v465
        %584 = vmatmul.f32.gmra.mxu0 %v473
        %v585 = vpop.f32.mrf.mxu0
        %v586 = vadd.f32 %v469, %v585
        %587 = vmatmul.f32.gmra.mxu0 %v476
        %v588 = vpop.f32.mrf.mxu0
        %v589 = vadd.f32 %v469, %v588
        %590 = vmatmul.f32.gmra.mxu0 %v479
        %v591 = vpop.f32.mrf.mxu0
        %v592 = vadd.f32 %v469, %v591
        %593 = vmatmul.f32.gmra.mxu0 %v482
        %v594 = vpop.f32.mrf.mxu0
        %v595 = vadd.f32 %v469, %v594
        %596 = vmatmul.f32.gmra.mxu0 %v485
        %v597 = vpop.f32.mrf.mxu0
        %v598 = vadd.f32 %v469, %v597
        %599 = vmatmul.f32.gmra.mxu0 %v488
        %v600 = vpop.f32.mrf.mxu0
        %v601 = vadd.f32 %v469, %v600
        %602 = vmatmul.f32.gmra.mxu0 %v491
        %v603 = vpop.f32.mrf.mxu0
        %v604 = vadd.f32 %v469, %v603
        %605 = vmatmul.f32.gmra.mxu0 %v494
        %v606 = vpop.f32.mrf.mxu0
        %v607 = vadd.f32 %v469, %v606
        %608 = vmatmul.f32.gmra.mxu0 %v497
        %v609 = vpop.f32.mrf.mxu0
        %v610 = vadd.f32 %v469, %v609
        %611 = vmatmul.f32.gmra.mxu0 %v500
        %v612 = vpop.f32.mrf.mxu0
        %v613 = vadd.f32 %v469, %v612
        %614 = vmatmul.f32.gmra.mxu0 %v503
        %v615 = vpop.f32.mrf.mxu0
        %v616 = vadd.f32 %v469, %v615
        %617 = vmatmul.f32.gmra.mxu0 %v506
        %v618 = vpop.f32.mrf.mxu0
        %v619 = vadd.f32 %v469, %v618
        %620 = vmatmul.f32.gmra.mxu0 %v509
        %v621 = vpop.f32.mrf.mxu0
        %v622 = vadd.f32 %v469, %v621
        %623 = vmatmul.f32.gmra.mxu0 %v512
        %v624 = vpop.f32.mrf.mxu0
        %v625 = vadd.f32 %v469, %v624
        %626 = vmatmul.f32.gmra.mxu0 %v515
        %v627 = vpop.f32.mrf.mxu0
        %v628 = vadd.f32 %v469, %v627
        %629 = vmatmul.f32.gmra.mxu0 %v518
        %v630 = vpop.f32.mrf.mxu0
        %v631 = vadd.f32 %v469, %v630
        %632 = vmatmul.f32.gmra.mxu0 %v521
        %v633 = vpop.f32.mrf.mxu0
        %v634 = vadd.f32 %v469, %v633
        %635 = vmatmul.f32.gmra.mxu0 %v524
        %v636 = vpop.f32.mrf.mxu0
        %v637 = vadd.f32 %v469, %v636
        %638 = vmatmul.f32.gmra.mxu0 %v527
        %v639 = vpop.f32.mrf.mxu0
        %v640 = vadd.f32 %v469, %v639
        %641 = vmatmul.f32.gmra.mxu0 %v530
        %v642 = vpop.f32.mrf.mxu0
        %v643 = vadd.f32 %v469, %v642
        %644 = vmatmul.f32.gmra.mxu0 %v533
        %v645 = vpop.f32.mrf.mxu0
        %v646 = vadd.f32 %v469, %v645
        %647 = vmatmul.f32.gmra.mxu0 %v536
        %v648 = vpop.f32.mrf.mxu0
        %v649 = vadd.f32 %v469, %v648
        %650 = vmatmul.f32.gmra.mxu0 %v539
        %v651 = vpop.f32.mrf.mxu0
        %v652 = vadd.f32 %v469, %v651
        %653 = vmatmul.f32.gmra.mxu0 %v542
        %v654 = vpop.f32.mrf.mxu0
        %v655 = vadd.f32 %v469, %v654
        %656 = vmatmul.f32.gmra.mxu0 %v545
        %v657 = vpop.f32.mrf.mxu0
        %v658 = vadd.f32 %v469, %v657
        %659 = vmatmul.f32.gmra.mxu0 %v548
        %v660 = vpop.f32.mrf.mxu0
        %v661 = vadd.f32 %v469, %v660
        %662 = vmatmul.f32.gmra.mxu0 %v551
        %v663 = vpop.f32.mrf.mxu0
        %v664 = vadd.f32 %v469, %v663
        %665 = vmatmul.f32.gmra.mxu0 %v554
        %v666 = vpop.f32.mrf.mxu0
        %v667 = vadd.f32 %v469, %v666
        %668 = vmatmul.f32.gmra.mxu0 %v557
        %v669 = vpop.f32.mrf.mxu0
        %v670 = vadd.f32 %v469, %v669
        %671 = vmatmul.f32.gmra.mxu0 %v560
        %v672 = vpop.f32.mrf.mxu0
        %v673 = vadd.f32 %v469, %v672
        %674 = vmatmul.f32.gmra.mxu0 %v563
        %v675 = vpop.f32.mrf.mxu0
        %v676 = vadd.f32 %v469, %v675
        %677 = vmatmul.f32.gmra.mxu0 %v566
        %v678 = vpop.f32.mrf.mxu0
        %v679 = vadd.f32 %v469, %v678
        %680 = vdwg.mxu0
        %v681 = vld [vmem:[%s385] sm:$0xff]
        %v682 = vld [vmem:[%s385 + $0x8] sm:$0xff]
        %v683 = vld [vmem:[%s385 + $0x10] sm:$0xff]
        %v684 = vld [vmem:[%s385 + $0x18] sm:$0xff]
        %v685 = vld [vmem:[%s385 + $0x20] sm:$0xff]
        %v686 = vld [vmem:[%s385 + $0x28] sm:$0xff]
        %v687 = vld [vmem:[%s385 + $0x30] sm:$0xff]
        %v688 = vld [vmem:[%s385 + $0x38] sm:$0xff]
        %v689 = vld [vmem:[%s2] sm:$0xff]
        %v690 = vld [vmem:[%s2 + $0x8] sm:$0xff]
        %v691 = vld [vmem:[%s2 + $0x10] sm:$0xff]
        %v692 = vld [vmem:[%s2 + $0x18] sm:$0xff]
        %v693 = vld [vmem:[%s2 + $0x20] sm:$0xff]
        %v694 = vld [vmem:[%s2 + $0x28] sm:$0xff]
        %v695 = vld [vmem:[%s2 + $0x30] sm:$0xff]
        %v696 = vld [vmem:[%s2 + $0x38] sm:$0xff]
        %v697 = vld [vmem:[%s2 + $0x40] sm:$0xff]
        %v698 = vld [vmem:[%s2 + $0x48] sm:$0xff]
        %v699 = vld [vmem:[%s2 + $0x50] sm:$0xff]
        %v700 = vld [vmem:[%s2 + $0x58] sm:$0xff]
        %v701 = vld [vmem:[%s2 + $0x60] sm:$0xff]
        %v702 = vld [vmem:[%s2 + $0x68] sm:$0xff]
        %v703 = vld [vmem:[%s2 + $0x70] sm:$0xff]
        %v704 = vld [vmem:[%s2 + $0x78] sm:$0xff]
        %v705 = vld [vmem:[%s2 + $0x80] sm:$0xff]
        %v706 = vld [vmem:[%s2 + $0x88] sm:$0xff]
        %v707 = vld [vmem:[%s2 + $0x90] sm:$0xff]
        %v708 = vld [vmem:[%s2 + $0x98] sm:$0xff]
        %v709 = vld [vmem:[%s2 + $0xa0] sm:$0xff]
        %v710 = vld [vmem:[%s2 + $0xa8] sm:$0xff]
        %v711 = vld [vmem:[%s2 + $0xb0] sm:$0xff]
        %v712 = vld [vmem:[%s2 + $0xb8] sm:$0xff]
        %v713 = vld [vmem:[%s2 + $0xc0] sm:$0xff]
        %v714 = vld [vmem:[%s2 + $0xc8] sm:$0xff]
        %v715 = vld [vmem:[%s2 + $0xd0] sm:$0xff]
        %v716 = vld [vmem:[%s2 + $0xd8] sm:$0xff]
        %v717 = vld [vmem:[%s2 + $0xe0] sm:$0xff]
        %v718 = vld [vmem:[%s2 + $0xe8] sm:$0xff]
        %v719 = vld [vmem:[%s2 + $0xf0] sm:$0xff]
        %v720 = vld [vmem:[%s2 + $0xf8] sm:$0xff]
        %vm721 = vcmask 523264
        %v723 = vsel %vm721, %v689, 0
        %v726 = vsel %vm721, %v690, 0
        %v729 = vsel %vm721, %v691, 0
        %v732 = vsel %vm721, %v692, 0
        %v735 = vsel %vm721, %v693, 0
        %v738 = vsel %vm721, %v694, 0
        %v741 = vsel %vm721, %v695, 0
        %v744 = vsel %vm721, %v696, 0
        %v747 = vsel %vm721, %v697, 0
        %v750 = vsel %vm721, %v698, 0
        %v753 = vsel %vm721, %v699, 0
        %v756 = vsel %vm721, %v700, 0
        %v759 = vsel %vm721, %v701, 0
        %v762 = vsel %vm721, %v702, 0
        %v765 = vsel %vm721, %v703, 0
        %v768 = vsel %vm721, %v704, 0
        %v771 = vsel %vm721, %v705, 0
        %v774 = vsel %vm721, %v706, 0
        %v777 = vsel %vm721, %v707, 0
        %v780 = vsel %vm721, %v708, 0
        %v783 = vsel %vm721, %v709, 0
        %v786 = vsel %vm721, %v710, 0
        %v789 = vsel %vm721, %v711, 0
        %v792 = vsel %vm721, %v712, 0
        %v795 = vsel %vm721, %v713, 0
        %v798 = vsel %vm721, %v714, 0
        %v801 = vsel %vm721, %v715, 0
        %v804 = vsel %vm721, %v716, 0
        %v807 = vsel %vm721, %v717, 0
        %v810 = vsel %vm721, %v718, 0
        %v813 = vsel %vm721, %v719, 0
        %v816 = vsel %vm721, %v720, 0
        %818 = vmatpush.msra.mxu0 0.0
        %819 = vmatpush.msra.mxu0 0.0
        %820 = vmatpush.msra.mxu0 0.0
        %821 = vmatpush.msra.mxu0 0.0
        %822 = vmatpush.msra.mxu0 0.0
        %823 = vmatpush.msra.mxu0 0.0
        %824 = vmatpush.msra.mxu0 0.0
        %825 = vmatpush.msra.mxu0 0.0
        %826 = vmatpush.msra.mxu0 %v688
        %827 = vmatpush.msra.mxu0 %v687
        %828 = vmatpush.msra.mxu0 %v686
        %829 = vmatpush.msra.mxu0 %v685
        %830 = vmatpush.msra.mxu0 %v684
        %831 = vmatpush.msra.mxu0 %v683
        %832 = vmatpush.msra.mxu0 %v682
        %833 = vmatpush.msra.mxu0 %v681
        %834 = vmatmul.f32.gmra.mxu0 %v723
        %v835 = vpop.f32.mrf.mxu0
        %v836 = vadd.f32 0.0, %v835
        %837 = vmatmul.f32.gmra.mxu0 %v726
        %v838 = vpop.f32.mrf.mxu0
        %v839 = vadd.f32 0.0, %v838
        %840 = vmatmul.f32.gmra.mxu0 %v729
        %v841 = vpop.f32.mrf.mxu0
        %v842 = vadd.f32 0.0, %v841
        %843 = vmatmul.f32.gmra.mxu0 %v732
        %v844 = vpop.f32.mrf.mxu0
        %v845 = vadd.f32 0.0, %v844
        %846 = vmatmul.f32.gmra.mxu0 %v735
        %v847 = vpop.f32.mrf.mxu0
        %v848 = vadd.f32 0.0, %v847
        %849 = vmatmul.f32.gmra.mxu0 %v738
        %v850 = vpop.f32.mrf.mxu0
        %v851 = vadd.f32 0.0, %v850
        %852 = vmatmul.f32.gmra.mxu0 %v741
        %v853 = vpop.f32.mrf.mxu0
        %v854 = vadd.f32 0.0, %v853
        %855 = vmatmul.f32.gmra.mxu0 %v744
        %v856 = vpop.f32.mrf.mxu0
        %v857 = vadd.f32 0.0, %v856
        %858 = vmatmul.f32.gmra.mxu0 %v747
        %v859 = vpop.f32.mrf.mxu0
        %v860 = vadd.f32 0.0, %v859
        %861 = vmatmul.f32.gmra.mxu0 %v750
        %v862 = vpop.f32.mrf.mxu0
        %v863 = vadd.f32 0.0, %v862
        %864 = vmatmul.f32.gmra.mxu0 %v753
        %v865 = vpop.f32.mrf.mxu0
        %v866 = vadd.f32 0.0, %v865
        %867 = vmatmul.f32.gmra.mxu0 %v756
        %v868 = vpop.f32.mrf.mxu0
        %v869 = vadd.f32 0.0, %v868
        %870 = vmatmul.f32.gmra.mxu0 %v759
        %v871 = vpop.f32.mrf.mxu0
        %v872 = vadd.f32 0.0, %v871
        %873 = vmatmul.f32.gmra.mxu0 %v762
        %v874 = vpop.f32.mrf.mxu0
        %v875 = vadd.f32 0.0, %v874
        %876 = vmatmul.f32.gmra.mxu0 %v765
        %v877 = vpop.f32.mrf.mxu0
        %v878 = vadd.f32 0.0, %v877
        %879 = vmatmul.f32.gmra.mxu0 %v768
        %v880 = vpop.f32.mrf.mxu0
        %v881 = vadd.f32 0.0, %v880
        %882 = vmatmul.f32.gmra.mxu0 %v771
        %v883 = vpop.f32.mrf.mxu0
        %v884 = vadd.f32 0.0, %v883
        %885 = vmatmul.f32.gmra.mxu0 %v774
        %v886 = vpop.f32.mrf.mxu0
        %v887 = vadd.f32 0.0, %v886
        %888 = vmatmul.f32.gmra.mxu0 %v777
        %v889 = vpop.f32.mrf.mxu0
        %v890 = vadd.f32 0.0, %v889
        %891 = vmatmul.f32.gmra.mxu0 %v780
        %v892 = vpop.f32.mrf.mxu0
        %v893 = vadd.f32 0.0, %v892
        %894 = vmatmul.f32.gmra.mxu0 %v783
        %v895 = vpop.f32.mrf.mxu0
        %v896 = vadd.f32 0.0, %v895
        %897 = vmatmul.f32.gmra.mxu0 %v786
        %v898 = vpop.f32.mrf.mxu0
        %v899 = vadd.f32 0.0, %v898
        %900 = vmatmul.f32.gmra.mxu0 %v789
        %v901 = vpop.f32.mrf.mxu0
        %v902 = vadd.f32 0.0, %v901
        %903 = vmatmul.f32.gmra.mxu0 %v792
        %v904 = vpop.f32.mrf.mxu0
        %v905 = vadd.f32 0.0, %v904
        %906 = vmatmul.f32.gmra.mxu0 %v795
        %v907 = vpop.f32.mrf.mxu0
        %v908 = vadd.f32 0.0, %v907
        %909 = vmatmul.f32.gmra.mxu0 %v798
        %v910 = vpop.f32.mrf.mxu0
        %v911 = vadd.f32 0.0, %v910
        %912 = vmatmul.f32.gmra.mxu0 %v801
        %v913 = vpop.f32.mrf.mxu0
        %v914 = vadd.f32 0.0, %v913
        %915 = vmatmul.f32.gmra.mxu0 %v804
        %v916 = vpop.f32.mrf.mxu0
        %v917 = vadd.f32 0.0, %v916
        %918 = vmatmul.f32.gmra.mxu0 %v807
        %v919 = vpop.f32.mrf.mxu0
        %v920 = vadd.f32 0.0, %v919
        %921 = vmatmul.f32.gmra.mxu0 %v810
        %v922 = vpop.f32.mrf.mxu0
        %v923 = vadd.f32 0.0, %v922
        %924 = vmatmul.f32.gmra.mxu0 %v813
        %v925 = vpop.f32.mrf.mxu0
        %v926 = vadd.f32 0.0, %v925
        %927 = vmatmul.f32.gmra.mxu0 %v816
        %v928 = vpop.f32.mrf.mxu0
        %v929 = vadd.f32 0.0, %v928
        %930 = vdwg.mxu0
        %v931 = vld [vmem:[%s5] sm:$0xf]
        %v932 = vld [vmem:[%s6] sm:$0x1]
        %v933 = vperm.slane %v931, 0
        %v934 = vmul.f32 %v586, %v933
        %v935 = vmul.f32 %v589, %v933
        %v936 = vmul.f32 %v592, %v933
        %v937 = vmul.f32 %v595, %v933
        %v938 = vmul.f32 %v598, %v933
        %v939 = vmul.f32 %v601, %v933
        %v940 = vmul.f32 %v604, %v933
        %v941 = vmul.f32 %v607, %v933
        %v942 = vmul.f32 %v610, %v933
        %v943 = vmul.f32 %v613, %v933
        %v944 = vmul.f32 %v616, %v933
        %v945 = vmul.f32 %v619, %v933
        %v946 = vmul.f32 %v622, %v933
        %v947 = vmul.f32 %v625, %v933
        %v948 = vmul.f32 %v628, %v933
        %v949 = vmul.f32 %v631, %v933
        %v950 = vmul.f32 %v634, %v933
        %v951 = vmul.f32 %v637, %v933
        %v952 = vmul.f32 %v640, %v933
        %v953 = vmul.f32 %v643, %v933
        %v954 = vmul.f32 %v646, %v933
        %v955 = vmul.f32 %v649, %v933
        %v956 = vmul.f32 %v652, %v933
        %v957 = vmul.f32 %v655, %v933
        %v958 = vmul.f32 %v658, %v933
        %v959 = vmul.f32 %v661, %v933
        %v960 = vmul.f32 %v664, %v933
        %v961 = vmul.f32 %v667, %v933
        %v962 = vmul.f32 %v670, %v933
        %v963 = vmul.f32 %v673, %v933
        %v964 = vmul.f32 %v676, %v933
        %v965 = vmul.f32 %v679, %v933
        %v966 = vperm.slane %v931, 1
        %v967 = vmul.f32 %v836, %v966
        %v968 = vmul.f32 %v839, %v966
        %v969 = vmul.f32 %v842, %v966
        %v970 = vmul.f32 %v845, %v966
        %v971 = vmul.f32 %v848, %v966
        %v972 = vmul.f32 %v851, %v966
        %v973 = vmul.f32 %v854, %v966
        %v974 = vmul.f32 %v857, %v966
        %v975 = vmul.f32 %v860, %v966
        %v976 = vmul.f32 %v863, %v966
        %v977 = vmul.f32 %v866, %v966
        %v978 = vmul.f32 %v869, %v966
        %v979 = vmul.f32 %v872, %v966
        %v980 = vmul.f32 %v875, %v966
        %v981 = vmul.f32 %v878, %v966
        %v982 = vmul.f32 %v881, %v966
        %v983 = vmul.f32 %v884, %v966
        %v984 = vmul.f32 %v887, %v966
        %v985 = vmul.f32 %v890, %v966
        %v986 = vmul.f32 %v893, %v966
        %v987 = vmul.f32 %v896, %v966
        %v988 = vmul.f32 %v899, %v966
        %v989 = vmul.f32 %v902, %v966
        %v990 = vmul.f32 %v905, %v966
        %v991 = vmul.f32 %v908, %v966
        %v992 = vmul.f32 %v911, %v966
        %v993 = vmul.f32 %v914, %v966
        %v994 = vmul.f32 %v917, %v966
        %v995 = vmul.f32 %v920, %v966
        %v996 = vmul.f32 %v923, %v966
        %v997 = vmul.f32 %v926, %v966
        %v998 = vmul.f32 %v929, %v966
        %v999 = vadd.f32 %v934, %v967
        %v1000 = vadd.f32 %v935, %v968
        %v1001 = vadd.f32 %v936, %v969
        %v1002 = vadd.f32 %v937, %v970
        %v1003 = vadd.f32 %v938, %v971
        %v1004 = vadd.f32 %v939, %v972
        %v1005 = vadd.f32 %v940, %v973
        %v1006 = vadd.f32 %v941, %v974
        %v1007 = vadd.f32 %v942, %v975
        %v1008 = vadd.f32 %v943, %v976
        %v1009 = vadd.f32 %v944, %v977
        %v1010 = vadd.f32 %v945, %v978
        %v1011 = vadd.f32 %v946, %v979
        %v1012 = vadd.f32 %v947, %v980
        %v1013 = vadd.f32 %v948, %v981
        %v1014 = vadd.f32 %v949, %v982
        %v1015 = vadd.f32 %v950, %v983
        %v1016 = vadd.f32 %v951, %v984
        %v1017 = vadd.f32 %v952, %v985
        %v1018 = vadd.f32 %v953, %v986
        %v1019 = vadd.f32 %v954, %v987
        %v1020 = vadd.f32 %v955, %v988
        %v1021 = vadd.f32 %v956, %v989
        %v1022 = vadd.f32 %v957, %v990
        %v1023 = vadd.f32 %v958, %v991
        %v1024 = vadd.f32 %v959, %v992
        %v1025 = vadd.f32 %v960, %v993
        %v1026 = vadd.f32 %v961, %v994
        %v1027 = vadd.f32 %v962, %v995
        %v1028 = vadd.f32 %v963, %v996
        %v1029 = vadd.f32 %v964, %v997
        %v1030 = vadd.f32 %v965, %v998
        %vm1031 = vcmask 261120
        %v1032 = vsel %vm1031, %v999, 0.0
        %1033 = vadd.xlane.f32.xlu0 %v1032
        %v1034 = vpop.xlane.xlu0 %1033
        %v1035 = vsel %vm1031, %v1000, 0.0
        %1036 = vadd.xlane.f32.xlu0 %v1035
        %v1037 = vpop.xlane.xlu0 %1036
        %v1038 = vsel %vm1031, %v1001, 0.0
        %1039 = vadd.xlane.f32.xlu0 %v1038
        %v1040 = vpop.xlane.xlu0 %1039
        %v1041 = vsel %vm1031, %v1002, 0.0
        %1042 = vadd.xlane.f32.xlu0 %v1041
        %v1043 = vpop.xlane.xlu0 %1042
        %v1044 = vsel %vm1031, %v1003, 0.0
        %1045 = vadd.xlane.f32.xlu0 %v1044
        %v1046 = vpop.xlane.xlu0 %1045
        %v1047 = vsel %vm1031, %v1004, 0.0
        %1048 = vadd.xlane.f32.xlu0 %v1047
        %v1049 = vpop.xlane.xlu0 %1048
        %v1050 = vsel %vm1031, %v1005, 0.0
        %1051 = vadd.xlane.f32.xlu0 %v1050
        %v1052 = vpop.xlane.xlu0 %1051
        %v1053 = vsel %vm1031, %v1006, 0.0
        %1054 = vadd.xlane.f32.xlu0 %v1053
        %v1055 = vpop.xlane.xlu0 %1054
        %v1056 = vsel %vm1031, %v1007, 0.0
        %1057 = vadd.xlane.f32.xlu0 %v1056
        %v1058 = vpop.xlane.xlu0 %1057
        %v1059 = vsel %vm1031, %v1008, 0.0
        %1060 = vadd.xlane.f32.xlu0 %v1059
        %v1061 = vpop.xlane.xlu0 %1060
        %v1062 = vsel %vm1031, %v1009, 0.0
        %1063 = vadd.xlane.f32.xlu0 %v1062
        %v1064 = vpop.xlane.xlu0 %1063
        %v1065 = vsel %vm1031, %v1010, 0.0
        %1066 = vadd.xlane.f32.xlu0 %v1065
        %v1067 = vpop.xlane.xlu0 %1066
        %v1068 = vsel %vm1031, %v1011, 0.0
        %1069 = vadd.xlane.f32.xlu0 %v1068
        %v1070 = vpop.xlane.xlu0 %1069
        %v1071 = vsel %vm1031, %v1012, 0.0
        %1072 = vadd.xlane.f32.xlu0 %v1071
        %v1073 = vpop.xlane.xlu0 %1072
        %v1074 = vsel %vm1031, %v1013, 0.0
        %1075 = vadd.xlane.f32.xlu0 %v1074
        %v1076 = vpop.xlane.xlu0 %1075
        %v1077 = vsel %vm1031, %v1014, 0.0
        %1078 = vadd.xlane.f32.xlu0 %v1077
        %v1079 = vpop.xlane.xlu0 %1078
        %v1080 = vsel %vm1031, %v1015, 0.0
        %1081 = vadd.xlane.f32.xlu0 %v1080
        %v1082 = vpop.xlane.xlu0 %1081
        %v1083 = vsel %vm1031, %v1016, 0.0
        %1084 = vadd.xlane.f32.xlu0 %v1083
        %v1085 = vpop.xlane.xlu0 %1084
        %v1086 = vsel %vm1031, %v1017, 0.0
        %1087 = vadd.xlane.f32.xlu0 %v1086
        %v1088 = vpop.xlane.xlu0 %1087
        %v1089 = vsel %vm1031, %v1018, 0.0
        %1090 = vadd.xlane.f32.xlu0 %v1089
        %v1091 = vpop.xlane.xlu0 %1090
        %v1092 = vsel %vm1031, %v1019, 0.0
        %1093 = vadd.xlane.f32.xlu0 %v1092
        %v1094 = vpop.xlane.xlu0 %1093
        %v1095 = vsel %vm1031, %v1020, 0.0
        %1096 = vadd.xlane.f32.xlu0 %v1095
        %v1097 = vpop.xlane.xlu0 %1096
        %v1098 = vsel %vm1031, %v1021, 0.0
        %1099 = vadd.xlane.f32.xlu0 %v1098
        %v1100 = vpop.xlane.xlu0 %1099
        %v1101 = vsel %vm1031, %v1022, 0.0
        %1102 = vadd.xlane.f32.xlu0 %v1101
        %v1103 = vpop.xlane.xlu0 %1102
        %v1104 = vsel %vm1031, %v1023, 0.0
        %1105 = vadd.xlane.f32.xlu0 %v1104
        %v1106 = vpop.xlane.xlu0 %1105
        %v1107 = vsel %vm1031, %v1024, 0.0
        %1108 = vadd.xlane.f32.xlu0 %v1107
        %v1109 = vpop.xlane.xlu0 %1108
        %v1110 = vsel %vm1031, %v1025, 0.0
        %1111 = vadd.xlane.f32.xlu0 %v1110
        %v1112 = vpop.xlane.xlu0 %1111
        %v1113 = vsel %vm1031, %v1026, 0.0
        %1114 = vadd.xlane.f32.xlu0 %v1113
        %v1115 = vpop.xlane.xlu0 %1114
        %v1116 = vsel %vm1031, %v1027, 0.0
        %1117 = vadd.xlane.f32.xlu0 %v1116
        %v1118 = vpop.xlane.xlu0 %1117
        %v1119 = vsel %vm1031, %v1028, 0.0
        %1120 = vadd.xlane.f32.xlu0 %v1119
        %v1121 = vpop.xlane.xlu0 %1120
        %v1122 = vsel %vm1031, %v1029, 0.0
        %1123 = vadd.xlane.f32.xlu0 %v1122
        %v1124 = vpop.xlane.xlu0 %1123
        %v1125 = vsel %vm1031, %v1030, 0.0
        %1126 = vadd.xlane.f32.xlu0 %v1125
        %v1127 = vpop.xlane.xlu0 %1126
        %v1129 = vperm.slane %v932, 0
        %v1131 = vadd.f32 %v1034, %v1129
        %v1132 = vadd.f32 %v1037, %v1129
        %v1133 = vadd.f32 %v1040, %v1129
        %v1134 = vadd.f32 %v1043, %v1129
        %v1135 = vadd.f32 %v1046, %v1129
        %v1136 = vadd.f32 %v1049, %v1129
        %v1137 = vadd.f32 %v1052, %v1129
        %v1138 = vadd.f32 %v1055, %v1129
        %v1139 = vadd.f32 %v1058, %v1129
        %v1140 = vadd.f32 %v1061, %v1129
        %v1141 = vadd.f32 %v1064, %v1129
        %v1142 = vadd.f32 %v1067, %v1129
        %v1143 = vadd.f32 %v1070, %v1129
        %v1144 = vadd.f32 %v1073, %v1129
        %v1145 = vadd.f32 %v1076, %v1129
        %v1146 = vadd.f32 %v1079, %v1129
        %v1147 = vadd.f32 %v1082, %v1129
        %v1148 = vadd.f32 %v1085, %v1129
        %v1149 = vadd.f32 %v1088, %v1129
        %v1150 = vadd.f32 %v1091, %v1129
        %v1151 = vadd.f32 %v1094, %v1129
        %v1152 = vadd.f32 %v1097, %v1129
        %v1153 = vadd.f32 %v1100, %v1129
        %v1154 = vadd.f32 %v1103, %v1129
        %v1155 = vadd.f32 %v1106, %v1129
        %v1156 = vadd.f32 %v1109, %v1129
        %v1157 = vadd.f32 %v1112, %v1129
        %v1158 = vadd.f32 %v1115, %v1129
        %v1159 = vadd.f32 %v1118, %v1129
        %v1160 = vadd.f32 %v1121, %v1129
        %v1161 = vadd.f32 %v1124, %v1129
        %v1162 = vadd.f32 %v1127, %v1129
        %v1163 = vperm.slane %v931, 2
        %v1164 = vmul.f32 %v586, %v1163
        %v1165 = vmul.f32 %v589, %v1163
        %v1166 = vmul.f32 %v592, %v1163
        %v1167 = vmul.f32 %v595, %v1163
        %v1168 = vmul.f32 %v598, %v1163
        %v1169 = vmul.f32 %v601, %v1163
        %v1170 = vmul.f32 %v604, %v1163
        %v1171 = vmul.f32 %v607, %v1163
        %v1172 = vmul.f32 %v610, %v1163
        %v1173 = vmul.f32 %v613, %v1163
        %v1174 = vmul.f32 %v616, %v1163
        %v1175 = vmul.f32 %v619, %v1163
        %v1176 = vmul.f32 %v622, %v1163
        %v1177 = vmul.f32 %v625, %v1163
        %v1178 = vmul.f32 %v628, %v1163
        %v1179 = vmul.f32 %v631, %v1163
        %v1180 = vmul.f32 %v634, %v1163
        %v1181 = vmul.f32 %v637, %v1163
        %v1182 = vmul.f32 %v640, %v1163
        %v1183 = vmul.f32 %v643, %v1163
        %v1184 = vmul.f32 %v646, %v1163
        %v1185 = vmul.f32 %v649, %v1163
        %v1186 = vmul.f32 %v652, %v1163
        %v1187 = vmul.f32 %v655, %v1163
        %v1188 = vmul.f32 %v658, %v1163
        %v1189 = vmul.f32 %v661, %v1163
        %v1190 = vmul.f32 %v664, %v1163
        %v1191 = vmul.f32 %v667, %v1163
        %v1192 = vmul.f32 %v670, %v1163
        %v1193 = vmul.f32 %v673, %v1163
        %v1194 = vmul.f32 %v676, %v1163
        %v1195 = vmul.f32 %v679, %v1163
        %v1196 = vperm.slane %v931, 3
        %v1197 = vmul.f32 %v836, %v1196
        %v1198 = vmul.f32 %v839, %v1196
        %v1199 = vmul.f32 %v842, %v1196
        %v1200 = vmul.f32 %v845, %v1196
        %v1201 = vmul.f32 %v848, %v1196
        %v1202 = vmul.f32 %v851, %v1196
        %v1203 = vmul.f32 %v854, %v1196
        %v1204 = vmul.f32 %v857, %v1196
        %v1205 = vmul.f32 %v860, %v1196
        %v1206 = vmul.f32 %v863, %v1196
        %v1207 = vmul.f32 %v866, %v1196
        %v1208 = vmul.f32 %v869, %v1196
        %v1209 = vmul.f32 %v872, %v1196
        %v1210 = vmul.f32 %v875, %v1196
        %v1211 = vmul.f32 %v878, %v1196
        %v1212 = vmul.f32 %v881, %v1196
        %v1213 = vmul.f32 %v884, %v1196
        %v1214 = vmul.f32 %v887, %v1196
        %v1215 = vmul.f32 %v890, %v1196
        %v1216 = vmul.f32 %v893, %v1196
        %v1217 = vmul.f32 %v896, %v1196
        %v1218 = vmul.f32 %v899, %v1196
        %v1219 = vmul.f32 %v902, %v1196
        %v1220 = vmul.f32 %v905, %v1196
        %v1221 = vmul.f32 %v908, %v1196
        %v1222 = vmul.f32 %v911, %v1196
        %v1223 = vmul.f32 %v914, %v1196
        %v1224 = vmul.f32 %v917, %v1196
        %v1225 = vmul.f32 %v920, %v1196
        %v1226 = vmul.f32 %v923, %v1196
        %v1227 = vmul.f32 %v926, %v1196
        %v1228 = vmul.f32 %v929, %v1196
        %v1229 = vadd.f32 %v1164, %v1197
        %v1230 = vadd.f32 %v1165, %v1198
        %v1231 = vadd.f32 %v1166, %v1199
        %v1232 = vadd.f32 %v1167, %v1200
        %v1233 = vadd.f32 %v1168, %v1201
        %v1234 = vadd.f32 %v1169, %v1202
        %v1235 = vadd.f32 %v1170, %v1203
        %v1236 = vadd.f32 %v1171, %v1204
        %v1237 = vadd.f32 %v1172, %v1205
        %v1238 = vadd.f32 %v1173, %v1206
        %v1239 = vadd.f32 %v1174, %v1207
        %v1240 = vadd.f32 %v1175, %v1208
        %v1241 = vadd.f32 %v1176, %v1209
        %v1242 = vadd.f32 %v1177, %v1210
        %v1243 = vadd.f32 %v1178, %v1211
        %v1244 = vadd.f32 %v1179, %v1212
        %v1245 = vadd.f32 %v1180, %v1213
        %v1246 = vadd.f32 %v1181, %v1214
        %v1247 = vadd.f32 %v1182, %v1215
        %v1248 = vadd.f32 %v1183, %v1216
        %v1249 = vadd.f32 %v1184, %v1217
        %v1250 = vadd.f32 %v1185, %v1218
        %v1251 = vadd.f32 %v1186, %v1219
        %v1252 = vadd.f32 %v1187, %v1220
        %v1253 = vadd.f32 %v1188, %v1221
        %v1254 = vadd.f32 %v1189, %v1222
        %v1255 = vadd.f32 %v1190, %v1223
        %v1256 = vadd.f32 %v1191, %v1224
        %v1257 = vadd.f32 %v1192, %v1225
        %v1258 = vadd.f32 %v1193, %v1226
        %v1259 = vadd.f32 %v1194, %v1227
        %v1260 = vadd.f32 %v1195, %v1228
        %v1261 = vsel %vm1031, %v1229, 0.0
        %1262 = vadd.xlane.f32.xlu0 %v1261
        %v1263 = vpop.xlane.xlu0 %1262
        %v1264 = vsel %vm1031, %v1230, 0.0
        %1265 = vadd.xlane.f32.xlu0 %v1264
        %v1266 = vpop.xlane.xlu0 %1265
        %v1267 = vsel %vm1031, %v1231, 0.0
        %1268 = vadd.xlane.f32.xlu0 %v1267
        %v1269 = vpop.xlane.xlu0 %1268
        %v1270 = vsel %vm1031, %v1232, 0.0
        %1271 = vadd.xlane.f32.xlu0 %v1270
        %v1272 = vpop.xlane.xlu0 %1271
        %v1273 = vsel %vm1031, %v1233, 0.0
        %1274 = vadd.xlane.f32.xlu0 %v1273
        %v1275 = vpop.xlane.xlu0 %1274
        %v1276 = vsel %vm1031, %v1234, 0.0
        %1277 = vadd.xlane.f32.xlu0 %v1276
        %v1278 = vpop.xlane.xlu0 %1277
        %v1279 = vsel %vm1031, %v1235, 0.0
        %1280 = vadd.xlane.f32.xlu0 %v1279
        %v1281 = vpop.xlane.xlu0 %1280
        %v1282 = vsel %vm1031, %v1236, 0.0
        %1283 = vadd.xlane.f32.xlu0 %v1282
        %v1284 = vpop.xlane.xlu0 %1283
        %v1285 = vsel %vm1031, %v1237, 0.0
        %1286 = vadd.xlane.f32.xlu0 %v1285
        %v1287 = vpop.xlane.xlu0 %1286
        %v1288 = vsel %vm1031, %v1238, 0.0
        %1289 = vadd.xlane.f32.xlu0 %v1288
        %v1290 = vpop.xlane.xlu0 %1289
        %v1291 = vsel %vm1031, %v1239, 0.0
        %1292 = vadd.xlane.f32.xlu0 %v1291
        %v1293 = vpop.xlane.xlu0 %1292
        %v1294 = vsel %vm1031, %v1240, 0.0
        %1295 = vadd.xlane.f32.xlu0 %v1294
        %v1296 = vpop.xlane.xlu0 %1295
        %v1297 = vsel %vm1031, %v1241, 0.0
        %1298 = vadd.xlane.f32.xlu0 %v1297
        %v1299 = vpop.xlane.xlu0 %1298
        %v1300 = vsel %vm1031, %v1242, 0.0
        %1301 = vadd.xlane.f32.xlu0 %v1300
        %v1302 = vpop.xlane.xlu0 %1301
        %v1303 = vsel %vm1031, %v1243, 0.0
        %1304 = vadd.xlane.f32.xlu0 %v1303
        %v1305 = vpop.xlane.xlu0 %1304
        %v1306 = vsel %vm1031, %v1244, 0.0
        %1307 = vadd.xlane.f32.xlu0 %v1306
        %v1308 = vpop.xlane.xlu0 %1307
        %v1309 = vsel %vm1031, %v1245, 0.0
        %1310 = vadd.xlane.f32.xlu0 %v1309
        %v1311 = vpop.xlane.xlu0 %1310
        %v1312 = vsel %vm1031, %v1246, 0.0
        %1313 = vadd.xlane.f32.xlu0 %v1312
        %v1314 = vpop.xlane.xlu0 %1313
        %v1315 = vsel %vm1031, %v1247, 0.0
        %1316 = vadd.xlane.f32.xlu0 %v1315
        %v1317 = vpop.xlane.xlu0 %1316
        %v1318 = vsel %vm1031, %v1248, 0.0
        %1319 = vadd.xlane.f32.xlu0 %v1318
        %v1320 = vpop.xlane.xlu0 %1319
        %v1321 = vsel %vm1031, %v1249, 0.0
        %1322 = vadd.xlane.f32.xlu0 %v1321
        %v1323 = vpop.xlane.xlu0 %1322
        %v1324 = vsel %vm1031, %v1250, 0.0
        %1325 = vadd.xlane.f32.xlu0 %v1324
        %v1326 = vpop.xlane.xlu0 %1325
        %v1327 = vsel %vm1031, %v1251, 0.0
        %1328 = vadd.xlane.f32.xlu0 %v1327
        %v1329 = vpop.xlane.xlu0 %1328
        %v1330 = vsel %vm1031, %v1252, 0.0
        %1331 = vadd.xlane.f32.xlu0 %v1330
        %v1332 = vpop.xlane.xlu0 %1331
        %v1333 = vsel %vm1031, %v1253, 0.0
        %1334 = vadd.xlane.f32.xlu0 %v1333
        %v1335 = vpop.xlane.xlu0 %1334
        %v1336 = vsel %vm1031, %v1254, 0.0
        %1337 = vadd.xlane.f32.xlu0 %v1336
        %v1338 = vpop.xlane.xlu0 %1337
        %v1339 = vsel %vm1031, %v1255, 0.0
        %1340 = vadd.xlane.f32.xlu0 %v1339
        %v1341 = vpop.xlane.xlu0 %1340
        %v1342 = vsel %vm1031, %v1256, 0.0
        %1343 = vadd.xlane.f32.xlu0 %v1342
        %v1344 = vpop.xlane.xlu0 %1343
        %v1345 = vsel %vm1031, %v1257, 0.0
        %1346 = vadd.xlane.f32.xlu0 %v1345
        %v1347 = vpop.xlane.xlu0 %1346
        %v1348 = vsel %vm1031, %v1258, 0.0
        %1349 = vadd.xlane.f32.xlu0 %v1348
        %v1350 = vpop.xlane.xlu0 %1349
        %v1351 = vsel %vm1031, %v1259, 0.0
        %1352 = vadd.xlane.f32.xlu0 %v1351
        %v1353 = vpop.xlane.xlu0 %1352
        %v1354 = vsel %vm1031, %v1260, 0.0
        %1355 = vadd.xlane.f32.xlu0 %v1354
        %v1356 = vpop.xlane.xlu0 %1355
        %v1357 = vadd.f32 %v1263, %v1129
        %v1358 = vadd.f32 %v1266, %v1129
        %v1359 = vadd.f32 %v1269, %v1129
        %v1360 = vadd.f32 %v1272, %v1129
        %v1361 = vadd.f32 %v1275, %v1129
        %v1362 = vadd.f32 %v1278, %v1129
        %v1363 = vadd.f32 %v1281, %v1129
        %v1364 = vadd.f32 %v1284, %v1129
        %v1365 = vadd.f32 %v1287, %v1129
        %v1366 = vadd.f32 %v1290, %v1129
        %v1367 = vadd.f32 %v1293, %v1129
        %v1368 = vadd.f32 %v1296, %v1129
        %v1369 = vadd.f32 %v1299, %v1129
        %v1370 = vadd.f32 %v1302, %v1129
        %v1371 = vadd.f32 %v1305, %v1129
        %v1372 = vadd.f32 %v1308, %v1129
        %v1373 = vadd.f32 %v1311, %v1129
        %v1374 = vadd.f32 %v1314, %v1129
        %v1375 = vadd.f32 %v1317, %v1129
        %v1376 = vadd.f32 %v1320, %v1129
        %v1377 = vadd.f32 %v1323, %v1129
        %v1378 = vadd.f32 %v1326, %v1129
        %v1379 = vadd.f32 %v1329, %v1129
        %v1380 = vadd.f32 %v1332, %v1129
        %v1381 = vadd.f32 %v1335, %v1129
        %v1382 = vadd.f32 %v1338, %v1129
        %v1383 = vadd.f32 %v1341, %v1129
        %v1384 = vadd.f32 %v1344, %v1129
        %v1385 = vadd.f32 %v1347, %v1129
        %v1386 = vadd.f32 %v1350, %v1129
        %v1387 = vadd.f32 %v1353, %v1129
        %v1388 = vadd.f32 %v1356, %v1129
        %v1389 = vxor.u32 %v1131, 2147483648
        %v1390 = vxor.u32 %v1132, 2147483648
        %v1391 = vxor.u32 %v1133, 2147483648
        %v1392 = vxor.u32 %v1134, 2147483648
        %v1393 = vxor.u32 %v1135, 2147483648
        %v1394 = vxor.u32 %v1136, 2147483648
        %v1395 = vxor.u32 %v1137, 2147483648
        %v1396 = vxor.u32 %v1138, 2147483648
        %v1397 = vxor.u32 %v1139, 2147483648
        %v1398 = vxor.u32 %v1140, 2147483648
        %v1399 = vxor.u32 %v1141, 2147483648
        %v1400 = vxor.u32 %v1142, 2147483648
        %v1401 = vxor.u32 %v1143, 2147483648
        %v1402 = vxor.u32 %v1144, 2147483648
        %v1403 = vxor.u32 %v1145, 2147483648
        %v1404 = vxor.u32 %v1146, 2147483648
        %v1405 = vxor.u32 %v1147, 2147483648
        %v1406 = vxor.u32 %v1148, 2147483648
        %v1407 = vxor.u32 %v1149, 2147483648
        %v1408 = vxor.u32 %v1150, 2147483648
        %v1409 = vxor.u32 %v1151, 2147483648
        %v1410 = vxor.u32 %v1152, 2147483648
        %v1411 = vxor.u32 %v1153, 2147483648
        %v1412 = vxor.u32 %v1154, 2147483648
        %v1413 = vxor.u32 %v1155, 2147483648
        %v1414 = vxor.u32 %v1156, 2147483648
        %v1415 = vxor.u32 %v1157, 2147483648
        %v1416 = vxor.u32 %v1158, 2147483648
        %v1417 = vxor.u32 %v1159, 2147483648
        %v1418 = vxor.u32 %v1160, 2147483648
        %v1419 = vxor.u32 %v1161, 2147483648
        %v1420 = vxor.u32 %v1162, 2147483648
        %v1421 = vmul.f32 %v1389, 1.442695
        %v1422 = vpow.pop %v1421
        %v1423 = vmul.f32 %v1390, 1.442695
        %v1424 = vpow.pop %v1423
        %v1425 = vmul.f32 %v1391, 1.442695
        %v1426 = vpow.pop %v1425
        %v1427 = vmul.f32 %v1392, 1.442695
        %v1428 = vpow.pop %v1427
        %v1429 = vmul.f32 %v1393, 1.442695
        %v1430 = vpow.pop %v1429
        %v1431 = vmul.f32 %v1394, 1.442695
        %v1432 = vpow.pop %v1431
        %v1433 = vmul.f32 %v1395, 1.442695
        %v1434 = vpow.pop %v1433
        %v1435 = vmul.f32 %v1396, 1.442695
        %v1436 = vpow.pop %v1435
        %v1437 = vmul.f32 %v1397, 1.442695
        %v1438 = vpow.pop %v1437
        %v1439 = vmul.f32 %v1398, 1.442695
        %v1440 = vpow.pop %v1439
        %v1441 = vmul.f32 %v1399, 1.442695
        %v1442 = vpow.pop %v1441
        %v1443 = vmul.f32 %v1400, 1.442695
        %v1444 = vpow.pop %v1443
        %v1445 = vmul.f32 %v1401, 1.442695
        %v1446 = vpow.pop %v1445
        %v1447 = vmul.f32 %v1402, 1.442695
        %v1448 = vpow.pop %v1447
        %v1449 = vmul.f32 %v1403, 1.442695
        %v1450 = vpow.pop %v1449
        %v1451 = vmul.f32 %v1404, 1.442695
        %v1452 = vpow.pop %v1451
        %v1453 = vmul.f32 %v1405, 1.442695
        %v1454 = vpow.pop %v1453
        %v1455 = vmul.f32 %v1406, 1.442695
        %v1456 = vpow.pop %v1455
        %v1457 = vmul.f32 %v1407, 1.442695
        %v1458 = vpow.pop %v1457
        %v1459 = vmul.f32 %v1408, 1.442695
        %v1460 = vpow.pop %v1459
        %v1461 = vmul.f32 %v1409, 1.442695
        %v1462 = vpow.pop %v1461
        %v1463 = vmul.f32 %v1410, 1.442695
        %v1464 = vpow.pop %v1463
        %v1465 = vmul.f32 %v1411, 1.442695
        %v1466 = vpow.pop %v1465
        %v1467 = vmul.f32 %v1412, 1.442695
        %v1468 = vpow.pop %v1467
        %v1469 = vmul.f32 %v1413, 1.442695
        %v1470 = vpow.pop %v1469
        %v1471 = vmul.f32 %v1414, 1.442695
        %v1472 = vpow.pop %v1471
        %v1473 = vmul.f32 %v1415, 1.442695
        %v1474 = vpow.pop %v1473
        %v1475 = vmul.f32 %v1416, 1.442695
        %v1476 = vpow.pop %v1475
        %v1477 = vmul.f32 %v1417, 1.442695
        %v1478 = vpow.pop %v1477
        %v1479 = vmul.f32 %v1418, 1.442695
        %v1480 = vpow.pop %v1479
        %v1481 = vmul.f32 %v1419, 1.442695
        %v1482 = vpow.pop %v1481
        %v1483 = vmul.f32 %v1420, 1.442695
        %v1484 = vpow.pop %v1483
        %v1485 = vadd.f32 %v1422, 1.0
        %v1486 = vadd.f32 %v1424, 1.0
        %v1487 = vadd.f32 %v1426, 1.0
        %v1488 = vadd.f32 %v1428, 1.0
        %v1489 = vadd.f32 %v1430, 1.0
        %v1490 = vadd.f32 %v1432, 1.0
        %v1491 = vadd.f32 %v1434, 1.0
        %v1492 = vadd.f32 %v1436, 1.0
        %v1493 = vadd.f32 %v1438, 1.0
        %v1494 = vadd.f32 %v1440, 1.0
        %v1495 = vadd.f32 %v1442, 1.0
        %v1496 = vadd.f32 %v1444, 1.0
        %v1497 = vadd.f32 %v1446, 1.0
        %v1498 = vadd.f32 %v1448, 1.0
        %v1499 = vadd.f32 %v1450, 1.0
        %v1500 = vadd.f32 %v1452, 1.0
        %v1501 = vadd.f32 %v1454, 1.0
        %v1502 = vadd.f32 %v1456, 1.0
        %v1503 = vadd.f32 %v1458, 1.0
        %v1504 = vadd.f32 %v1460, 1.0
        %v1505 = vadd.f32 %v1462, 1.0
        %v1506 = vadd.f32 %v1464, 1.0
        %v1507 = vadd.f32 %v1466, 1.0
        %v1508 = vadd.f32 %v1468, 1.0
        %v1509 = vadd.f32 %v1470, 1.0
        %v1510 = vadd.f32 %v1472, 1.0
        %v1511 = vadd.f32 %v1474, 1.0
        %v1512 = vadd.f32 %v1476, 1.0
        %v1513 = vadd.f32 %v1478, 1.0
        %v1514 = vadd.f32 %v1480, 1.0
        %v1515 = vadd.f32 %v1482, 1.0
        %v1516 = vadd.f32 %v1484, 1.0
        %v1517 = vrcp.pop %v1485
        %v1518 = vmul.f32 %v1485, %v1517
        %v1519 = vsub.f32 1.0, %v1518
        %v1520 = vmul.f32 %v1517, %v1519
        %v1521 = vadd.f32 %v1517, %v1520
        %vm1522 = vweird.f32 %v1485
        %vm1523 = vweird.f32 %v1517
        %vm1524 = vmor %vm1522, %vm1523
        %v1525 = vsel %vm1524, %v1517, %v1521
        %v1526 = vand.u32 2147483647, %v1485
        %vm1527 = vcmp.eq.f32.partialorder %v1526, 8.507059e+37
        %v1528 = vand.u32 %v1485, 2147483648
        %v1529 = vor.u32 1.1754944e-38, %v1528
        %v1530 = vsel %vm1527, %v1529, %v1525
        %v1531 = vmul.f32 1.0, %v1530
        %v1532 = vrcp.pop %v1486
        %v1533 = vmul.f32 %v1486, %v1532
        %v1534 = vsub.f32 1.0, %v1533
        %v1535 = vmul.f32 %v1532, %v1534
        %v1536 = vadd.f32 %v1532, %v1535
        %vm1537 = vweird.f32 %v1486
        %vm1538 = vweird.f32 %v1532
        %vm1539 = vmor %vm1537, %vm1538
        %v1540 = vsel %vm1539, %v1532, %v1536
        %v1541 = vand.u32 2147483647, %v1486
        %vm1542 = vcmp.eq.f32.partialorder %v1541, 8.507059e+37
        %v1543 = vand.u32 %v1486, 2147483648
        %v1544 = vor.u32 1.1754944e-38, %v1543
        %v1545 = vsel %vm1542, %v1544, %v1540
        %v1546 = vmul.f32 1.0, %v1545
        %v1547 = vrcp.pop %v1487
        %v1548 = vmul.f32 %v1487, %v1547
        %v1549 = vsub.f32 1.0, %v1548
        %v1550 = vmul.f32 %v1547, %v1549
        %v1551 = vadd.f32 %v1547, %v1550
        %vm1552 = vweird.f32 %v1487
        %vm1553 = vweird.f32 %v1547
        %vm1554 = vmor %vm1552, %vm1553
        %v1555 = vsel %vm1554, %v1547, %v1551
        %v1556 = vand.u32 2147483647, %v1487
        %vm1557 = vcmp.eq.f32.partialorder %v1556, 8.507059e+37
        %v1558 = vand.u32 %v1487, 2147483648
        %v1559 = vor.u32 1.1754944e-38, %v1558
        %v1560 = vsel %vm1557, %v1559, %v1555
        %v1561 = vmul.f32 1.0, %v1560
        %v1562 = vrcp.pop %v1488
        %v1563 = vmul.f32 %v1488, %v1562
        %v1564 = vsub.f32 1.0, %v1563
        %v1565 = vmul.f32 %v1562, %v1564
        %v1566 = vadd.f32 %v1562, %v1565
        %vm1567 = vweird.f32 %v1488
        %vm1568 = vweird.f32 %v1562
        %vm1569 = vmor %vm1567, %vm1568
        %v1570 = vsel %vm1569, %v1562, %v1566
        %v1571 = vand.u32 2147483647, %v1488
        %vm1572 = vcmp.eq.f32.partialorder %v1571, 8.507059e+37
        %v1573 = vand.u32 %v1488, 2147483648
        %v1574 = vor.u32 1.1754944e-38, %v1573
        %v1575 = vsel %vm1572, %v1574, %v1570
        %v1576 = vmul.f32 1.0, %v1575
        %v1577 = vrcp.pop %v1489
        %v1578 = vmul.f32 %v1489, %v1577
        %v1579 = vsub.f32 1.0, %v1578
        %v1580 = vmul.f32 %v1577, %v1579
        %v1581 = vadd.f32 %v1577, %v1580
        %vm1582 = vweird.f32 %v1489
        %vm1583 = vweird.f32 %v1577
        %vm1584 = vmor %vm1582, %vm1583
        %v1585 = vsel %vm1584, %v1577, %v1581
        %v1586 = vand.u32 2147483647, %v1489
        %vm1587 = vcmp.eq.f32.partialorder %v1586, 8.507059e+37
        %v1588 = vand.u32 %v1489, 2147483648
        %v1589 = vor.u32 1.1754944e-38, %v1588
        %v1590 = vsel %vm1587, %v1589, %v1585
        %v1591 = vmul.f32 1.0, %v1590
        %v1592 = vrcp.pop %v1490
        %v1593 = vmul.f32 %v1490, %v1592
        %v1594 = vsub.f32 1.0, %v1593
        %v1595 = vmul.f32 %v1592, %v1594
        %v1596 = vadd.f32 %v1592, %v1595
        %vm1597 = vweird.f32 %v1490
        %vm1598 = vweird.f32 %v1592
        %vm1599 = vmor %vm1597, %vm1598
        %v1600 = vsel %vm1599, %v1592, %v1596
        %v1601 = vand.u32 2147483647, %v1490
        %vm1602 = vcmp.eq.f32.partialorder %v1601, 8.507059e+37
        %v1603 = vand.u32 %v1490, 2147483648
        %v1604 = vor.u32 1.1754944e-38, %v1603
        %v1605 = vsel %vm1602, %v1604, %v1600
        %v1606 = vmul.f32 1.0, %v1605
        %v1607 = vrcp.pop %v1491
        %v1608 = vmul.f32 %v1491, %v1607
        %v1609 = vsub.f32 1.0, %v1608
        %v1610 = vmul.f32 %v1607, %v1609
        %v1611 = vadd.f32 %v1607, %v1610
        %vm1612 = vweird.f32 %v1491
        %vm1613 = vweird.f32 %v1607
        %vm1614 = vmor %vm1612, %vm1613
        %v1615 = vsel %vm1614, %v1607, %v1611
        %v1616 = vand.u32 2147483647, %v1491
        %vm1617 = vcmp.eq.f32.partialorder %v1616, 8.507059e+37
        %v1618 = vand.u32 %v1491, 2147483648
        %v1619 = vor.u32 1.1754944e-38, %v1618
        %v1620 = vsel %vm1617, %v1619, %v1615
        %v1621 = vmul.f32 1.0, %v1620
        %v1622 = vrcp.pop %v1492
        %v1623 = vmul.f32 %v1492, %v1622
        %v1624 = vsub.f32 1.0, %v1623
        %v1625 = vmul.f32 %v1622, %v1624
        %v1626 = vadd.f32 %v1622, %v1625
        %vm1627 = vweird.f32 %v1492
        %vm1628 = vweird.f32 %v1622
        %vm1629 = vmor %vm1627, %vm1628
        %v1630 = vsel %vm1629, %v1622, %v1626
        %v1631 = vand.u32 2147483647, %v1492
        %vm1632 = vcmp.eq.f32.partialorder %v1631, 8.507059e+37
        %v1633 = vand.u32 %v1492, 2147483648
        %v1634 = vor.u32 1.1754944e-38, %v1633
        %v1635 = vsel %vm1632, %v1634, %v1630
        %v1636 = vmul.f32 1.0, %v1635
        %v1637 = vrcp.pop %v1493
        %v1638 = vmul.f32 %v1493, %v1637
        %v1639 = vsub.f32 1.0, %v1638
        %v1640 = vmul.f32 %v1637, %v1639
        %v1641 = vadd.f32 %v1637, %v1640
        %vm1642 = vweird.f32 %v1493
        %vm1643 = vweird.f32 %v1637
        %vm1644 = vmor %vm1642, %vm1643
        %v1645 = vsel %vm1644, %v1637, %v1641
        %v1646 = vand.u32 2147483647, %v1493
        %vm1647 = vcmp.eq.f32.partialorder %v1646, 8.507059e+37
        %v1648 = vand.u32 %v1493, 2147483648
        %v1649 = vor.u32 1.1754944e-38, %v1648
        %v1650 = vsel %vm1647, %v1649, %v1645
        %v1651 = vmul.f32 1.0, %v1650
        %v1652 = vrcp.pop %v1494
        %v1653 = vmul.f32 %v1494, %v1652
        %v1654 = vsub.f32 1.0, %v1653
        %v1655 = vmul.f32 %v1652, %v1654
        %v1656 = vadd.f32 %v1652, %v1655
        %vm1657 = vweird.f32 %v1494
        %vm1658 = vweird.f32 %v1652
        %vm1659 = vmor %vm1657, %vm1658
        %v1660 = vsel %vm1659, %v1652, %v1656
        %v1661 = vand.u32 2147483647, %v1494
        %vm1662 = vcmp.eq.f32.partialorder %v1661, 8.507059e+37
        %v1663 = vand.u32 %v1494, 2147483648
        %v1664 = vor.u32 1.1754944e-38, %v1663
        %v1665 = vsel %vm1662, %v1664, %v1660
        %v1666 = vmul.f32 1.0, %v1665
        %v1667 = vrcp.pop %v1495
        %v1668 = vmul.f32 %v1495, %v1667
        %v1669 = vsub.f32 1.0, %v1668
        %v1670 = vmul.f32 %v1667, %v1669
        %v1671 = vadd.f32 %v1667, %v1670
        %vm1672 = vweird.f32 %v1495
        %vm1673 = vweird.f32 %v1667
        %vm1674 = vmor %vm1672, %vm1673
        %v1675 = vsel %vm1674, %v1667, %v1671
        %v1676 = vand.u32 2147483647, %v1495
        %vm1677 = vcmp.eq.f32.partialorder %v1676, 8.507059e+37
        %v1678 = vand.u32 %v1495, 2147483648
        %v1679 = vor.u32 1.1754944e-38, %v1678
        %v1680 = vsel %vm1677, %v1679, %v1675
        %v1681 = vmul.f32 1.0, %v1680
        %v1682 = vrcp.pop %v1496
        %v1683 = vmul.f32 %v1496, %v1682
        %v1684 = vsub.f32 1.0, %v1683
        %v1685 = vmul.f32 %v1682, %v1684
        %v1686 = vadd.f32 %v1682, %v1685
        %vm1687 = vweird.f32 %v1496
        %vm1688 = vweird.f32 %v1682
        %vm1689 = vmor %vm1687, %vm1688
        %v1690 = vsel %vm1689, %v1682, %v1686
        %v1691 = vand.u32 2147483647, %v1496
        %vm1692 = vcmp.eq.f32.partialorder %v1691, 8.507059e+37
        %v1693 = vand.u32 %v1496, 2147483648
        %v1694 = vor.u32 1.1754944e-38, %v1693
        %v1695 = vsel %vm1692, %v1694, %v1690
        %v1696 = vmul.f32 1.0, %v1695
        %v1697 = vrcp.pop %v1497
        %v1698 = vmul.f32 %v1497, %v1697
        %v1699 = vsub.f32 1.0, %v1698
        %v1700 = vmul.f32 %v1697, %v1699
        %v1701 = vadd.f32 %v1697, %v1700
        %vm1702 = vweird.f32 %v1497
        %vm1703 = vweird.f32 %v1697
        %vm1704 = vmor %vm1702, %vm1703
        %v1705 = vsel %vm1704, %v1697, %v1701
        %v1706 = vand.u32 2147483647, %v1497
        %vm1707 = vcmp.eq.f32.partialorder %v1706, 8.507059e+37
        %v1708 = vand.u32 %v1497, 2147483648
        %v1709 = vor.u32 1.1754944e-38, %v1708
        %v1710 = vsel %vm1707, %v1709, %v1705
        %v1711 = vmul.f32 1.0, %v1710
        %v1712 = vrcp.pop %v1498
        %v1713 = vmul.f32 %v1498, %v1712
        %v1714 = vsub.f32 1.0, %v1713
        %v1715 = vmul.f32 %v1712, %v1714
        %v1716 = vadd.f32 %v1712, %v1715
        %vm1717 = vweird.f32 %v1498
        %vm1718 = vweird.f32 %v1712
        %vm1719 = vmor %vm1717, %vm1718
        %v1720 = vsel %vm1719, %v1712, %v1716
        %v1721 = vand.u32 2147483647, %v1498
        %vm1722 = vcmp.eq.f32.partialorder %v1721, 8.507059e+37
        %v1723 = vand.u32 %v1498, 2147483648
        %v1724 = vor.u32 1.1754944e-38, %v1723
        %v1725 = vsel %vm1722, %v1724, %v1720
        %v1726 = vmul.f32 1.0, %v1725
        %v1727 = vrcp.pop %v1499
        %v1728 = vmul.f32 %v1499, %v1727
        %v1729 = vsub.f32 1.0, %v1728
        %v1730 = vmul.f32 %v1727, %v1729
        %v1731 = vadd.f32 %v1727, %v1730
        %vm1732 = vweird.f32 %v1499
        %vm1733 = vweird.f32 %v1727
        %vm1734 = vmor %vm1732, %vm1733
        %v1735 = vsel %vm1734, %v1727, %v1731
        %v1736 = vand.u32 2147483647, %v1499
        %vm1737 = vcmp.eq.f32.partialorder %v1736, 8.507059e+37
        %v1738 = vand.u32 %v1499, 2147483648
        %v1739 = vor.u32 1.1754944e-38, %v1738
        %v1740 = vsel %vm1737, %v1739, %v1735
        %v1741 = vmul.f32 1.0, %v1740
        %v1742 = vrcp.pop %v1500
        %v1743 = vmul.f32 %v1500, %v1742
        %v1744 = vsub.f32 1.0, %v1743
        %v1745 = vmul.f32 %v1742, %v1744
        %v1746 = vadd.f32 %v1742, %v1745
        %vm1747 = vweird.f32 %v1500
        %vm1748 = vweird.f32 %v1742
        %vm1749 = vmor %vm1747, %vm1748
        %v1750 = vsel %vm1749, %v1742, %v1746
        %v1751 = vand.u32 2147483647, %v1500
        %vm1752 = vcmp.eq.f32.partialorder %v1751, 8.507059e+37
        %v1753 = vand.u32 %v1500, 2147483648
        %v1754 = vor.u32 1.1754944e-38, %v1753
        %v1755 = vsel %vm1752, %v1754, %v1750
        %v1756 = vmul.f32 1.0, %v1755
        %v1757 = vrcp.pop %v1501
        %v1758 = vmul.f32 %v1501, %v1757
        %v1759 = vsub.f32 1.0, %v1758
        %v1760 = vmul.f32 %v1757, %v1759
        %v1761 = vadd.f32 %v1757, %v1760
        %vm1762 = vweird.f32 %v1501
        %vm1763 = vweird.f32 %v1757
        %vm1764 = vmor %vm1762, %vm1763
        %v1765 = vsel %vm1764, %v1757, %v1761
        %v1766 = vand.u32 2147483647, %v1501
        %vm1767 = vcmp.eq.f32.partialorder %v1766, 8.507059e+37
        %v1768 = vand.u32 %v1501, 2147483648
        %v1769 = vor.u32 1.1754944e-38, %v1768
        %v1770 = vsel %vm1767, %v1769, %v1765
        %v1771 = vmul.f32 1.0, %v1770
        %v1772 = vrcp.pop %v1502
        %v1773 = vmul.f32 %v1502, %v1772
        %v1774 = vsub.f32 1.0, %v1773
        %v1775 = vmul.f32 %v1772, %v1774
        %v1776 = vadd.f32 %v1772, %v1775
        %vm1777 = vweird.f32 %v1502
        %vm1778 = vweird.f32 %v1772
        %vm1779 = vmor %vm1777, %vm1778
        %v1780 = vsel %vm1779, %v1772, %v1776
        %v1781 = vand.u32 2147483647, %v1502
        %vm1782 = vcmp.eq.f32.partialorder %v1781, 8.507059e+37
        %v1783 = vand.u32 %v1502, 2147483648
        %v1784 = vor.u32 1.1754944e-38, %v1783
        %v1785 = vsel %vm1782, %v1784, %v1780
        %v1786 = vmul.f32 1.0, %v1785
        %v1787 = vrcp.pop %v1503
        %v1788 = vmul.f32 %v1503, %v1787
        %v1789 = vsub.f32 1.0, %v1788
        %v1790 = vmul.f32 %v1787, %v1789
        %v1791 = vadd.f32 %v1787, %v1790
        %vm1792 = vweird.f32 %v1503
        %vm1793 = vweird.f32 %v1787
        %vm1794 = vmor %vm1792, %vm1793
        %v1795 = vsel %vm1794, %v1787, %v1791
        %v1796 = vand.u32 2147483647, %v1503
        %vm1797 = vcmp.eq.f32.partialorder %v1796, 8.507059e+37
        %v1798 = vand.u32 %v1503, 2147483648
        %v1799 = vor.u32 1.1754944e-38, %v1798
        %v1800 = vsel %vm1797, %v1799, %v1795
        %v1801 = vmul.f32 1.0, %v1800
        %v1802 = vrcp.pop %v1504
        %v1803 = vmul.f32 %v1504, %v1802
        %v1804 = vsub.f32 1.0, %v1803
        %v1805 = vmul.f32 %v1802, %v1804
        %v1806 = vadd.f32 %v1802, %v1805
        %vm1807 = vweird.f32 %v1504
        %vm1808 = vweird.f32 %v1802
        %vm1809 = vmor %vm1807, %vm1808
        %v1810 = vsel %vm1809, %v1802, %v1806
        %v1811 = vand.u32 2147483647, %v1504
        %vm1812 = vcmp.eq.f32.partialorder %v1811, 8.507059e+37
        %v1813 = vand.u32 %v1504, 2147483648
        %v1814 = vor.u32 1.1754944e-38, %v1813
        %v1815 = vsel %vm1812, %v1814, %v1810
        %v1816 = vmul.f32 1.0, %v1815
        %v1817 = vrcp.pop %v1505
        %v1818 = vmul.f32 %v1505, %v1817
        %v1819 = vsub.f32 1.0, %v1818
        %v1820 = vmul.f32 %v1817, %v1819
        %v1821 = vadd.f32 %v1817, %v1820
        %vm1822 = vweird.f32 %v1505
        %vm1823 = vweird.f32 %v1817
        %vm1824 = vmor %vm1822, %vm1823
        %v1825 = vsel %vm1824, %v1817, %v1821
        %v1826 = vand.u32 2147483647, %v1505
        %vm1827 = vcmp.eq.f32.partialorder %v1826, 8.507059e+37
        %v1828 = vand.u32 %v1505, 2147483648
        %v1829 = vor.u32 1.1754944e-38, %v1828
        %v1830 = vsel %vm1827, %v1829, %v1825
        %v1831 = vmul.f32 1.0, %v1830
        %v1832 = vrcp.pop %v1506
        %v1833 = vmul.f32 %v1506, %v1832
        %v1834 = vsub.f32 1.0, %v1833
        %v1835 = vmul.f32 %v1832, %v1834
        %v1836 = vadd.f32 %v1832, %v1835
        %vm1837 = vweird.f32 %v1506
        %vm1838 = vweird.f32 %v1832
        %vm1839 = vmor %vm1837, %vm1838
        %v1840 = vsel %vm1839, %v1832, %v1836
        %v1841 = vand.u32 2147483647, %v1506
        %vm1842 = vcmp.eq.f32.partialorder %v1841, 8.507059e+37
        %v1843 = vand.u32 %v1506, 2147483648
        %v1844 = vor.u32 1.1754944e-38, %v1843
        %v1845 = vsel %vm1842, %v1844, %v1840
        %v1846 = vmul.f32 1.0, %v1845
        %v1847 = vrcp.pop %v1507
        %v1848 = vmul.f32 %v1507, %v1847
        %v1849 = vsub.f32 1.0, %v1848
        %v1850 = vmul.f32 %v1847, %v1849
        %v1851 = vadd.f32 %v1847, %v1850
        %vm1852 = vweird.f32 %v1507
        %vm1853 = vweird.f32 %v1847
        %vm1854 = vmor %vm1852, %vm1853
        %v1855 = vsel %vm1854, %v1847, %v1851
        %v1856 = vand.u32 2147483647, %v1507
        %vm1857 = vcmp.eq.f32.partialorder %v1856, 8.507059e+37
        %v1858 = vand.u32 %v1507, 2147483648
        %v1859 = vor.u32 1.1754944e-38, %v1858
        %v1860 = vsel %vm1857, %v1859, %v1855
        %v1861 = vmul.f32 1.0, %v1860
        %v1862 = vrcp.pop %v1508
        %v1863 = vmul.f32 %v1508, %v1862
        %v1864 = vsub.f32 1.0, %v1863
        %v1865 = vmul.f32 %v1862, %v1864
        %v1866 = vadd.f32 %v1862, %v1865
        %vm1867 = vweird.f32 %v1508
        %vm1868 = vweird.f32 %v1862
        %vm1869 = vmor %vm1867, %vm1868
        %v1870 = vsel %vm1869, %v1862, %v1866
        %v1871 = vand.u32 2147483647, %v1508
        %vm1872 = vcmp.eq.f32.partialorder %v1871, 8.507059e+37
        %v1873 = vand.u32 %v1508, 2147483648
        %v1874 = vor.u32 1.1754944e-38, %v1873
        %v1875 = vsel %vm1872, %v1874, %v1870
        %v1876 = vmul.f32 1.0, %v1875
        %v1877 = vrcp.pop %v1509
        %v1878 = vmul.f32 %v1509, %v1877
        %v1879 = vsub.f32 1.0, %v1878
        %v1880 = vmul.f32 %v1877, %v1879
        %v1881 = vadd.f32 %v1877, %v1880
        %vm1882 = vweird.f32 %v1509
        %vm1883 = vweird.f32 %v1877
        %vm1884 = vmor %vm1882, %vm1883
        %v1885 = vsel %vm1884, %v1877, %v1881
        %v1886 = vand.u32 2147483647, %v1509
        %vm1887 = vcmp.eq.f32.partialorder %v1886, 8.507059e+37
        %v1888 = vand.u32 %v1509, 2147483648
        %v1889 = vor.u32 1.1754944e-38, %v1888
        %v1890 = vsel %vm1887, %v1889, %v1885
        %v1891 = vmul.f32 1.0, %v1890
        %v1892 = vrcp.pop %v1510
        %v1893 = vmul.f32 %v1510, %v1892
        %v1894 = vsub.f32 1.0, %v1893
        %v1895 = vmul.f32 %v1892, %v1894
        %v1896 = vadd.f32 %v1892, %v1895
        %vm1897 = vweird.f32 %v1510
        %vm1898 = vweird.f32 %v1892
        %vm1899 = vmor %vm1897, %vm1898
        %v1900 = vsel %vm1899, %v1892, %v1896
        %v1901 = vand.u32 2147483647, %v1510
        %vm1902 = vcmp.eq.f32.partialorder %v1901, 8.507059e+37
        %v1903 = vand.u32 %v1510, 2147483648
        %v1904 = vor.u32 1.1754944e-38, %v1903
        %v1905 = vsel %vm1902, %v1904, %v1900
        %v1906 = vmul.f32 1.0, %v1905
        %v1907 = vrcp.pop %v1511
        %v1908 = vmul.f32 %v1511, %v1907
        %v1909 = vsub.f32 1.0, %v1908
        %v1910 = vmul.f32 %v1907, %v1909
        %v1911 = vadd.f32 %v1907, %v1910
        %vm1912 = vweird.f32 %v1511
        %vm1913 = vweird.f32 %v1907
        %vm1914 = vmor %vm1912, %vm1913
        %v1915 = vsel %vm1914, %v1907, %v1911
        %v1916 = vand.u32 2147483647, %v1511
        %vm1917 = vcmp.eq.f32.partialorder %v1916, 8.507059e+37
        %v1918 = vand.u32 %v1511, 2147483648
        %v1919 = vor.u32 1.1754944e-38, %v1918
        %v1920 = vsel %vm1917, %v1919, %v1915
        %v1921 = vmul.f32 1.0, %v1920
        %v1922 = vrcp.pop %v1512
        %v1923 = vmul.f32 %v1512, %v1922
        %v1924 = vsub.f32 1.0, %v1923
        %v1925 = vmul.f32 %v1922, %v1924
        %v1926 = vadd.f32 %v1922, %v1925
        %vm1927 = vweird.f32 %v1512
        %vm1928 = vweird.f32 %v1922
        %vm1929 = vmor %vm1927, %vm1928
        %v1930 = vsel %vm1929, %v1922, %v1926
        %v1931 = vand.u32 2147483647, %v1512
        %vm1932 = vcmp.eq.f32.partialorder %v1931, 8.507059e+37
        %v1933 = vand.u32 %v1512, 2147483648
        %v1934 = vor.u32 1.1754944e-38, %v1933
        %v1935 = vsel %vm1932, %v1934, %v1930
        %v1936 = vmul.f32 1.0, %v1935
        %v1937 = vrcp.pop %v1513
        %v1938 = vmul.f32 %v1513, %v1937
        %v1939 = vsub.f32 1.0, %v1938
        %v1940 = vmul.f32 %v1937, %v1939
        %v1941 = vadd.f32 %v1937, %v1940
        %vm1942 = vweird.f32 %v1513
        %vm1943 = vweird.f32 %v1937
        %vm1944 = vmor %vm1942, %vm1943
        %v1945 = vsel %vm1944, %v1937, %v1941
        %v1946 = vand.u32 2147483647, %v1513
        %vm1947 = vcmp.eq.f32.partialorder %v1946, 8.507059e+37
        %v1948 = vand.u32 %v1513, 2147483648
        %v1949 = vor.u32 1.1754944e-38, %v1948
        %v1950 = vsel %vm1947, %v1949, %v1945
        %v1951 = vmul.f32 1.0, %v1950
        %v1952 = vrcp.pop %v1514
        %v1953 = vmul.f32 %v1514, %v1952
        %v1954 = vsub.f32 1.0, %v1953
        %v1955 = vmul.f32 %v1952, %v1954
        %v1956 = vadd.f32 %v1952, %v1955
        %vm1957 = vweird.f32 %v1514
        %vm1958 = vweird.f32 %v1952
        %vm1959 = vmor %vm1957, %vm1958
        %v1960 = vsel %vm1959, %v1952, %v1956
        %v1961 = vand.u32 2147483647, %v1514
        %vm1962 = vcmp.eq.f32.partialorder %v1961, 8.507059e+37
        %v1963 = vand.u32 %v1514, 2147483648
        %v1964 = vor.u32 1.1754944e-38, %v1963
        %v1965 = vsel %vm1962, %v1964, %v1960
        %v1966 = vmul.f32 1.0, %v1965
        %v1967 = vrcp.pop %v1515
        %v1968 = vmul.f32 %v1515, %v1967
        %v1969 = vsub.f32 1.0, %v1968
        %v1970 = vmul.f32 %v1967, %v1969
        %v1971 = vadd.f32 %v1967, %v1970
        %vm1972 = vweird.f32 %v1515
        %vm1973 = vweird.f32 %v1967
        %vm1974 = vmor %vm1972, %vm1973
        %v1975 = vsel %vm1974, %v1967, %v1971
        %v1976 = vand.u32 2147483647, %v1515
        %vm1977 = vcmp.eq.f32.partialorder %v1976, 8.507059e+37
        %v1978 = vand.u32 %v1515, 2147483648
        %v1979 = vor.u32 1.1754944e-38, %v1978
        %v1980 = vsel %vm1977, %v1979, %v1975
        %v1981 = vmul.f32 1.0, %v1980
        %v1982 = vrcp.pop %v1516
        %v1983 = vmul.f32 %v1516, %v1982
        %v1984 = vsub.f32 1.0, %v1983
        %v1985 = vmul.f32 %v1982, %v1984
        %v1986 = vadd.f32 %v1982, %v1985
        %vm1987 = vweird.f32 %v1516
        %vm1988 = vweird.f32 %v1982
        %vm1989 = vmor %vm1987, %vm1988
        %v1990 = vsel %vm1989, %v1982, %v1986
        %v1991 = vand.u32 2147483647, %v1516
        %vm1992 = vcmp.eq.f32.partialorder %v1991, 8.507059e+37
        %v1993 = vand.u32 %v1516, 2147483648
        %v1994 = vor.u32 1.1754944e-38, %v1993
        %v1995 = vsel %vm1992, %v1994, %v1990
        %v1996 = vmul.f32 1.0, %v1995
        %1998 = vset.pattern.permute.xlu0 0
        %1999 = vperm.xlu0 %1998, %v1531
        %v2000 = vpop.permute.xlu0 %1999
        %2003 = vset.pattern.permute.xlu0 0
        %2004 = vperm.xlu0 %2003, %v1546
        %v2005 = vpop.permute.xlu0 %2004
        %2008 = vset.pattern.permute.xlu0 0
        %2009 = vperm.xlu0 %2008, %v1561
        %v2010 = vpop.permute.xlu0 %2009
        %2013 = vset.pattern.permute.xlu0 0
        %2014 = vperm.xlu0 %2013, %v1576
        %v2015 = vpop.permute.xlu0 %2014
        %2018 = vset.pattern.permute.xlu0 0
        %2019 = vperm.xlu0 %2018, %v1591
        %v2020 = vpop.permute.xlu0 %2019
        %2023 = vset.pattern.permute.xlu0 0
        %2024 = vperm.xlu0 %2023, %v1606
        %v2025 = vpop.permute.xlu0 %2024
        %2028 = vset.pattern.permute.xlu0 0
        %2029 = vperm.xlu0 %2028, %v1621
        %v2030 = vpop.permute.xlu0 %2029
        %2033 = vset.pattern.permute.xlu0 0
        %2034 = vperm.xlu0 %2033, %v1636
        %v2035 = vpop.permute.xlu0 %2034
        %2038 = vset.pattern.permute.xlu0 0
        %2039 = vperm.xlu0 %2038, %v1651
        %v2040 = vpop.permute.xlu0 %2039
        %2043 = vset.pattern.permute.xlu0 0
        %2044 = vperm.xlu0 %2043, %v1666
        %v2045 = vpop.permute.xlu0 %2044
        %2048 = vset.pattern.permute.xlu0 0
        %2049 = vperm.xlu0 %2048, %v1681
        %v2050 = vpop.permute.xlu0 %2049
        %2053 = vset.pattern.permute.xlu0 0
        %2054 = vperm.xlu0 %2053, %v1696
        %v2055 = vpop.permute.xlu0 %2054
        %2058 = vset.pattern.permute.xlu0 0
        %2059 = vperm.xlu0 %2058, %v1711
        %v2060 = vpop.permute.xlu0 %2059
        %2063 = vset.pattern.permute.xlu0 0
        %2064 = vperm.xlu0 %2063, %v1726
        %v2065 = vpop.permute.xlu0 %2064
        %2068 = vset.pattern.permute.xlu0 0
        %2069 = vperm.xlu0 %2068, %v1741
        %v2070 = vpop.permute.xlu0 %2069
        %2073 = vset.pattern.permute.xlu0 0
        %2074 = vperm.xlu0 %2073, %v1756
        %v2075 = vpop.permute.xlu0 %2074
        %2078 = vset.pattern.permute.xlu0 0
        %2079 = vperm.xlu0 %2078, %v1771
        %v2080 = vpop.permute.xlu0 %2079
        %2083 = vset.pattern.permute.xlu0 0
        %2084 = vperm.xlu0 %2083, %v1786
        %v2085 = vpop.permute.xlu0 %2084
        %2088 = vset.pattern.permute.xlu0 0
        %2089 = vperm.xlu0 %2088, %v1801
        %v2090 = vpop.permute.xlu0 %2089
        %2093 = vset.pattern.permute.xlu0 0
        %2094 = vperm.xlu0 %2093, %v1816
        %v2095 = vpop.permute.xlu0 %2094
        %2098 = vset.pattern.permute.xlu0 0
        %2099 = vperm.xlu0 %2098, %v1831
        %v2100 = vpop.permute.xlu0 %2099
        %2103 = vset.pattern.permute.xlu0 0
        %2104 = vperm.xlu0 %2103, %v1846
        %v2105 = vpop.permute.xlu0 %2104
        %2108 = vset.pattern.permute.xlu0 0
        %2109 = vperm.xlu0 %2108, %v1861
        %v2110 = vpop.permute.xlu0 %2109
        %2113 = vset.pattern.permute.xlu0 0
        %2114 = vperm.xlu0 %2113, %v1876
        %v2115 = vpop.permute.xlu0 %2114
        %2118 = vset.pattern.permute.xlu0 0
        %2119 = vperm.xlu0 %2118, %v1891
        %v2120 = vpop.permute.xlu0 %2119
        %2123 = vset.pattern.permute.xlu0 0
        %2124 = vperm.xlu0 %2123, %v1906
        %v2125 = vpop.permute.xlu0 %2124
        %2128 = vset.pattern.permute.xlu0 0
        %2129 = vperm.xlu0 %2128, %v1921
        %v2130 = vpop.permute.xlu0 %2129
        %2133 = vset.pattern.permute.xlu0 0
        %2134 = vperm.xlu0 %2133, %v1936
        %v2135 = vpop.permute.xlu0 %2134
        %2138 = vset.pattern.permute.xlu0 0
        %2139 = vperm.xlu0 %2138, %v1951
        %v2140 = vpop.permute.xlu0 %2139
        %2143 = vset.pattern.permute.xlu0 0
        %2144 = vperm.xlu0 %2143, %v1966
        %v2145 = vpop.permute.xlu0 %2144
        %2148 = vset.pattern.permute.xlu0 0
        %2149 = vperm.xlu0 %2148, %v1981
        %v2150 = vpop.permute.xlu0 %2149
        %2153 = vset.pattern.permute.xlu0 0
        %2154 = vperm.xlu0 %2153, %v1996
        %v2155 = vpop.permute.xlu0 %2154
        %v2157 = vmul.f32 %v586, %v2000
        %v2158 = vmul.f32 %v589, %v2005
        %v2159 = vmul.f32 %v592, %v2010
        %v2160 = vmul.f32 %v595, %v2015
        %v2161 = vmul.f32 %v598, %v2020
        %v2162 = vmul.f32 %v601, %v2025
        %v2163 = vmul.f32 %v604, %v2030
        %v2164 = vmul.f32 %v607, %v2035
        %v2165 = vmul.f32 %v610, %v2040
        %v2166 = vmul.f32 %v613, %v2045
        %v2167 = vmul.f32 %v616, %v2050
        %v2168 = vmul.f32 %v619, %v2055
        %v2169 = vmul.f32 %v622, %v2060
        %v2170 = vmul.f32 %v625, %v2065
        %v2171 = vmul.f32 %v628, %v2070
        %v2172 = vmul.f32 %v631, %v2075
        %v2173 = vmul.f32 %v634, %v2080
        %v2174 = vmul.f32 %v637, %v2085
        %v2175 = vmul.f32 %v640, %v2090
        %v2176 = vmul.f32 %v643, %v2095
        %v2177 = vmul.f32 %v646, %v2100
        %v2178 = vmul.f32 %v649, %v2105
        %v2179 = vmul.f32 %v652, %v2110
        %v2180 = vmul.f32 %v655, %v2115
        %v2181 = vmul.f32 %v658, %v2120
        %v2182 = vmul.f32 %v661, %v2125
        %v2183 = vmul.f32 %v664, %v2130
        %v2184 = vmul.f32 %v667, %v2135
        %v2185 = vmul.f32 %v670, %v2140
        %v2186 = vmul.f32 %v673, %v2145
        %v2187 = vmul.f32 %v676, %v2150
        %v2188 = vmul.f32 %v679, %v2155
        %v2189 = vxor.u32 %v1357, 2147483648
        %v2190 = vxor.u32 %v1358, 2147483648
        %v2191 = vxor.u32 %v1359, 2147483648
        %v2192 = vxor.u32 %v1360, 2147483648
        %v2193 = vxor.u32 %v1361, 2147483648
        %v2194 = vxor.u32 %v1362, 2147483648
        %v2195 = vxor.u32 %v1363, 2147483648
        %v2196 = vxor.u32 %v1364, 2147483648
        %v2197 = vxor.u32 %v1365, 2147483648
        %v2198 = vxor.u32 %v1366, 2147483648
        %v2199 = vxor.u32 %v1367, 2147483648
        %v2200 = vxor.u32 %v1368, 2147483648
        %v2201 = vxor.u32 %v1369, 2147483648
        %v2202 = vxor.u32 %v1370, 2147483648
        %v2203 = vxor.u32 %v1371, 2147483648
        %v2204 = vxor.u32 %v1372, 2147483648
        %v2205 = vxor.u32 %v1373, 2147483648
        %v2206 = vxor.u32 %v1374, 2147483648
        %v2207 = vxor.u32 %v1375, 2147483648
        %v2208 = vxor.u32 %v1376, 2147483648
        %v2209 = vxor.u32 %v1377, 2147483648
        %v2210 = vxor.u32 %v1378, 2147483648
        %v2211 = vxor.u32 %v1379, 2147483648
        %v2212 = vxor.u32 %v1380, 2147483648
        %v2213 = vxor.u32 %v1381, 2147483648
        %v2214 = vxor.u32 %v1382, 2147483648
        %v2215 = vxor.u32 %v1383, 2147483648
        %v2216 = vxor.u32 %v1384, 2147483648
        %v2217 = vxor.u32 %v1385, 2147483648
        %v2218 = vxor.u32 %v1386, 2147483648
        %v2219 = vxor.u32 %v1387, 2147483648
        %v2220 = vxor.u32 %v1388, 2147483648
        %v2221 = vmul.f32 %v2189, 1.442695
        %v2222 = vpow.pop %v2221
        %v2223 = vmul.f32 %v2190, 1.442695
        %v2224 = vpow.pop %v2223
        %v2225 = vmul.f32 %v2191, 1.442695
        %v2226 = vpow.pop %v2225
        %v2227 = vmul.f32 %v2192, 1.442695
        %v2228 = vpow.pop %v2227
        %v2229 = vmul.f32 %v2193, 1.442695
        %v2230 = vpow.pop %v2229
        %v2231 = vmul.f32 %v2194, 1.442695
        %v2232 = vpow.pop %v2231
        %v2233 = vmul.f32 %v2195, 1.442695
        %v2234 = vpow.pop %v2233
        %v2235 = vmul.f32 %v2196, 1.442695
        %v2236 = vpow.pop %v2235
        %v2237 = vmul.f32 %v2197, 1.442695
        %v2238 = vpow.pop %v2237
        %v2239 = vmul.f32 %v2198, 1.442695
        %v2240 = vpow.pop %v2239
        %v2241 = vmul.f32 %v2199, 1.442695
        %v2242 = vpow.pop %v2241
        %v2243 = vmul.f32 %v2200, 1.442695
        %v2244 = vpow.pop %v2243
        %v2245 = vmul.f32 %v2201, 1.442695
        %v2246 = vpow.pop %v2245
        %v2247 = vmul.f32 %v2202, 1.442695
        %v2248 = vpow.pop %v2247
        %v2249 = vmul.f32 %v2203, 1.442695
        %v2250 = vpow.pop %v2249
        %v2251 = vmul.f32 %v2204, 1.442695
        %v2252 = vpow.pop %v2251
        %v2253 = vmul.f32 %v2205, 1.442695
        %v2254 = vpow.pop %v2253
        %v2255 = vmul.f32 %v2206, 1.442695
        %v2256 = vpow.pop %v2255
        %v2257 = vmul.f32 %v2207, 1.442695
        %v2258 = vpow.pop %v2257
        %v2259 = vmul.f32 %v2208, 1.442695
        %v2260 = vpow.pop %v2259
        %v2261 = vmul.f32 %v2209, 1.442695
        %v2262 = vpow.pop %v2261
        %v2263 = vmul.f32 %v2210, 1.442695
        %v2264 = vpow.pop %v2263
        %v2265 = vmul.f32 %v2211, 1.442695
        %v2266 = vpow.pop %v2265
        %v2267 = vmul.f32 %v2212, 1.442695
        %v2268 = vpow.pop %v2267
        %v2269 = vmul.f32 %v2213, 1.442695
        %v2270 = vpow.pop %v2269
        %v2271 = vmul.f32 %v2214, 1.442695
        %v2272 = vpow.pop %v2271
        %v2273 = vmul.f32 %v2215, 1.442695
        %v2274 = vpow.pop %v2273
        %v2275 = vmul.f32 %v2216, 1.442695
        %v2276 = vpow.pop %v2275
        %v2277 = vmul.f32 %v2217, 1.442695
        %v2278 = vpow.pop %v2277
        %v2279 = vmul.f32 %v2218, 1.442695
        %v2280 = vpow.pop %v2279
        %v2281 = vmul.f32 %v2219, 1.442695
        %v2282 = vpow.pop %v2281
        %v2283 = vmul.f32 %v2220, 1.442695
        %v2284 = vpow.pop %v2283
        %v2285 = vadd.f32 %v2222, 1.0
        %v2286 = vadd.f32 %v2224, 1.0
        %v2287 = vadd.f32 %v2226, 1.0
        %v2288 = vadd.f32 %v2228, 1.0
        %v2289 = vadd.f32 %v2230, 1.0
        %v2290 = vadd.f32 %v2232, 1.0
        %v2291 = vadd.f32 %v2234, 1.0
        %v2292 = vadd.f32 %v2236, 1.0
        %v2293 = vadd.f32 %v2238, 1.0
        %v2294 = vadd.f32 %v2240, 1.0
        %v2295 = vadd.f32 %v2242, 1.0
        %v2296 = vadd.f32 %v2244, 1.0
        %v2297 = vadd.f32 %v2246, 1.0
        %v2298 = vadd.f32 %v2248, 1.0
        %v2299 = vadd.f32 %v2250, 1.0
        %v2300 = vadd.f32 %v2252, 1.0
        %v2301 = vadd.f32 %v2254, 1.0
        %v2302 = vadd.f32 %v2256, 1.0
        %v2303 = vadd.f32 %v2258, 1.0
        %v2304 = vadd.f32 %v2260, 1.0
        %v2305 = vadd.f32 %v2262, 1.0
        %v2306 = vadd.f32 %v2264, 1.0
        %v2307 = vadd.f32 %v2266, 1.0
        %v2308 = vadd.f32 %v2268, 1.0
        %v2309 = vadd.f32 %v2270, 1.0
        %v2310 = vadd.f32 %v2272, 1.0
        %v2311 = vadd.f32 %v2274, 1.0
        %v2312 = vadd.f32 %v2276, 1.0
        %v2313 = vadd.f32 %v2278, 1.0
        %v2314 = vadd.f32 %v2280, 1.0
        %v2315 = vadd.f32 %v2282, 1.0
        %v2316 = vadd.f32 %v2284, 1.0
        %v2317 = vrcp.pop %v2285
        %v2318 = vmul.f32 %v2285, %v2317
        %v2319 = vsub.f32 1.0, %v2318
        %v2320 = vmul.f32 %v2317, %v2319
        %v2321 = vadd.f32 %v2317, %v2320
        %vm2322 = vweird.f32 %v2285
        %vm2323 = vweird.f32 %v2317
        %vm2324 = vmor %vm2322, %vm2323
        %v2325 = vsel %vm2324, %v2317, %v2321
        %v2326 = vand.u32 2147483647, %v2285
        %vm2327 = vcmp.eq.f32.partialorder %v2326, 8.507059e+37
        %v2328 = vand.u32 %v2285, 2147483648
        %v2329 = vor.u32 1.1754944e-38, %v2328
        %v2330 = vsel %vm2327, %v2329, %v2325
        %v2331 = vmul.f32 1.0, %v2330
        %v2332 = vrcp.pop %v2286
        %v2333 = vmul.f32 %v2286, %v2332
        %v2334 = vsub.f32 1.0, %v2333
        %v2335 = vmul.f32 %v2332, %v2334
        %v2336 = vadd.f32 %v2332, %v2335
        %vm2337 = vweird.f32 %v2286
        %vm2338 = vweird.f32 %v2332
        %vm2339 = vmor %vm2337, %vm2338
        %v2340 = vsel %vm2339, %v2332, %v2336
        %v2341 = vand.u32 2147483647, %v2286
        %vm2342 = vcmp.eq.f32.partialorder %v2341, 8.507059e+37
        %v2343 = vand.u32 %v2286, 2147483648
        %v2344 = vor.u32 1.1754944e-38, %v2343
        %v2345 = vsel %vm2342, %v2344, %v2340
        %v2346 = vmul.f32 1.0, %v2345
        %v2347 = vrcp.pop %v2287
        %v2348 = vmul.f32 %v2287, %v2347
        %v2349 = vsub.f32 1.0, %v2348
        %v2350 = vmul.f32 %v2347, %v2349
        %v2351 = vadd.f32 %v2347, %v2350
        %vm2352 = vweird.f32 %v2287
        %vm2353 = vweird.f32 %v2347
        %vm2354 = vmor %vm2352, %vm2353
        %v2355 = vsel %vm2354, %v2347, %v2351
        %v2356 = vand.u32 2147483647, %v2287
        %vm2357 = vcmp.eq.f32.partialorder %v2356, 8.507059e+37
        %v2358 = vand.u32 %v2287, 2147483648
        %v2359 = vor.u32 1.1754944e-38, %v2358
        %v2360 = vsel %vm2357, %v2359, %v2355
        %v2361 = vmul.f32 1.0, %v2360
        %v2362 = vrcp.pop %v2288
        %v2363 = vmul.f32 %v2288, %v2362
        %v2364 = vsub.f32 1.0, %v2363
        %v2365 = vmul.f32 %v2362, %v2364
        %v2366 = vadd.f32 %v2362, %v2365
        %vm2367 = vweird.f32 %v2288
        %vm2368 = vweird.f32 %v2362
        %vm2369 = vmor %vm2367, %vm2368
        %v2370 = vsel %vm2369, %v2362, %v2366
        %v2371 = vand.u32 2147483647, %v2288
        %vm2372 = vcmp.eq.f32.partialorder %v2371, 8.507059e+37
        %v2373 = vand.u32 %v2288, 2147483648
        %v2374 = vor.u32 1.1754944e-38, %v2373
        %v2375 = vsel %vm2372, %v2374, %v2370
        %v2376 = vmul.f32 1.0, %v2375
        %v2377 = vrcp.pop %v2289
        %v2378 = vmul.f32 %v2289, %v2377
        %v2379 = vsub.f32 1.0, %v2378
        %v2380 = vmul.f32 %v2377, %v2379
        %v2381 = vadd.f32 %v2377, %v2380
        %vm2382 = vweird.f32 %v2289
        %vm2383 = vweird.f32 %v2377
        %vm2384 = vmor %vm2382, %vm2383
        %v2385 = vsel %vm2384, %v2377, %v2381
        %v2386 = vand.u32 2147483647, %v2289
        %vm2387 = vcmp.eq.f32.partialorder %v2386, 8.507059e+37
        %v2388 = vand.u32 %v2289, 2147483648
        %v2389 = vor.u32 1.1754944e-38, %v2388
        %v2390 = vsel %vm2387, %v2389, %v2385
        %v2391 = vmul.f32 1.0, %v2390
        %v2392 = vrcp.pop %v2290
        %v2393 = vmul.f32 %v2290, %v2392
        %v2394 = vsub.f32 1.0, %v2393
        %v2395 = vmul.f32 %v2392, %v2394
        %v2396 = vadd.f32 %v2392, %v2395
        %vm2397 = vweird.f32 %v2290
        %vm2398 = vweird.f32 %v2392
        %vm2399 = vmor %vm2397, %vm2398
        %v2400 = vsel %vm2399, %v2392, %v2396
        %v2401 = vand.u32 2147483647, %v2290
        %vm2402 = vcmp.eq.f32.partialorder %v2401, 8.507059e+37
        %v2403 = vand.u32 %v2290, 2147483648
        %v2404 = vor.u32 1.1754944e-38, %v2403
        %v2405 = vsel %vm2402, %v2404, %v2400
        %v2406 = vmul.f32 1.0, %v2405
        %v2407 = vrcp.pop %v2291
        %v2408 = vmul.f32 %v2291, %v2407
        %v2409 = vsub.f32 1.0, %v2408
        %v2410 = vmul.f32 %v2407, %v2409
        %v2411 = vadd.f32 %v2407, %v2410
        %vm2412 = vweird.f32 %v2291
        %vm2413 = vweird.f32 %v2407
        %vm2414 = vmor %vm2412, %vm2413
        %v2415 = vsel %vm2414, %v2407, %v2411
        %v2416 = vand.u32 2147483647, %v2291
        %vm2417 = vcmp.eq.f32.partialorder %v2416, 8.507059e+37
        %v2418 = vand.u32 %v2291, 2147483648
        %v2419 = vor.u32 1.1754944e-38, %v2418
        %v2420 = vsel %vm2417, %v2419, %v2415
        %v2421 = vmul.f32 1.0, %v2420
        %v2422 = vrcp.pop %v2292
        %v2423 = vmul.f32 %v2292, %v2422
        %v2424 = vsub.f32 1.0, %v2423
        %v2425 = vmul.f32 %v2422, %v2424
        %v2426 = vadd.f32 %v2422, %v2425
        %vm2427 = vweird.f32 %v2292
        %vm2428 = vweird.f32 %v2422
        %vm2429 = vmor %vm2427, %vm2428
        %v2430 = vsel %vm2429, %v2422, %v2426
        %v2431 = vand.u32 2147483647, %v2292
        %vm2432 = vcmp.eq.f32.partialorder %v2431, 8.507059e+37
        %v2433 = vand.u32 %v2292, 2147483648
        %v2434 = vor.u32 1.1754944e-38, %v2433
        %v2435 = vsel %vm2432, %v2434, %v2430
        %v2436 = vmul.f32 1.0, %v2435
        %v2437 = vrcp.pop %v2293
        %v2438 = vmul.f32 %v2293, %v2437
        %v2439 = vsub.f32 1.0, %v2438
        %v2440 = vmul.f32 %v2437, %v2439
        %v2441 = vadd.f32 %v2437, %v2440
        %vm2442 = vweird.f32 %v2293
        %vm2443 = vweird.f32 %v2437
        %vm2444 = vmor %vm2442, %vm2443
        %v2445 = vsel %vm2444, %v2437, %v2441
        %v2446 = vand.u32 2147483647, %v2293
        %vm2447 = vcmp.eq.f32.partialorder %v2446, 8.507059e+37
        %v2448 = vand.u32 %v2293, 2147483648
        %v2449 = vor.u32 1.1754944e-38, %v2448
        %v2450 = vsel %vm2447, %v2449, %v2445
        %v2451 = vmul.f32 1.0, %v2450
        %v2452 = vrcp.pop %v2294
        %v2453 = vmul.f32 %v2294, %v2452
        %v2454 = vsub.f32 1.0, %v2453
        %v2455 = vmul.f32 %v2452, %v2454
        %v2456 = vadd.f32 %v2452, %v2455
        %vm2457 = vweird.f32 %v2294
        %vm2458 = vweird.f32 %v2452
        %vm2459 = vmor %vm2457, %vm2458
        %v2460 = vsel %vm2459, %v2452, %v2456
        %v2461 = vand.u32 2147483647, %v2294
        %vm2462 = vcmp.eq.f32.partialorder %v2461, 8.507059e+37
        %v2463 = vand.u32 %v2294, 2147483648
        %v2464 = vor.u32 1.1754944e-38, %v2463
        %v2465 = vsel %vm2462, %v2464, %v2460
        %v2466 = vmul.f32 1.0, %v2465
        %v2467 = vrcp.pop %v2295
        %v2468 = vmul.f32 %v2295, %v2467
        %v2469 = vsub.f32 1.0, %v2468
        %v2470 = vmul.f32 %v2467, %v2469
        %v2471 = vadd.f32 %v2467, %v2470
        %vm2472 = vweird.f32 %v2295
        %vm2473 = vweird.f32 %v2467
        %vm2474 = vmor %vm2472, %vm2473
        %v2475 = vsel %vm2474, %v2467, %v2471
        %v2476 = vand.u32 2147483647, %v2295
        %vm2477 = vcmp.eq.f32.partialorder %v2476, 8.507059e+37
        %v2478 = vand.u32 %v2295, 2147483648
        %v2479 = vor.u32 1.1754944e-38, %v2478
        %v2480 = vsel %vm2477, %v2479, %v2475
        %v2481 = vmul.f32 1.0, %v2480
        %v2482 = vrcp.pop %v2296
        %v2483 = vmul.f32 %v2296, %v2482
        %v2484 = vsub.f32 1.0, %v2483
        %v2485 = vmul.f32 %v2482, %v2484
        %v2486 = vadd.f32 %v2482, %v2485
        %vm2487 = vweird.f32 %v2296
        %vm2488 = vweird.f32 %v2482
        %vm2489 = vmor %vm2487, %vm2488
        %v2490 = vsel %vm2489, %v2482, %v2486
        %v2491 = vand.u32 2147483647, %v2296
        %vm2492 = vcmp.eq.f32.partialorder %v2491, 8.507059e+37
        %v2493 = vand.u32 %v2296, 2147483648
        %v2494 = vor.u32 1.1754944e-38, %v2493
        %v2495 = vsel %vm2492, %v2494, %v2490
        %v2496 = vmul.f32 1.0, %v2495
        %v2497 = vrcp.pop %v2297
        %v2498 = vmul.f32 %v2297, %v2497
        %v2499 = vsub.f32 1.0, %v2498
        %v2500 = vmul.f32 %v2497, %v2499
        %v2501 = vadd.f32 %v2497, %v2500
        %vm2502 = vweird.f32 %v2297
        %vm2503 = vweird.f32 %v2497
        %vm2504 = vmor %vm2502, %vm2503
        %v2505 = vsel %vm2504, %v2497, %v2501
        %v2506 = vand.u32 2147483647, %v2297
        %vm2507 = vcmp.eq.f32.partialorder %v2506, 8.507059e+37
        %v2508 = vand.u32 %v2297, 2147483648
        %v2509 = vor.u32 1.1754944e-38, %v2508
        %v2510 = vsel %vm2507, %v2509, %v2505
        %v2511 = vmul.f32 1.0, %v2510
        %v2512 = vrcp.pop %v2298
        %v2513 = vmul.f32 %v2298, %v2512
        %v2514 = vsub.f32 1.0, %v2513
        %v2515 = vmul.f32 %v2512, %v2514
        %v2516 = vadd.f32 %v2512, %v2515
        %vm2517 = vweird.f32 %v2298
        %vm2518 = vweird.f32 %v2512
        %vm2519 = vmor %vm2517, %vm2518
        %v2520 = vsel %vm2519, %v2512, %v2516
        %v2521 = vand.u32 2147483647, %v2298
        %vm2522 = vcmp.eq.f32.partialorder %v2521, 8.507059e+37
        %v2523 = vand.u32 %v2298, 2147483648
        %v2524 = vor.u32 1.1754944e-38, %v2523
        %v2525 = vsel %vm2522, %v2524, %v2520
        %v2526 = vmul.f32 1.0, %v2525
        %v2527 = vrcp.pop %v2299
        %v2528 = vmul.f32 %v2299, %v2527
        %v2529 = vsub.f32 1.0, %v2528
        %v2530 = vmul.f32 %v2527, %v2529
        %v2531 = vadd.f32 %v2527, %v2530
        %vm2532 = vweird.f32 %v2299
        %vm2533 = vweird.f32 %v2527
        %vm2534 = vmor %vm2532, %vm2533
        %v2535 = vsel %vm2534, %v2527, %v2531
        %v2536 = vand.u32 2147483647, %v2299
        %vm2537 = vcmp.eq.f32.partialorder %v2536, 8.507059e+37
        %v2538 = vand.u32 %v2299, 2147483648
        %v2539 = vor.u32 1.1754944e-38, %v2538
        %v2540 = vsel %vm2537, %v2539, %v2535
        %v2541 = vmul.f32 1.0, %v2540
        %v2542 = vrcp.pop %v2300
        %v2543 = vmul.f32 %v2300, %v2542
        %v2544 = vsub.f32 1.0, %v2543
        %v2545 = vmul.f32 %v2542, %v2544
        %v2546 = vadd.f32 %v2542, %v2545
        %vm2547 = vweird.f32 %v2300
        %vm2548 = vweird.f32 %v2542
        %vm2549 = vmor %vm2547, %vm2548
        %v2550 = vsel %vm2549, %v2542, %v2546
        %v2551 = vand.u32 2147483647, %v2300
        %vm2552 = vcmp.eq.f32.partialorder %v2551, 8.507059e+37
        %v2553 = vand.u32 %v2300, 2147483648
        %v2554 = vor.u32 1.1754944e-38, %v2553
        %v2555 = vsel %vm2552, %v2554, %v2550
        %v2556 = vmul.f32 1.0, %v2555
        %v2557 = vrcp.pop %v2301
        %v2558 = vmul.f32 %v2301, %v2557
        %v2559 = vsub.f32 1.0, %v2558
        %v2560 = vmul.f32 %v2557, %v2559
        %v2561 = vadd.f32 %v2557, %v2560
        %vm2562 = vweird.f32 %v2301
        %vm2563 = vweird.f32 %v2557
        %vm2564 = vmor %vm2562, %vm2563
        %v2565 = vsel %vm2564, %v2557, %v2561
        %v2566 = vand.u32 2147483647, %v2301
        %vm2567 = vcmp.eq.f32.partialorder %v2566, 8.507059e+37
        %v2568 = vand.u32 %v2301, 2147483648
        %v2569 = vor.u32 1.1754944e-38, %v2568
        %v2570 = vsel %vm2567, %v2569, %v2565
        %v2571 = vmul.f32 1.0, %v2570
        %v2572 = vrcp.pop %v2302
        %v2573 = vmul.f32 %v2302, %v2572
        %v2574 = vsub.f32 1.0, %v2573
        %v2575 = vmul.f32 %v2572, %v2574
        %v2576 = vadd.f32 %v2572, %v2575
        %vm2577 = vweird.f32 %v2302
        %vm2578 = vweird.f32 %v2572
        %vm2579 = vmor %vm2577, %vm2578
        %v2580 = vsel %vm2579, %v2572, %v2576
        %v2581 = vand.u32 2147483647, %v2302
        %vm2582 = vcmp.eq.f32.partialorder %v2581, 8.507059e+37
        %v2583 = vand.u32 %v2302, 2147483648
        %v2584 = vor.u32 1.1754944e-38, %v2583
        %v2585 = vsel %vm2582, %v2584, %v2580
        %v2586 = vmul.f32 1.0, %v2585
        %v2587 = vrcp.pop %v2303
        %v2588 = vmul.f32 %v2303, %v2587
        %v2589 = vsub.f32 1.0, %v2588
        %v2590 = vmul.f32 %v2587, %v2589
        %v2591 = vadd.f32 %v2587, %v2590
        %vm2592 = vweird.f32 %v2303
        %vm2593 = vweird.f32 %v2587
        %vm2594 = vmor %vm2592, %vm2593
        %v2595 = vsel %vm2594, %v2587, %v2591
        %v2596 = vand.u32 2147483647, %v2303
        %vm2597 = vcmp.eq.f32.partialorder %v2596, 8.507059e+37
        %v2598 = vand.u32 %v2303, 2147483648
        %v2599 = vor.u32 1.1754944e-38, %v2598
        %v2600 = vsel %vm2597, %v2599, %v2595
        %v2601 = vmul.f32 1.0, %v2600
        %v2602 = vrcp.pop %v2304
        %v2603 = vmul.f32 %v2304, %v2602
        %v2604 = vsub.f32 1.0, %v2603
        %v2605 = vmul.f32 %v2602, %v2604
        %v2606 = vadd.f32 %v2602, %v2605
        %vm2607 = vweird.f32 %v2304
        %vm2608 = vweird.f32 %v2602
        %vm2609 = vmor %vm2607, %vm2608
        %v2610 = vsel %vm2609, %v2602, %v2606
        %v2611 = vand.u32 2147483647, %v2304
        %vm2612 = vcmp.eq.f32.partialorder %v2611, 8.507059e+37
        %v2613 = vand.u32 %v2304, 2147483648
        %v2614 = vor.u32 1.1754944e-38, %v2613
        %v2615 = vsel %vm2612, %v2614, %v2610
        %v2616 = vmul.f32 1.0, %v2615
        %v2617 = vrcp.pop %v2305
        %v2618 = vmul.f32 %v2305, %v2617
        %v2619 = vsub.f32 1.0, %v2618
        %v2620 = vmul.f32 %v2617, %v2619
        %v2621 = vadd.f32 %v2617, %v2620
        %vm2622 = vweird.f32 %v2305
        %vm2623 = vweird.f32 %v2617
        %vm2624 = vmor %vm2622, %vm2623
        %v2625 = vsel %vm2624, %v2617, %v2621
        %v2626 = vand.u32 2147483647, %v2305
        %vm2627 = vcmp.eq.f32.partialorder %v2626, 8.507059e+37
        %v2628 = vand.u32 %v2305, 2147483648
        %v2629 = vor.u32 1.1754944e-38, %v2628
        %v2630 = vsel %vm2627, %v2629, %v2625
        %v2631 = vmul.f32 1.0, %v2630
        %v2632 = vrcp.pop %v2306
        %v2633 = vmul.f32 %v2306, %v2632
        %v2634 = vsub.f32 1.0, %v2633
        %v2635 = vmul.f32 %v2632, %v2634
        %v2636 = vadd.f32 %v2632, %v2635
        %vm2637 = vweird.f32 %v2306
        %vm2638 = vweird.f32 %v2632
        %vm2639 = vmor %vm2637, %vm2638
        %v2640 = vsel %vm2639, %v2632, %v2636
        %v2641 = vand.u32 2147483647, %v2306
        %vm2642 = vcmp.eq.f32.partialorder %v2641, 8.507059e+37
        %v2643 = vand.u32 %v2306, 2147483648
        %v2644 = vor.u32 1.1754944e-38, %v2643
        %v2645 = vsel %vm2642, %v2644, %v2640
        %v2646 = vmul.f32 1.0, %v2645
        %v2647 = vrcp.pop %v2307
        %v2648 = vmul.f32 %v2307, %v2647
        %v2649 = vsub.f32 1.0, %v2648
        %v2650 = vmul.f32 %v2647, %v2649
        %v2651 = vadd.f32 %v2647, %v2650
        %vm2652 = vweird.f32 %v2307
        %vm2653 = vweird.f32 %v2647
        %vm2654 = vmor %vm2652, %vm2653
        %v2655 = vsel %vm2654, %v2647, %v2651
        %v2656 = vand.u32 2147483647, %v2307
        %vm2657 = vcmp.eq.f32.partialorder %v2656, 8.507059e+37
        %v2658 = vand.u32 %v2307, 2147483648
        %v2659 = vor.u32 1.1754944e-38, %v2658
        %v2660 = vsel %vm2657, %v2659, %v2655
        %v2661 = vmul.f32 1.0, %v2660
        %v2662 = vrcp.pop %v2308
        %v2663 = vmul.f32 %v2308, %v2662
        %v2664 = vsub.f32 1.0, %v2663
        %v2665 = vmul.f32 %v2662, %v2664
        %v2666 = vadd.f32 %v2662, %v2665
        %vm2667 = vweird.f32 %v2308
        %vm2668 = vweird.f32 %v2662
        %vm2669 = vmor %vm2667, %vm2668
        %v2670 = vsel %vm2669, %v2662, %v2666
        %v2671 = vand.u32 2147483647, %v2308
        %vm2672 = vcmp.eq.f32.partialorder %v2671, 8.507059e+37
        %v2673 = vand.u32 %v2308, 2147483648
        %v2674 = vor.u32 1.1754944e-38, %v2673
        %v2675 = vsel %vm2672, %v2674, %v2670
        %v2676 = vmul.f32 1.0, %v2675
        %v2677 = vrcp.pop %v2309
        %v2678 = vmul.f32 %v2309, %v2677
        %v2679 = vsub.f32 1.0, %v2678
        %v2680 = vmul.f32 %v2677, %v2679
        %v2681 = vadd.f32 %v2677, %v2680
        %vm2682 = vweird.f32 %v2309
        %vm2683 = vweird.f32 %v2677
        %vm2684 = vmor %vm2682, %vm2683
        %v2685 = vsel %vm2684, %v2677, %v2681
        %v2686 = vand.u32 2147483647, %v2309
        %vm2687 = vcmp.eq.f32.partialorder %v2686, 8.507059e+37
        %v2688 = vand.u32 %v2309, 2147483648
        %v2689 = vor.u32 1.1754944e-38, %v2688
        %v2690 = vsel %vm2687, %v2689, %v2685
        %v2691 = vmul.f32 1.0, %v2690
        %v2692 = vrcp.pop %v2310
        %v2693 = vmul.f32 %v2310, %v2692
        %v2694 = vsub.f32 1.0, %v2693
        %v2695 = vmul.f32 %v2692, %v2694
        %v2696 = vadd.f32 %v2692, %v2695
        %vm2697 = vweird.f32 %v2310
        %vm2698 = vweird.f32 %v2692
        %vm2699 = vmor %vm2697, %vm2698
        %v2700 = vsel %vm2699, %v2692, %v2696
        %v2701 = vand.u32 2147483647, %v2310
        %vm2702 = vcmp.eq.f32.partialorder %v2701, 8.507059e+37
        %v2703 = vand.u32 %v2310, 2147483648
        %v2704 = vor.u32 1.1754944e-38, %v2703
        %v2705 = vsel %vm2702, %v2704, %v2700
        %v2706 = vmul.f32 1.0, %v2705
        %v2707 = vrcp.pop %v2311
        %v2708 = vmul.f32 %v2311, %v2707
        %v2709 = vsub.f32 1.0, %v2708
        %v2710 = vmul.f32 %v2707, %v2709
        %v2711 = vadd.f32 %v2707, %v2710
        %vm2712 = vweird.f32 %v2311
        %vm2713 = vweird.f32 %v2707
        %vm2714 = vmor %vm2712, %vm2713
        %v2715 = vsel %vm2714, %v2707, %v2711
        %v2716 = vand.u32 2147483647, %v2311
        %vm2717 = vcmp.eq.f32.partialorder %v2716, 8.507059e+37
        %v2718 = vand.u32 %v2311, 2147483648
        %v2719 = vor.u32 1.1754944e-38, %v2718
        %v2720 = vsel %vm2717, %v2719, %v2715
        %v2721 = vmul.f32 1.0, %v2720
        %v2722 = vrcp.pop %v2312
        %v2723 = vmul.f32 %v2312, %v2722
        %v2724 = vsub.f32 1.0, %v2723
        %v2725 = vmul.f32 %v2722, %v2724
        %v2726 = vadd.f32 %v2722, %v2725
        %vm2727 = vweird.f32 %v2312
        %vm2728 = vweird.f32 %v2722
        %vm2729 = vmor %vm2727, %vm2728
        %v2730 = vsel %vm2729, %v2722, %v2726
        %v2731 = vand.u32 2147483647, %v2312
        %vm2732 = vcmp.eq.f32.partialorder %v2731, 8.507059e+37
        %v2733 = vand.u32 %v2312, 2147483648
        %v2734 = vor.u32 1.1754944e-38, %v2733
        %v2735 = vsel %vm2732, %v2734, %v2730
        %v2736 = vmul.f32 1.0, %v2735
        %v2737 = vrcp.pop %v2313
        %v2738 = vmul.f32 %v2313, %v2737
        %v2739 = vsub.f32 1.0, %v2738
        %v2740 = vmul.f32 %v2737, %v2739
        %v2741 = vadd.f32 %v2737, %v2740
        %vm2742 = vweird.f32 %v2313
        %vm2743 = vweird.f32 %v2737
        %vm2744 = vmor %vm2742, %vm2743
        %v2745 = vsel %vm2744, %v2737, %v2741
        %v2746 = vand.u32 2147483647, %v2313
        %vm2747 = vcmp.eq.f32.partialorder %v2746, 8.507059e+37
        %v2748 = vand.u32 %v2313, 2147483648
        %v2749 = vor.u32 1.1754944e-38, %v2748
        %v2750 = vsel %vm2747, %v2749, %v2745
        %v2751 = vmul.f32 1.0, %v2750
        %v2752 = vrcp.pop %v2314
        %v2753 = vmul.f32 %v2314, %v2752
        %v2754 = vsub.f32 1.0, %v2753
        %v2755 = vmul.f32 %v2752, %v2754
        %v2756 = vadd.f32 %v2752, %v2755
        %vm2757 = vweird.f32 %v2314
        %vm2758 = vweird.f32 %v2752
        %vm2759 = vmor %vm2757, %vm2758
        %v2760 = vsel %vm2759, %v2752, %v2756
        %v2761 = vand.u32 2147483647, %v2314
        %vm2762 = vcmp.eq.f32.partialorder %v2761, 8.507059e+37
        %v2763 = vand.u32 %v2314, 2147483648
        %v2764 = vor.u32 1.1754944e-38, %v2763
        %v2765 = vsel %vm2762, %v2764, %v2760
        %v2766 = vmul.f32 1.0, %v2765
        %v2767 = vrcp.pop %v2315
        %v2768 = vmul.f32 %v2315, %v2767
        %v2769 = vsub.f32 1.0, %v2768
        %v2770 = vmul.f32 %v2767, %v2769
        %v2771 = vadd.f32 %v2767, %v2770
        %vm2772 = vweird.f32 %v2315
        %vm2773 = vweird.f32 %v2767
        %vm2774 = vmor %vm2772, %vm2773
        %v2775 = vsel %vm2774, %v2767, %v2771
        %v2776 = vand.u32 2147483647, %v2315
        %vm2777 = vcmp.eq.f32.partialorder %v2776, 8.507059e+37
        %v2778 = vand.u32 %v2315, 2147483648
        %v2779 = vor.u32 1.1754944e-38, %v2778
        %v2780 = vsel %vm2777, %v2779, %v2775
        %v2781 = vmul.f32 1.0, %v2780
        %v2782 = vrcp.pop %v2316
        %v2783 = vmul.f32 %v2316, %v2782
        %v2784 = vsub.f32 1.0, %v2783
        %v2785 = vmul.f32 %v2782, %v2784
        %v2786 = vadd.f32 %v2782, %v2785
        %vm2787 = vweird.f32 %v2316
        %vm2788 = vweird.f32 %v2782
        %vm2789 = vmor %vm2787, %vm2788
        %v2790 = vsel %vm2789, %v2782, %v2786
        %v2791 = vand.u32 2147483647, %v2316
        %vm2792 = vcmp.eq.f32.partialorder %v2791, 8.507059e+37
        %v2793 = vand.u32 %v2316, 2147483648
        %v2794 = vor.u32 1.1754944e-38, %v2793
        %v2795 = vsel %vm2792, %v2794, %v2790
        %v2796 = vmul.f32 1.0, %v2795
        %2798 = vset.pattern.permute.xlu0 1
        %2799 = vperm.xlu0 %2798, %v2331
        %v2800 = vpop.permute.xlu0 %2799
        %2803 = vset.pattern.permute.xlu0 1
        %2804 = vperm.xlu0 %2803, %v2346
        %v2805 = vpop.permute.xlu0 %2804
        %2808 = vset.pattern.permute.xlu0 1
        %2809 = vperm.xlu0 %2808, %v2361
        %v2810 = vpop.permute.xlu0 %2809
        %2813 = vset.pattern.permute.xlu0 1
        %2814 = vperm.xlu0 %2813, %v2376
        %v2815 = vpop.permute.xlu0 %2814
        %2818 = vset.pattern.permute.xlu0 1
        %2819 = vperm.xlu0 %2818, %v2391
        %v2820 = vpop.permute.xlu0 %2819
        %2823 = vset.pattern.permute.xlu0 1
        %2824 = vperm.xlu0 %2823, %v2406
        %v2825 = vpop.permute.xlu0 %2824
        %2828 = vset.pattern.permute.xlu0 1
        %2829 = vperm.xlu0 %2828, %v2421
        %v2830 = vpop.permute.xlu0 %2829
        %2833 = vset.pattern.permute.xlu0 1
        %2834 = vperm.xlu0 %2833, %v2436
        %v2835 = vpop.permute.xlu0 %2834
        %2838 = vset.pattern.permute.xlu0 1
        %2839 = vperm.xlu0 %2838, %v2451
        %v2840 = vpop.permute.xlu0 %2839
        %2843 = vset.pattern.permute.xlu0 1
        %2844 = vperm.xlu0 %2843, %v2466
        %v2845 = vpop.permute.xlu0 %2844
        %2848 = vset.pattern.permute.xlu0 1
        %2849 = vperm.xlu0 %2848, %v2481
        %v2850 = vpop.permute.xlu0 %2849
        %2853 = vset.pattern.permute.xlu0 1
        %2854 = vperm.xlu0 %2853, %v2496
        %v2855 = vpop.permute.xlu0 %2854
        %2858 = vset.pattern.permute.xlu0 1
        %2859 = vperm.xlu0 %2858, %v2511
        %v2860 = vpop.permute.xlu0 %2859
        %2863 = vset.pattern.permute.xlu0 1
        %2864 = vperm.xlu0 %2863, %v2526
        %v2865 = vpop.permute.xlu0 %2864
        %2868 = vset.pattern.permute.xlu0 1
        %2869 = vperm.xlu0 %2868, %v2541
        %v2870 = vpop.permute.xlu0 %2869
        %2873 = vset.pattern.permute.xlu0 1
        %2874 = vperm.xlu0 %2873, %v2556
        %v2875 = vpop.permute.xlu0 %2874
        %2878 = vset.pattern.permute.xlu0 1
        %2879 = vperm.xlu0 %2878, %v2571
        %v2880 = vpop.permute.xlu0 %2879
        %2883 = vset.pattern.permute.xlu0 1
        %2884 = vperm.xlu0 %2883, %v2586
        %v2885 = vpop.permute.xlu0 %2884
        %2888 = vset.pattern.permute.xlu0 1
        %2889 = vperm.xlu0 %2888, %v2601
        %v2890 = vpop.permute.xlu0 %2889
        %2893 = vset.pattern.permute.xlu0 1
        %2894 = vperm.xlu0 %2893, %v2616
        %v2895 = vpop.permute.xlu0 %2894
        %2898 = vset.pattern.permute.xlu0 1
        %2899 = vperm.xlu0 %2898, %v2631
        %v2900 = vpop.permute.xlu0 %2899
        %2903 = vset.pattern.permute.xlu0 1
        %2904 = vperm.xlu0 %2903, %v2646
        %v2905 = vpop.permute.xlu0 %2904
        %2908 = vset.pattern.permute.xlu0 1
        %2909 = vperm.xlu0 %2908, %v2661
        %v2910 = vpop.permute.xlu0 %2909
        %2913 = vset.pattern.permute.xlu0 1
        %2914 = vperm.xlu0 %2913, %v2676
        %v2915 = vpop.permute.xlu0 %2914
        %2918 = vset.pattern.permute.xlu0 1
        %2919 = vperm.xlu0 %2918, %v2691
        %v2920 = vpop.permute.xlu0 %2919
        %2923 = vset.pattern.permute.xlu0 1
        %2924 = vperm.xlu0 %2923, %v2706
        %v2925 = vpop.permute.xlu0 %2924
        %2928 = vset.pattern.permute.xlu0 1
        %2929 = vperm.xlu0 %2928, %v2721
        %v2930 = vpop.permute.xlu0 %2929
        %2933 = vset.pattern.permute.xlu0 1
        %2934 = vperm.xlu0 %2933, %v2736
        %v2935 = vpop.permute.xlu0 %2934
        %2938 = vset.pattern.permute.xlu0 1
        %2939 = vperm.xlu0 %2938, %v2751
        %v2940 = vpop.permute.xlu0 %2939
        %2943 = vset.pattern.permute.xlu0 1
        %2944 = vperm.xlu0 %2943, %v2766
        %v2945 = vpop.permute.xlu0 %2944
        %2948 = vset.pattern.permute.xlu0 1
        %2949 = vperm.xlu0 %2948, %v2781
        %v2950 = vpop.permute.xlu0 %2949
        %2953 = vset.pattern.permute.xlu0 1
        %2954 = vperm.xlu0 %2953, %v2796
        %v2955 = vpop.permute.xlu0 %2954
        %v2957 = vmul.f32 %v836, %v2800
        %v2958 = vmul.f32 %v839, %v2805
        %v2959 = vmul.f32 %v842, %v2810
        %v2960 = vmul.f32 %v845, %v2815
        %v2961 = vmul.f32 %v848, %v2820
        %v2962 = vmul.f32 %v851, %v2825
        %v2963 = vmul.f32 %v854, %v2830
        %v2964 = vmul.f32 %v857, %v2835
        %v2965 = vmul.f32 %v860, %v2840
        %v2966 = vmul.f32 %v863, %v2845
        %v2967 = vmul.f32 %v866, %v2850
        %v2968 = vmul.f32 %v869, %v2855
        %v2969 = vmul.f32 %v872, %v2860
        %v2970 = vmul.f32 %v875, %v2865
        %v2971 = vmul.f32 %v878, %v2870
        %v2972 = vmul.f32 %v881, %v2875
        %v2973 = vmul.f32 %v884, %v2880
        %v2974 = vmul.f32 %v887, %v2885
        %v2975 = vmul.f32 %v890, %v2890
        %v2976 = vmul.f32 %v893, %v2895
        %v2977 = vmul.f32 %v896, %v2900
        %v2978 = vmul.f32 %v899, %v2905
        %v2979 = vmul.f32 %v902, %v2910
        %v2980 = vmul.f32 %v905, %v2915
        %v2981 = vmul.f32 %v908, %v2920
        %v2982 = vmul.f32 %v911, %v2925
        %v2983 = vmul.f32 %v914, %v2930
        %v2984 = vmul.f32 %v917, %v2935
        %v2985 = vmul.f32 %v920, %v2940
        %v2986 = vmul.f32 %v923, %v2945
        %v2987 = vmul.f32 %v926, %v2950
        %v2988 = vmul.f32 %v929, %v2955
        %v2989 = vadd.f32 %v2157, %v2957
        %v2990 = vadd.f32 %v2158, %v2958
        %v2991 = vadd.f32 %v2159, %v2959
        %v2992 = vadd.f32 %v2160, %v2960
        %v2993 = vadd.f32 %v2161, %v2961
        %v2994 = vadd.f32 %v2162, %v2962
        %v2995 = vadd.f32 %v2163, %v2963
        %v2996 = vadd.f32 %v2164, %v2964
        %v2997 = vadd.f32 %v2165, %v2965
        %v2998 = vadd.f32 %v2166, %v2966
        %v2999 = vadd.f32 %v2167, %v2967
        %v3000 = vadd.f32 %v2168, %v2968
        %v3001 = vadd.f32 %v2169, %v2969
        %v3002 = vadd.f32 %v2170, %v2970
        %v3003 = vadd.f32 %v2171, %v2971
        %v3004 = vadd.f32 %v2172, %v2972
        %v3005 = vadd.f32 %v2173, %v2973
        %v3006 = vadd.f32 %v2174, %v2974
        %v3007 = vadd.f32 %v2175, %v2975
        %v3008 = vadd.f32 %v2176, %v2976
        %v3009 = vadd.f32 %v2177, %v2977
        %v3010 = vadd.f32 %v2178, %v2978
        %v3011 = vadd.f32 %v2179, %v2979
        %v3012 = vadd.f32 %v2180, %v2980
        %v3013 = vadd.f32 %v2181, %v2981
        %v3014 = vadd.f32 %v2182, %v2982
        %v3015 = vadd.f32 %v2183, %v2983
        %v3016 = vadd.f32 %v2184, %v2984
        %v3017 = vadd.f32 %v2185, %v2985
        %v3018 = vadd.f32 %v2186, %v2986
        %v3019 = vadd.f32 %v2187, %v2987
        %v3020 = vadd.f32 %v2188, %v2988
        %3021 = vst.msk [vmem:[%s432] sm:$0xff] %vm1031, %v2989
        %3022 = vst.msk [vmem:[%s432 + $0x8] sm:$0xff] %vm1031, %v2990
        %3023 = vst.msk [vmem:[%s432 + $0x10] sm:$0xff] %vm1031, %v2991
        %3024 = vst.msk [vmem:[%s432 + $0x18] sm:$0xff] %vm1031, %v2992
        %3025 = vst.msk [vmem:[%s432 + $0x20] sm:$0xff] %vm1031, %v2993
        %3026 = vst.msk [vmem:[%s432 + $0x28] sm:$0xff] %vm1031, %v2994
        %3027 = vst.msk [vmem:[%s432 + $0x30] sm:$0xff] %vm1031, %v2995
        %3028 = vst.msk [vmem:[%s432 + $0x38] sm:$0xff] %vm1031, %v2996
        %3029 = vst.msk [vmem:[%s432 + $0x40] sm:$0xff] %vm1031, %v2997
        %3030 = vst.msk [vmem:[%s432 + $0x48] sm:$0xff] %vm1031, %v2998
        %3031 = vst.msk [vmem:[%s432 + $0x50] sm:$0xff] %vm1031, %v2999
        %3032 = vst.msk [vmem:[%s432 + $0x58] sm:$0xff] %vm1031, %v3000
        %3033 = vst.msk [vmem:[%s432 + $0x60] sm:$0xff] %vm1031, %v3001
        %3034 = vst.msk [vmem:[%s432 + $0x68] sm:$0xff] %vm1031, %v3002
        %3035 = vst.msk [vmem:[%s432 + $0x70] sm:$0xff] %vm1031, %v3003
        %3036 = vst.msk [vmem:[%s432 + $0x78] sm:$0xff] %vm1031, %v3004
        %3037 = vst.msk [vmem:[%s432 + $0x80] sm:$0xff] %vm1031, %v3005
        %3038 = vst.msk [vmem:[%s432 + $0x88] sm:$0xff] %vm1031, %v3006
        %3039 = vst.msk [vmem:[%s432 + $0x90] sm:$0xff] %vm1031, %v3007
        %3040 = vst.msk [vmem:[%s432 + $0x98] sm:$0xff] %vm1031, %v3008
        %3041 = vst.msk [vmem:[%s432 + $0xa0] sm:$0xff] %vm1031, %v3009
        %3042 = vst.msk [vmem:[%s432 + $0xa8] sm:$0xff] %vm1031, %v3010
        %3043 = vst.msk [vmem:[%s432 + $0xb0] sm:$0xff] %vm1031, %v3011
        %3044 = vst.msk [vmem:[%s432 + $0xb8] sm:$0xff] %vm1031, %v3012
        %3045 = vst.msk [vmem:[%s432 + $0xc0] sm:$0xff] %vm1031, %v3013
        %3046 = vst.msk [vmem:[%s432 + $0xc8] sm:$0xff] %vm1031, %v3014
        %3047 = vst.msk [vmem:[%s432 + $0xd0] sm:$0xff] %vm1031, %v3015
        %3048 = vst.msk [vmem:[%s432 + $0xd8] sm:$0xff] %vm1031, %v3016
        %3049 = vst.msk [vmem:[%s432 + $0xe0] sm:$0xff] %vm1031, %v3017
        %3050 = vst.msk [vmem:[%s432 + $0xe8] sm:$0xff] %vm1031, %v3018
        %3051 = vst.msk [vmem:[%s432 + $0xf0] sm:$0xff] %vm1031, %v3019
        %3052 = vst.msk [vmem:[%s432 + $0xf8] sm:$0xff] %vm1031, %v3020
        %3053 = vst.msk [vmem:[#allocation2] sm:$0xff] %vm1031, 0.0
        %3054 = vst.msk [vmem:[#allocation2 + $0x8] sm:$0xff] %vm1031, 0.0
        %vm3055 = vcmask 254976
        %3056 = vst.msk [vmem:[#allocation2 + $0x10] sm:$0x3] %vm3055, 0.0
        %3057 = vst.msk [vmem:[#allocation2 + $0x18] sm:$0xff] %vm1031, 0.0
        %3058 = vst.msk [vmem:[#allocation2 + $0x20] sm:$0xff] %vm1031, 0.0
        %3059 = vst.msk [vmem:[#allocation2 + $0x28] sm:$0x3] %vm3055, 0.0
        %3060 = vst.msk [vmem:[#allocation2 + $0x30] sm:$0xff] %vm1031, 0.0
        %3061 = vst.msk [vmem:[#allocation2 + $0x38] sm:$0xff] %vm1031, 0.0
        %3062 = vst.msk [vmem:[#allocation2 + $0x40] sm:$0x3] %vm3055, 0.0
        %3063 = vst.msk [vmem:[#allocation2 + $0x48] sm:$0xff] %vm1031, 0.0
        %3064 = vst.msk [vmem:[#allocation2 + $0x50] sm:$0xff] %vm1031, 0.0
        %3065 = vst.msk [vmem:[#allocation2 + $0x58] sm:$0x3] %vm3055, 0.0
        %3066 = vst.msk [vmem:[#allocation2 + $0x60] sm:$0xff] %vm1031, 0.0
        %3067 = vst.msk [vmem:[#allocation2 + $0x68] sm:$0xff] %vm1031, 0.0
        %3068 = vst.msk [vmem:[#allocation2 + $0x70] sm:$0x3] %vm3055, 0.0
        %3069 = vst.msk [vmem:[#allocation2 + $0x78] sm:$0xff] %vm1031, 0.0
        %3070 = vst.msk [vmem:[#allocation2 + $0x80] sm:$0xff] %vm1031, 0.0
        %3071 = vst.msk [vmem:[#allocation2 + $0x88] sm:$0x3] %vm3055, 0.0
        %3072 = vst.msk [vmem:[#allocation2 + $0x90] sm:$0xff] %vm1031, 0.0
        %3073 = vst.msk [vmem:[#allocation2 + $0x98] sm:$0xff] %vm1031, 0.0
        %3074 = vst.msk [vmem:[#allocation2 + $0xa0] sm:$0x3] %vm3055, 0.0
        %3075 = vst.msk [vmem:[#allocation2 + $0xa8] sm:$0xff] %vm1031, 0.0
        %3076 = vst.msk [vmem:[#allocation2 + $0xb0] sm:$0xff] %vm1031, 0.0
        %3077 = vst.msk [vmem:[#allocation2 + $0xb8] sm:$0x3] %vm3055, 0.0
        %3078 = vst.msk [vmem:[#allocation2 + $0xc0] sm:$0xff] %vm1031, 0.0
        %3079 = vst.msk [vmem:[#allocation2 + $0xc8] sm:$0xff] %vm1031, 0.0
        %3080 = vst.msk [vmem:[#allocation2 + $0xd0] sm:$0x3] %vm3055, 0.0
        %3081 = vst.msk [vmem:[#allocation2 + $0xd8] sm:$0xff] %vm1031, 0.0
        %3082 = vst.msk [vmem:[#allocation2 + $0xe0] sm:$0xff] %vm1031, 0.0
        %3083 = vst.msk [vmem:[#allocation2 + $0xe8] sm:$0x3] %vm3055, 0.0
        %3084 = vst.msk [vmem:[#allocation2 + $0xf0] sm:$0xff] %vm1031, 0.0
        %3085 = vst.msk [vmem:[#allocation2 + $0xf8] sm:$0xff] %vm1031, 0.0
        %3086 = vst.msk [vmem:[#allocation2 + $0x100] sm:$0x3] %vm3055, 0.0
        %3087 = vst.msk [vmem:[#allocation2 + $0x108] sm:$0xff] %vm1031, 0.0
        %3088 = vst.msk [vmem:[#allocation2 + $0x110] sm:$0xff] %vm1031, 0.0
        %3089 = vst.msk [vmem:[#allocation2 + $0x118] sm:$0x3] %vm3055, 0.0
        %3090 = vst.msk [vmem:[#allocation2 + $0x120] sm:$0xff] %vm1031, 0.0
        %3091 = vst.msk [vmem:[#allocation2 + $0x128] sm:$0xff] %vm1031, 0.0
        %3092 = vst.msk [vmem:[#allocation2 + $0x130] sm:$0x3] %vm3055, 0.0
        %3093 = vst.msk [vmem:[#allocation2 + $0x138] sm:$0xff] %vm1031, 0.0
        %3094 = vst.msk [vmem:[#allocation2 + $0x140] sm:$0xff] %vm1031, 0.0
        %3095 = vst.msk [vmem:[#allocation2 + $0x148] sm:$0x3] %vm3055, 0.0
        %3096 = vst.msk [vmem:[#allocation2 + $0x150] sm:$0xff] %vm1031, 0.0
        %3097 = vst.msk [vmem:[#allocation2 + $0x158] sm:$0xff] %vm1031, 0.0
        %3098 = vst.msk [vmem:[#allocation2 + $0x160] sm:$0x3] %vm3055, 0.0
        %3099 = vst.msk [vmem:[#allocation2 + $0x168] sm:$0xff] %vm1031, 0.0
        %3100 = vst.msk [vmem:[#allocation2 + $0x170] sm:$0xff] %vm1031, 0.0
        %3101 = vst.msk [vmem:[#allocation2 + $0x178] sm:$0x3] %vm3055, 0.0
        %3102 = vst.msk [vmem:[#allocation2 + $0x180] sm:$0xff] %vm1031, 0.0
        %3103 = vst.msk [vmem:[#allocation2 + $0x188] sm:$0xff] %vm1031, 0.0
        %3104 = vst.msk [vmem:[#allocation2 + $0x190] sm:$0x3] %vm3055, 0.0
        %3105 = vst.msk [vmem:[#allocation2 + $0x198] sm:$0xff] %vm1031, 0.0
        %3106 = vst.msk [vmem:[#allocation2 + $0x1a0] sm:$0xff] %vm1031, 0.0
        %3107 = vst.msk [vmem:[#allocation2 + $0x1a8] sm:$0x3] %vm3055, 0.0
        %s3108 = scalar_lea.vmem [#allocation2], 24
        %3109 = vst.msk [vmem:[%s3108 + $0x1] sm:$0xff] %vm1031, %v2989
        %3110 = vst.msk [vmem:[%s3108 + $0x9] sm:$0xff] %vm1031, %v2990
        %3111 = vst.msk [vmem:[%s3108 + $0x19] sm:$0xff] %vm1031, %v2991
        %3112 = vst.msk [vmem:[%s3108 + $0x21] sm:$0xff] %vm1031, %v2992
        %3113 = vst.msk [vmem:[%s3108 + $0x31] sm:$0xff] %vm1031, %v2993
        %3114 = vst.msk [vmem:[%s3108 + $0x39] sm:$0xff] %vm1031, %v2994
        %3115 = vst.msk [vmem:[%s3108 + $0x49] sm:$0xff] %vm1031, %v2995
        %3116 = vst.msk [vmem:[%s3108 + $0x51] sm:$0xff] %vm1031, %v2996
        %3117 = vst.msk [vmem:[%s3108 + $0x61] sm:$0xff] %vm1031, %v2997
        %3118 = vst.msk [vmem:[%s3108 + $0x69] sm:$0xff] %vm1031, %v2998
        %3119 = vst.msk [vmem:[%s3108 + $0x79] sm:$0xff] %vm1031, %v2999
        %3120 = vst.msk [vmem:[%s3108 + $0x81] sm:$0xff] %vm1031, %v3000
        %3121 = vst.msk [vmem:[%s3108 + $0x91] sm:$0xff] %vm1031, %v3001
        %3122 = vst.msk [vmem:[%s3108 + $0x99] sm:$0xff] %vm1031, %v3002
        %3123 = vst.msk [vmem:[%s3108 + $0xa9] sm:$0xff] %vm1031, %v3003
        %3124 = vst.msk [vmem:[%s3108 + $0xb1] sm:$0xff] %vm1031, %v3004
        %3125 = vst.msk [vmem:[%s3108 + $0xc1] sm:$0xff] %vm1031, %v3005
        %3126 = vst.msk [vmem:[%s3108 + $0xc9] sm:$0xff] %vm1031, %v3006
        %3127 = vst.msk [vmem:[%s3108 + $0xd9] sm:$0xff] %vm1031, %v3007
        %3128 = vst.msk [vmem:[%s3108 + $0xe1] sm:$0xff] %vm1031, %v3008
        %3129 = vst.msk [vmem:[%s3108 + $0xf1] sm:$0xff] %vm1031, %v3009
        %3130 = vst.msk [vmem:[%s3108 + $0xf9] sm:$0xff] %vm1031, %v3010
        %3131 = vst.msk [vmem:[%s3108 + $0x109] sm:$0xff] %vm1031, %v3011
        %3132 = vst.msk [vmem:[%s3108 + $0x111] sm:$0xff] %vm1031, %v3012
        %3133 = vst.msk [vmem:[%s3108 + $0x121] sm:$0xff] %vm1031, %v3013
        %3134 = vst.msk [vmem:[%s3108 + $0x129] sm:$0xff] %vm1031, %v3014
        %3135 = vst.msk [vmem:[%s3108 + $0x139] sm:$0xff] %vm1031, %v3015
        %3136 = vst.msk [vmem:[%s3108 + $0x141] sm:$0xff] %vm1031, %v3016
        %3137 = vst.msk [vmem:[%s3108 + $0x151] sm:$0xff] %vm1031, %v3017
        %3138 = vst.msk [vmem:[%s3108 + $0x159] sm:$0xff] %vm1031, %v3018
        %3139 = vst.msk [vmem:[%s3108 + $0x169] sm:$0xff] %vm1031, %v3019
        %3140 = vst.msk [vmem:[%s3108 + $0x171] sm:$0xff] %vm1031, %v3020
        %v3141 = vld [vmem:[#allocation2] sm:$0xff]
        %v3142 = vld [vmem:[#allocation2 + $0x8] sm:$0xff]
        %v3143 = vld [vmem:[#allocation2 + $0x10] sm:$0x3]
        %v3144 = vld [vmem:[#allocation2 + $0x18] sm:$0xff]
        %v3145 = vld [vmem:[#allocation2 + $0x20] sm:$0xff]
        %v3146 = vld [vmem:[#allocation2 + $0x28] sm:$0x3]
        %v3147 = vld [vmem:[#allocation2 + $0x30] sm:$0xff]
        %v3148 = vld [vmem:[#allocation2 + $0x38] sm:$0xff]
        %v3149 = vld [vmem:[#allocation2 + $0x40] sm:$0x3]
        %v3150 = vld [vmem:[#allocation2 + $0x48] sm:$0xff]
        %v3151 = vld [vmem:[#allocation2 + $0x50] sm:$0xff]
        %v3152 = vld [vmem:[#allocation2 + $0x58] sm:$0x3]
        %v3153 = vld [vmem:[#allocation2 + $0x60] sm:$0xff]
        %v3154 = vld [vmem:[#allocation2 + $0x68] sm:$0xff]
        %v3155 = vld [vmem:[#allocation2 + $0x70] sm:$0x3]
        %v3156 = vld [vmem:[#allocation2 + $0x78] sm:$0xff]
        %v3157 = vld [vmem:[#allocation2 + $0x80] sm:$0xff]
        %v3158 = vld [vmem:[#allocation2 + $0x88] sm:$0x3]
        %v3159 = vld [vmem:[#allocation2 + $0x90] sm:$0xff]
        %v3160 = vld [vmem:[#allocation2 + $0x98] sm:$0xff]
        %v3161 = vld [vmem:[#allocation2 + $0xa0] sm:$0x3]
        %v3162 = vld [vmem:[#allocation2 + $0xa8] sm:$0xff]
        %v3163 = vld [vmem:[#allocation2 + $0xb0] sm:$0xff]
        %v3164 = vld [vmem:[#allocation2 + $0xb8] sm:$0x3]
        %v3165 = vld [vmem:[#allocation2 + $0xc0] sm:$0xff]
        %v3166 = vld [vmem:[#allocation2 + $0xc8] sm:$0xff]
        %v3167 = vld [vmem:[#allocation2 + $0xd0] sm:$0x3]
        %v3168 = vld [vmem:[#allocation2 + $0xd8] sm:$0xff]
        %v3169 = vld [vmem:[#allocation2 + $0xe0] sm:$0xff]
        %v3170 = vld [vmem:[#allocation2 + $0xe8] sm:$0x3]
        %v3171 = vld [vmem:[#allocation2 + $0xf0] sm:$0xff]
        %v3172 = vld [vmem:[#allocation2 + $0xf8] sm:$0xff]
        %v3173 = vld [vmem:[#allocation2 + $0x100] sm:$0x3]
        %v3174 = vld [vmem:[#allocation2 + $0x108] sm:$0xff]
        %v3175 = vld [vmem:[#allocation2 + $0x110] sm:$0xff]
        %v3176 = vld [vmem:[#allocation2 + $0x118] sm:$0x3]
        %v3177 = vld [vmem:[#allocation2 + $0x120] sm:$0xff]
        %v3178 = vld [vmem:[#allocation2 + $0x128] sm:$0xff]
        %v3179 = vld [vmem:[#allocation2 + $0x130] sm:$0x3]
        %v3180 = vld [vmem:[#allocation2 + $0x138] sm:$0xff]
        %v3181 = vld [vmem:[#allocation2 + $0x140] sm:$0xff]
        %v3182 = vld [vmem:[#allocation2 + $0x148] sm:$0x3]
        %v3183 = vld [vmem:[#allocation2 + $0x150] sm:$0xff]
        %v3184 = vld [vmem:[#allocation2 + $0x158] sm:$0xff]
        %v3185 = vld [vmem:[#allocation2 + $0x160] sm:$0x3]
        %v3186 = vld [vmem:[#allocation2 + $0x168] sm:$0xff]
        %v3187 = vld [vmem:[#allocation2 + $0x170] sm:$0xff]
        %v3188 = vld [vmem:[#allocation2 + $0x178] sm:$0x3]
        %v3189 = vld [vmem:[#allocation2 + $0x180] sm:$0xff]
        %v3190 = vld [vmem:[#allocation2 + $0x188] sm:$0xff]
        %v3191 = vld [vmem:[#allocation2 + $0x190] sm:$0x3]
        %v3192 = vld [vmem:[#allocation2 + $0x198] sm:$0xff]
        %v3193 = vld [vmem:[#allocation2 + $0x1a0] sm:$0xff]
        %v3194 = vld [vmem:[#allocation2 + $0x1a8] sm:$0x3]
        %v3195 = vld [vmem:[%s7] sm:$0xff]
        %v3196 = vld [vmem:[%s7 + $0x8] sm:$0xff]
        %v3197 = vld [vmem:[%s7 + $0x10] sm:$0xff]
        %v3198 = vld [vmem:[%s7 + $0x18] sm:$0xff]
        %vm3247 = vcmask 1046528
        %v3248 = vrot.slane %v3141, 1
        %v3249 = vrot.slane %v3142, 1
        %v3250 = vsel %vm3247, %v3248, %v3249
        %v3251 = vrot.slane %v3143, 1
        %v3252 = vsel %vm3247, %v3249, %v3251
        %v3253 = vrot.slane %v3144, 1
        %v3254 = vrot.slane %v3145, 1
        %v3255 = vsel %vm3247, %v3253, %v3254
        %v3256 = vrot.slane %v3146, 1
        %v3257 = vsel %vm3247, %v3254, %v3256
        %v3258 = vrot.slane %v3147, 1
        %v3259 = vrot.slane %v3148, 1
        %v3260 = vsel %vm3247, %v3258, %v3259
        %v3261 = vrot.slane %v3149, 1
        %v3262 = vsel %vm3247, %v3259, %v3261
        %v3263 = vrot.slane %v3150, 1
        %v3264 = vrot.slane %v3151, 1
        %v3265 = vsel %vm3247, %v3263, %v3264
        %v3266 = vrot.slane %v3152, 1
        %v3267 = vsel %vm3247, %v3264, %v3266
        %v3268 = vrot.slane %v3153, 1
        %v3269 = vrot.slane %v3154, 1
        %v3270 = vsel %vm3247, %v3268, %v3269
        %v3271 = vrot.slane %v3155, 1
        %v3272 = vsel %vm3247, %v3269, %v3271
        %v3273 = vrot.slane %v3156, 1
        %v3274 = vrot.slane %v3157, 1
        %v3275 = vsel %vm3247, %v3273, %v3274
        %v3276 = vrot.slane %v3158, 1
        %v3277 = vsel %vm3247, %v3274, %v3276
        %v3278 = vrot.slane %v3159, 1
        %v3279 = vrot.slane %v3160, 1
        %v3280 = vsel %vm3247, %v3278, %v3279
        %v3281 = vrot.slane %v3161, 1
        %v3282 = vsel %vm3247, %v3279, %v3281
        %v3283 = vrot.slane %v3162, 1
        %v3284 = vrot.slane %v3163, 1
        %v3285 = vsel %vm3247, %v3283, %v3284
        %v3286 = vrot.slane %v3164, 1
        %v3287 = vsel %vm3247, %v3284, %v3286
        %v3288 = vrot.slane %v3165, 1
        %v3289 = vrot.slane %v3166, 1
        %v3290 = vsel %vm3247, %v3288, %v3289
        %v3291 = vrot.slane %v3167, 1
        %v3292 = vsel %vm3247, %v3289, %v3291
        %v3293 = vrot.slane %v3168, 1
        %v3294 = vrot.slane %v3169, 1
        %v3295 = vsel %vm3247, %v3293, %v3294
        %v3296 = vrot.slane %v3170, 1
        %v3297 = vsel %vm3247, %v3294, %v3296
        %v3298 = vrot.slane %v3171, 1
        %v3299 = vrot.slane %v3172, 1
        %v3300 = vsel %vm3247, %v3298, %v3299
        %v3301 = vrot.slane %v3173, 1
        %v3302 = vsel %vm3247, %v3299, %v3301
        %v3303 = vrot.slane %v3174, 1
        %v3304 = vrot.slane %v3175, 1
        %v3305 = vsel %vm3247, %v3303, %v3304
        %v3306 = vrot.slane %v3176, 1
        %v3307 = vsel %vm3247, %v3304, %v3306
        %v3308 = vrot.slane %v3177, 1
        %v3309 = vrot.slane %v3178, 1
        %v3310 = vsel %vm3247, %v3308, %v3309
        %v3311 = vrot.slane %v3179, 1
        %v3312 = vsel %vm3247, %v3309, %v3311
        %v3313 = vrot.slane %v3180, 1
        %v3314 = vrot.slane %v3181, 1
        %v3315 = vsel %vm3247, %v3313, %v3314
        %v3316 = vrot.slane %v3182, 1
        %v3317 = vsel %vm3247, %v3314, %v3316
        %v3318 = vrot.slane %v3183, 1
        %v3319 = vrot.slane %v3184, 1
        %v3320 = vsel %vm3247, %v3318, %v3319
        %v3321 = vrot.slane %v3185, 1
        %v3322 = vsel %vm3247, %v3319, %v3321
        %v3323 = vrot.slane %v3186, 1
        %v3324 = vrot.slane %v3187, 1
        %v3325 = vsel %vm3247, %v3323, %v3324
        %v3326 = vrot.slane %v3188, 1
        %v3327 = vsel %vm3247, %v3324, %v3326
        %s3328 = scalar_lea.vmem %s7, 32
        %v3329 = vld [vmem:[%s3328] sm:$0xff]
        %v3330 = vld [vmem:[%s3328 + $0x8] sm:$0xff]
        %v3331 = vld [vmem:[%s3328 + $0x10] sm:$0xff]
        %v3332 = vld [vmem:[%s3328 + $0x18] sm:$0xff]
        %v3333 = vsel %vm1031, %v3250, 0
        %v3335 = vsel %vm1031, %v3252, 0
        %v3337 = vsel %vm1031, %v3255, 0
        %v3339 = vsel %vm1031, %v3257, 0
        %v3341 = vsel %vm1031, %v3260, 0
        %v3343 = vsel %vm1031, %v3262, 0
        %v3345 = vsel %vm1031, %v3265, 0
        %v3347 = vsel %vm1031, %v3267, 0
        %v3349 = vsel %vm1031, %v3270, 0
        %v3351 = vsel %vm1031, %v3272, 0
        %v3353 = vsel %vm1031, %v3275, 0
        %v3355 = vsel %vm1031, %v3277, 0
        %v3357 = vsel %vm1031, %v3280, 0
        %v3359 = vsel %vm1031, %v3282, 0
        %v3361 = vsel %vm1031, %v3285, 0
        %v3363 = vsel %vm1031, %v3287, 0
        %v3365 = vsel %vm1031, %v3290, 0
        %v3367 = vsel %vm1031, %v3292, 0
        %v3369 = vsel %vm1031, %v3295, 0
        %v3371 = vsel %vm1031, %v3297, 0
        %v3373 = vsel %vm1031, %v3300, 0
        %v3375 = vsel %vm1031, %v3302, 0
        %v3377 = vsel %vm1031, %v3305, 0
        %v3379 = vsel %vm1031, %v3307, 0
        %v3381 = vsel %vm1031, %v3310, 0
        %v3383 = vsel %vm1031, %v3312, 0
        %v3385 = vsel %vm1031, %v3315, 0
        %v3387 = vsel %vm1031, %v3317, 0
        %v3389 = vsel %vm1031, %v3320, 0
        %v3391 = vsel %vm1031, %v3322, 0
        %v3393 = vsel %vm1031, %v3325, 0
        %v3395 = vsel %vm1031, %v3327, 0
        %3397 = vmatpush.msra.mxu0 0.0
        %3398 = vmatpush.msra.mxu0 0.0
        %3399 = vmatpush.msra.mxu0 0.0
        %3400 = vmatpush.msra.mxu0 0.0
        %3401 = vmatpush.msra.mxu0 0.0
        %3402 = vmatpush.msra.mxu0 0.0
        %3403 = vmatpush.msra.mxu0 0.0
        %3404 = vmatpush.msra.mxu0 0.0
        %3405 = vmatpush.msra.mxu0 0.0
        %3406 = vmatpush.msra.mxu0 0.0
        %3407 = vmatpush.msra.mxu0 0.0
        %3408 = vmatpush.msra.mxu0 0.0
        %3409 = vmatpush.msra.mxu0 %v3332
        %3410 = vmatpush.msra.mxu0 %v3331
        %3411 = vmatpush.msra.mxu0 %v3330
        %3412 = vmatpush.msra.mxu0 %v3329
        %3413 = vmatmul.f32.gmra.mxu0 %v3333
        %v3414 = vpop.f32.mrf.mxu0
        %v3415 = vadd.f32 0.0, %v3414
        %3416 = vmatmul.f32.gmra.mxu0 %v3335
        %v3417 = vpop.f32.mrf.mxu0
        %v3418 = vadd.f32 0.0, %v3417
        %3419 = vmatmul.f32.gmra.mxu0 %v3337
        %v3420 = vpop.f32.mrf.mxu0
        %v3421 = vadd.f32 0.0, %v3420
        %3422 = vmatmul.f32.gmra.mxu0 %v3339
        %v3423 = vpop.f32.mrf.mxu0
        %v3424 = vadd.f32 0.0, %v3423
        %3425 = vmatmul.f32.gmra.mxu0 %v3341
        %v3426 = vpop.f32.mrf.mxu0
        %v3427 = vadd.f32 0.0, %v3426
        %3428 = vmatmul.f32.gmra.mxu0 %v3343
        %v3429 = vpop.f32.mrf.mxu0
        %v3430 = vadd.f32 0.0, %v3429
        %3431 = vmatmul.f32.gmra.mxu0 %v3345
        %v3432 = vpop.f32.mrf.mxu0
        %v3433 = vadd.f32 0.0, %v3432
        %3434 = vmatmul.f32.gmra.mxu0 %v3347
        %v3435 = vpop.f32.mrf.mxu0
        %v3436 = vadd.f32 0.0, %v3435
        %3437 = vmatmul.f32.gmra.mxu0 %v3349
        %v3438 = vpop.f32.mrf.mxu0
        %v3439 = vadd.f32 0.0, %v3438
        %3440 = vmatmul.f32.gmra.mxu0 %v3351
        %v3441 = vpop.f32.mrf.mxu0
        %v3442 = vadd.f32 0.0, %v3441
        %3443 = vmatmul.f32.gmra.mxu0 %v3353
        %v3444 = vpop.f32.mrf.mxu0
        %v3445 = vadd.f32 0.0, %v3444
        %3446 = vmatmul.f32.gmra.mxu0 %v3355
        %v3447 = vpop.f32.mrf.mxu0
        %v3448 = vadd.f32 0.0, %v3447
        %3449 = vmatmul.f32.gmra.mxu0 %v3357
        %v3450 = vpop.f32.mrf.mxu0
        %v3451 = vadd.f32 0.0, %v3450
        %3452 = vmatmul.f32.gmra.mxu0 %v3359
        %v3453 = vpop.f32.mrf.mxu0
        %v3454 = vadd.f32 0.0, %v3453
        %3455 = vmatmul.f32.gmra.mxu0 %v3361
        %v3456 = vpop.f32.mrf.mxu0
        %v3457 = vadd.f32 0.0, %v3456
        %3458 = vmatmul.f32.gmra.mxu0 %v3363
        %v3459 = vpop.f32.mrf.mxu0
        %v3460 = vadd.f32 0.0, %v3459
        %3461 = vmatmul.f32.gmra.mxu0 %v3365
        %v3462 = vpop.f32.mrf.mxu0
        %v3463 = vadd.f32 0.0, %v3462
        %3464 = vmatmul.f32.gmra.mxu0 %v3367
        %v3465 = vpop.f32.mrf.mxu0
        %v3466 = vadd.f32 0.0, %v3465
        %3467 = vmatmul.f32.gmra.mxu0 %v3369
        %v3468 = vpop.f32.mrf.mxu0
        %v3469 = vadd.f32 0.0, %v3468
        %3470 = vmatmul.f32.gmra.mxu0 %v3371
        %v3471 = vpop.f32.mrf.mxu0
        %v3472 = vadd.f32 0.0, %v3471
        %3473 = vmatmul.f32.gmra.mxu0 %v3373
        %v3474 = vpop.f32.mrf.mxu0
        %v3475 = vadd.f32 0.0, %v3474
        %3476 = vmatmul.f32.gmra.mxu0 %v3375
        %v3477 = vpop.f32.mrf.mxu0
        %v3478 = vadd.f32 0.0, %v3477
        %3479 = vmatmul.f32.gmra.mxu0 %v3377
        %v3480 = vpop.f32.mrf.mxu0
        %v3481 = vadd.f32 0.0, %v3480
        %3482 = vmatmul.f32.gmra.mxu0 %v3379
        %v3483 = vpop.f32.mrf.mxu0
        %v3484 = vadd.f32 0.0, %v3483
        %3485 = vmatmul.f32.gmra.mxu0 %v3381
        %v3486 = vpop.f32.mrf.mxu0
        %v3487 = vadd.f32 0.0, %v3486
        %3488 = vmatmul.f32.gmra.mxu0 %v3383
        %v3489 = vpop.f32.mrf.mxu0
        %v3490 = vadd.f32 0.0, %v3489
        %3491 = vmatmul.f32.gmra.mxu0 %v3385
        %v3492 = vpop.f32.mrf.mxu0
        %v3493 = vadd.f32 0.0, %v3492
        %3494 = vmatmul.f32.gmra.mxu0 %v3387
        %v3495 = vpop.f32.mrf.mxu0
        %v3496 = vadd.f32 0.0, %v3495
        %3497 = vmatmul.f32.gmra.mxu0 %v3389
        %v3498 = vpop.f32.mrf.mxu0
        %v3499 = vadd.f32 0.0, %v3498
        %3500 = vmatmul.f32.gmra.mxu0 %v3391
        %v3501 = vpop.f32.mrf.mxu0
        %v3502 = vadd.f32 0.0, %v3501
        %3503 = vmatmul.f32.gmra.mxu0 %v3393
        %v3504 = vpop.f32.mrf.mxu0
        %v3505 = vadd.f32 0.0, %v3504
        %3506 = vmatmul.f32.gmra.mxu0 %v3395
        %v3507 = vpop.f32.mrf.mxu0
        %v3508 = vadd.f32 0.0, %v3507
        %3509 = vdwg.mxu0
        %v3510 = vsel %vm1031, %v3141, 0
        %v3512 = vsel %vm1031, %v3142, 0
        %v3514 = vsel %vm1031, %v3144, 0
        %v3516 = vsel %vm1031, %v3145, 0
        %v3518 = vsel %vm1031, %v3147, 0
        %v3520 = vsel %vm1031, %v3148, 0
        %v3522 = vsel %vm1031, %v3150, 0
        %v3524 = vsel %vm1031, %v3151, 0
        %v3526 = vsel %vm1031, %v3153, 0
        %v3528 = vsel %vm1031, %v3154, 0
        %v3530 = vsel %vm1031, %v3156, 0
        %v3532 = vsel %vm1031, %v3157, 0
        %v3534 = vsel %vm1031, %v3159, 0
        %v3536 = vsel %vm1031, %v3160, 0
        %v3538 = vsel %vm1031, %v3162, 0
        %v3540 = vsel %vm1031, %v3163, 0
        %v3542 = vsel %vm1031, %v3165, 0
        %v3544 = vsel %vm1031, %v3166, 0
        %v3546 = vsel %vm1031, %v3168, 0
        %v3548 = vsel %vm1031, %v3169, 0
        %v3550 = vsel %vm1031, %v3171, 0
        %v3552 = vsel %vm1031, %v3172, 0
        %v3554 = vsel %vm1031, %v3174, 0
        %v3556 = vsel %vm1031, %v3175, 0
        %v3558 = vsel %vm1031, %v3177, 0
        %v3560 = vsel %vm1031, %v3178, 0
        %v3562 = vsel %vm1031, %v3180, 0
        %v3564 = vsel %vm1031, %v3181, 0
        %v3566 = vsel %vm1031, %v3183, 0
        %v3568 = vsel %vm1031, %v3184, 0
        %v3570 = vsel %vm1031, %v3186, 0
        %v3572 = vsel %vm1031, %v3187, 0
        %3574 = vmatpush.msra.mxu0 0.0
        %3575 = vmatpush.msra.mxu0 0.0
        %3576 = vmatpush.msra.mxu0 0.0
        %3577 = vmatpush.msra.mxu0 0.0
        %3578 = vmatpush.msra.mxu0 0.0
        %3579 = vmatpush.msra.mxu0 0.0
        %3580 = vmatpush.msra.mxu0 0.0
        %3581 = vmatpush.msra.mxu0 0.0
        %3582 = vmatpush.msra.mxu0 0.0
        %3583 = vmatpush.msra.mxu0 0.0
        %3584 = vmatpush.msra.mxu0 0.0
        %3585 = vmatpush.msra.mxu0 0.0
        %3586 = vmatpush.msra.mxu0 %v3198
        %3587 = vmatpush.msra.mxu0 %v3197
        %3588 = vmatpush.msra.mxu0 %v3196
        %3589 = vmatpush.msra.mxu0 %v3195
        %3590 = vmatmul.f32.gmra.mxu0 %v3510
        %v3591 = vpop.f32.mrf.mxu0
        %v3592 = vadd.f32 %v3415, %v3591
        %3593 = vmatmul.f32.gmra.mxu0 %v3512
        %v3594 = vpop.f32.mrf.mxu0
        %v3595 = vadd.f32 %v3418, %v3594
        %3596 = vmatmul.f32.gmra.mxu0 %v3514
        %v3597 = vpop.f32.mrf.mxu0
        %v3598 = vadd.f32 %v3421, %v3597
        %3599 = vmatmul.f32.gmra.mxu0 %v3516
        %v3600 = vpop.f32.mrf.mxu0
        %v3601 = vadd.f32 %v3424, %v3600
        %3602 = vmatmul.f32.gmra.mxu0 %v3518
        %v3603 = vpop.f32.mrf.mxu0
        %v3604 = vadd.f32 %v3427, %v3603
        %3605 = vmatmul.f32.gmra.mxu0 %v3520
        %v3606 = vpop.f32.mrf.mxu0
        %v3607 = vadd.f32 %v3430, %v3606
        %3608 = vmatmul.f32.gmra.mxu0 %v3522
        %v3609 = vpop.f32.mrf.mxu0
        %v3610 = vadd.f32 %v3433, %v3609
        %3611 = vmatmul.f32.gmra.mxu0 %v3524
        %v3612 = vpop.f32.mrf.mxu0
        %v3613 = vadd.f32 %v3436, %v3612
        %3614 = vmatmul.f32.gmra.mxu0 %v3526
        %v3615 = vpop.f32.mrf.mxu0
        %v3616 = vadd.f32 %v3439, %v3615
        %3617 = vmatmul.f32.gmra.mxu0 %v3528
        %v3618 = vpop.f32.mrf.mxu0
        %v3619 = vadd.f32 %v3442, %v3618
        %3620 = vmatmul.f32.gmra.mxu0 %v3530
        %v3621 = vpop.f32.mrf.mxu0
        %v3622 = vadd.f32 %v3445, %v3621
        %3623 = vmatmul.f32.gmra.mxu0 %v3532
        %v3624 = vpop.f32.mrf.mxu0
        %v3625 = vadd.f32 %v3448, %v3624
        %3626 = vmatmul.f32.gmra.mxu0 %v3534
        %v3627 = vpop.f32.mrf.mxu0
        %v3628 = vadd.f32 %v3451, %v3627
        %3629 = vmatmul.f32.gmra.mxu0 %v3536
        %v3630 = vpop.f32.mrf.mxu0
        %v3631 = vadd.f32 %v3454, %v3630
        %3632 = vmatmul.f32.gmra.mxu0 %v3538
        %v3633 = vpop.f32.mrf.mxu0
        %v3634 = vadd.f32 %v3457, %v3633
        %3635 = vmatmul.f32.gmra.mxu0 %v3540
        %v3636 = vpop.f32.mrf.mxu0
        %v3637 = vadd.f32 %v3460, %v3636
        %3638 = vmatmul.f32.gmra.mxu0 %v3542
        %v3639 = vpop.f32.mrf.mxu0
        %v3640 = vadd.f32 %v3463, %v3639
        %3641 = vmatmul.f32.gmra.mxu0 %v3544
        %v3642 = vpop.f32.mrf.mxu0
        %v3643 = vadd.f32 %v3466, %v3642
        %3644 = vmatmul.f32.gmra.mxu0 %v3546
        %v3645 = vpop.f32.mrf.mxu0
        %v3646 = vadd.f32 %v3469, %v3645
        %3647 = vmatmul.f32.gmra.mxu0 %v3548
        %v3648 = vpop.f32.mrf.mxu0
        %v3649 = vadd.f32 %v3472, %v3648
        %3650 = vmatmul.f32.gmra.mxu0 %v3550
        %v3651 = vpop.f32.mrf.mxu0
        %v3652 = vadd.f32 %v3475, %v3651
        %3653 = vmatmul.f32.gmra.mxu0 %v3552
        %v3654 = vpop.f32.mrf.mxu0
        %v3655 = vadd.f32 %v3478, %v3654
        %3656 = vmatmul.f32.gmra.mxu0 %v3554
        %v3657 = vpop.f32.mrf.mxu0
        %v3658 = vadd.f32 %v3481, %v3657
        %3659 = vmatmul.f32.gmra.mxu0 %v3556
        %v3660 = vpop.f32.mrf.mxu0
        %v3661 = vadd.f32 %v3484, %v3660
        %3662 = vmatmul.f32.gmra.mxu0 %v3558
        %v3663 = vpop.f32.mrf.mxu0
        %v3664 = vadd.f32 %v3487, %v3663
        %3665 = vmatmul.f32.gmra.mxu0 %v3560
        %v3666 = vpop.f32.mrf.mxu0
        %v3667 = vadd.f32 %v3490, %v3666
        %3668 = vmatmul.f32.gmra.mxu0 %v3562
        %v3669 = vpop.f32.mrf.mxu0
        %v3670 = vadd.f32 %v3493, %v3669
        %3671 = vmatmul.f32.gmra.mxu0 %v3564
        %v3672 = vpop.f32.mrf.mxu0
        %v3673 = vadd.f32 %v3496, %v3672
        %3674 = vmatmul.f32.gmra.mxu0 %v3566
        %v3675 = vpop.f32.mrf.mxu0
        %v3676 = vadd.f32 %v3499, %v3675
        %3677 = vmatmul.f32.gmra.mxu0 %v3568
        %v3678 = vpop.f32.mrf.mxu0
        %v3679 = vadd.f32 %v3502, %v3678
        %3680 = vmatmul.f32.gmra.mxu0 %v3570
        %v3681 = vpop.f32.mrf.mxu0
        %v3682 = vadd.f32 %v3505, %v3681
        %3683 = vmatmul.f32.gmra.mxu0 %v3572
        %v3684 = vpop.f32.mrf.mxu0
        %v3685 = vadd.f32 %v3508, %v3684
        %3686 = vdwg.mxu0
        %vm3687 = vcmask 1045504
        %v3688 = vrot.slane %v3141, 2
        %v3689 = vrot.slane %v3142, 2
        %v3690 = vsel %vm3687, %v3688, %v3689
        %v3691 = vrot.slane %v3143, 2
        %v3692 = vsel %vm3687, %v3689, %v3691
        %v3693 = vrot.slane %v3144, 2
        %v3694 = vrot.slane %v3145, 2
        %v3695 = vsel %vm3687, %v3693, %v3694
        %v3696 = vrot.slane %v3146, 2
        %v3697 = vsel %vm3687, %v3694, %v3696
        %v3698 = vrot.slane %v3147, 2
        %v3699 = vrot.slane %v3148, 2
        %v3700 = vsel %vm3687, %v3698, %v3699
        %v3701 = vrot.slane %v3149, 2
        %v3702 = vsel %vm3687, %v3699, %v3701
        %v3703 = vrot.slane %v3150, 2
        %v3704 = vrot.slane %v3151, 2
        %v3705 = vsel %vm3687, %v3703, %v3704
        %v3706 = vrot.slane %v3152, 2
        %v3707 = vsel %vm3687, %v3704, %v3706
        %v3708 = vrot.slane %v3153, 2
        %v3709 = vrot.slane %v3154, 2
        %v3710 = vsel %vm3687, %v3708, %v3709
        %v3711 = vrot.slane %v3155, 2
        %v3712 = vsel %vm3687, %v3709, %v3711
        %v3713 = vrot.slane %v3156, 2
        %v3714 = vrot.slane %v3157, 2
        %v3715 = vsel %vm3687, %v3713, %v3714
        %v3716 = vrot.slane %v3158, 2
        %v3717 = vsel %vm3687, %v3714, %v3716
        %v3718 = vrot.slane %v3159, 2
        %v3719 = vrot.slane %v3160, 2
        %v3720 = vsel %vm3687, %v3718, %v3719
        %v3721 = vrot.slane %v3161, 2
        %v3722 = vsel %vm3687, %v3719, %v3721
        %v3723 = vrot.slane %v3162, 2
        %v3724 = vrot.slane %v3163, 2
        %v3725 = vsel %vm3687, %v3723, %v3724
        %v3726 = vrot.slane %v3164, 2
        %v3727 = vsel %vm3687, %v3724, %v3726
        %v3728 = vrot.slane %v3165, 2
        %v3729 = vrot.slane %v3166, 2
        %v3730 = vsel %vm3687, %v3728, %v3729
        %v3731 = vrot.slane %v3167, 2
        %v3732 = vsel %vm3687, %v3729, %v3731
        %v3733 = vrot.slane %v3168, 2
        %v3734 = vrot.slane %v3169, 2
        %v3735 = vsel %vm3687, %v3733, %v3734
        %v3736 = vrot.slane %v3170, 2
        %v3737 = vsel %vm3687, %v3734, %v3736
        %v3738 = vrot.slane %v3171, 2
        %v3739 = vrot.slane %v3172, 2
        %v3740 = vsel %vm3687, %v3738, %v3739
        %v3741 = vrot.slane %v3173, 2
        %v3742 = vsel %vm3687, %v3739, %v3741
        %v3743 = vrot.slane %v3174, 2
        %v3744 = vrot.slane %v3175, 2
        %v3745 = vsel %vm3687, %v3743, %v3744
        %v3746 = vrot.slane %v3176, 2
        %v3747 = vsel %vm3687, %v3744, %v3746
        %v3748 = vrot.slane %v3177, 2
        %v3749 = vrot.slane %v3178, 2
        %v3750 = vsel %vm3687, %v3748, %v3749
        %v3751 = vrot.slane %v3179, 2
        %v3752 = vsel %vm3687, %v3749, %v3751
        %v3753 = vrot.slane %v3180, 2
        %v3754 = vrot.slane %v3181, 2
        %v3755 = vsel %vm3687, %v3753, %v3754
        %v3756 = vrot.slane %v3182, 2
        %v3757 = vsel %vm3687, %v3754, %v3756
        %v3758 = vrot.slane %v3183, 2
        %v3759 = vrot.slane %v3184, 2
        %v3760 = vsel %vm3687, %v3758, %v3759
        %v3761 = vrot.slane %v3185, 2
        %v3762 = vsel %vm3687, %v3759, %v3761
        %v3763 = vrot.slane %v3186, 2
        %v3764 = vrot.slane %v3187, 2
        %v3765 = vsel %vm3687, %v3763, %v3764
        %v3766 = vrot.slane %v3188, 2
        %v3767 = vsel %vm3687, %v3764, %v3766
        %s3768 = scalar_lea.vmem %s7, 64
        %v3769 = vld [vmem:[%s3768] sm:$0xff]
        %v3770 = vld [vmem:[%s3768 + $0x8] sm:$0xff]
        %v3771 = vld [vmem:[%s3768 + $0x10] sm:$0xff]
        %v3772 = vld [vmem:[%s3768 + $0x18] sm:$0xff]
        %v3773 = vsel %vm1031, %v3690, 0
        %v3775 = vsel %vm1031, %v3692, 0
        %v3777 = vsel %vm1031, %v3695, 0
        %v3779 = vsel %vm1031, %v3697, 0
        %v3781 = vsel %vm1031, %v3700, 0
        %v3783 = vsel %vm1031, %v3702, 0
        %v3785 = vsel %vm1031, %v3705, 0
        %v3787 = vsel %vm1031, %v3707, 0
        %v3789 = vsel %vm1031, %v3710, 0
        %v3791 = vsel %vm1031, %v3712, 0
        %v3793 = vsel %vm1031, %v3715, 0
        %v3795 = vsel %vm1031, %v3717, 0
        %v3797 = vsel %vm1031, %v3720, 0
        %v3799 = vsel %vm1031, %v3722, 0
        %v3801 = vsel %vm1031, %v3725, 0
        %v3803 = vsel %vm1031, %v3727, 0
        %v3805 = vsel %vm1031, %v3730, 0
        %v3807 = vsel %vm1031, %v3732, 0
        %v3809 = vsel %vm1031, %v3735, 0
        %v3811 = vsel %vm1031, %v3737, 0
        %v3813 = vsel %vm1031, %v3740, 0
        %v3815 = vsel %vm1031, %v3742, 0
        %v3817 = vsel %vm1031, %v3745, 0
        %v3819 = vsel %vm1031, %v3747, 0
        %v3821 = vsel %vm1031, %v3750, 0
        %v3823 = vsel %vm1031, %v3752, 0
        %v3825 = vsel %vm1031, %v3755, 0
        %v3827 = vsel %vm1031, %v3757, 0
        %v3829 = vsel %vm1031, %v3760, 0
        %v3831 = vsel %vm1031, %v3762, 0
        %v3833 = vsel %vm1031, %v3765, 0
        %v3835 = vsel %vm1031, %v3767, 0
        %3837 = vmatpush.msra.mxu0 0.0
        %3838 = vmatpush.msra.mxu0 0.0
        %3839 = vmatpush.msra.mxu0 0.0
        %3840 = vmatpush.msra.mxu0 0.0
        %3841 = vmatpush.msra.mxu0 0.0
        %3842 = vmatpush.msra.mxu0 0.0
        %3843 = vmatpush.msra.mxu0 0.0
        %3844 = vmatpush.msra.mxu0 0.0
        %3845 = vmatpush.msra.mxu0 0.0
        %3846 = vmatpush.msra.mxu0 0.0
        %3847 = vmatpush.msra.mxu0 0.0
        %3848 = vmatpush.msra.mxu0 0.0
        %3849 = vmatpush.msra.mxu0 %v3772
        %3850 = vmatpush.msra.mxu0 %v3771
        %3851 = vmatpush.msra.mxu0 %v3770
        %3852 = vmatpush.msra.mxu0 %v3769
        %3853 = vmatmul.f32.gmra.mxu0 %v3773
        %v3854 = vpop.f32.mrf.mxu0
        %v3855 = vadd.f32 0.0, %v3854
        %3856 = vmatmul.f32.gmra.mxu0 %v3775
        %v3857 = vpop.f32.mrf.mxu0
        %v3858 = vadd.f32 0.0, %v3857
        %3859 = vmatmul.f32.gmra.mxu0 %v3777
        %v3860 = vpop.f32.mrf.mxu0
        %v3861 = vadd.f32 0.0, %v3860
        %3862 = vmatmul.f32.gmra.mxu0 %v3779
        %v3863 = vpop.f32.mrf.mxu0
        %v3864 = vadd.f32 0.0, %v3863
        %3865 = vmatmul.f32.gmra.mxu0 %v3781
        %v3866 = vpop.f32.mrf.mxu0
        %v3867 = vadd.f32 0.0, %v3866
        %3868 = vmatmul.f32.gmra.mxu0 %v3783
        %v3869 = vpop.f32.mrf.mxu0
        %v3870 = vadd.f32 0.0, %v3869
        %3871 = vmatmul.f32.gmra.mxu0 %v3785
        %v3872 = vpop.f32.mrf.mxu0
        %v3873 = vadd.f32 0.0, %v3872
        %3874 = vmatmul.f32.gmra.mxu0 %v3787
        %v3875 = vpop.f32.mrf.mxu0
        %v3876 = vadd.f32 0.0, %v3875
        %3877 = vmatmul.f32.gmra.mxu0 %v3789
        %v3878 = vpop.f32.mrf.mxu0
        %v3879 = vadd.f32 0.0, %v3878
        %3880 = vmatmul.f32.gmra.mxu0 %v3791
        %v3881 = vpop.f32.mrf.mxu0
        %v3882 = vadd.f32 0.0, %v3881
        %3883 = vmatmul.f32.gmra.mxu0 %v3793
        %v3884 = vpop.f32.mrf.mxu0
        %v3885 = vadd.f32 0.0, %v3884
        %3886 = vmatmul.f32.gmra.mxu0 %v3795
        %v3887 = vpop.f32.mrf.mxu0
        %v3888 = vadd.f32 0.0, %v3887
        %3889 = vmatmul.f32.gmra.mxu0 %v3797
        %v3890 = vpop.f32.mrf.mxu0
        %v3891 = vadd.f32 0.0, %v3890
        %3892 = vmatmul.f32.gmra.mxu0 %v3799
        %v3893 = vpop.f32.mrf.mxu0
        %v3894 = vadd.f32 0.0, %v3893
        %3895 = vmatmul.f32.gmra.mxu0 %v3801
        %v3896 = vpop.f32.mrf.mxu0
        %v3897 = vadd.f32 0.0, %v3896
        %3898 = vmatmul.f32.gmra.mxu0 %v3803
        %v3899 = vpop.f32.mrf.mxu0
        %v3900 = vadd.f32 0.0, %v3899
        %3901 = vmatmul.f32.gmra.mxu0 %v3805
        %v3902 = vpop.f32.mrf.mxu0
        %v3903 = vadd.f32 0.0, %v3902
        %3904 = vmatmul.f32.gmra.mxu0 %v3807
        %v3905 = vpop.f32.mrf.mxu0
        %v3906 = vadd.f32 0.0, %v3905
        %3907 = vmatmul.f32.gmra.mxu0 %v3809
        %v3908 = vpop.f32.mrf.mxu0
        %v3909 = vadd.f32 0.0, %v3908
        %3910 = vmatmul.f32.gmra.mxu0 %v3811
        %v3911 = vpop.f32.mrf.mxu0
        %v3912 = vadd.f32 0.0, %v3911
        %3913 = vmatmul.f32.gmra.mxu0 %v3813
        %v3914 = vpop.f32.mrf.mxu0
        %v3915 = vadd.f32 0.0, %v3914
        %3916 = vmatmul.f32.gmra.mxu0 %v3815
        %v3917 = vpop.f32.mrf.mxu0
        %v3918 = vadd.f32 0.0, %v3917
        %3919 = vmatmul.f32.gmra.mxu0 %v3817
        %v3920 = vpop.f32.mrf.mxu0
        %v3921 = vadd.f32 0.0, %v3920
        %3922 = vmatmul.f32.gmra.mxu0 %v3819
        %v3923 = vpop.f32.mrf.mxu0
        %v3924 = vadd.f32 0.0, %v3923
        %3925 = vmatmul.f32.gmra.mxu0 %v3821
        %v3926 = vpop.f32.mrf.mxu0
        %v3927 = vadd.f32 0.0, %v3926
        %3928 = vmatmul.f32.gmra.mxu0 %v3823
        %v3929 = vpop.f32.mrf.mxu0
        %v3930 = vadd.f32 0.0, %v3929
        %3931 = vmatmul.f32.gmra.mxu0 %v3825
        %v3932 = vpop.f32.mrf.mxu0
        %v3933 = vadd.f32 0.0, %v3932
        %3934 = vmatmul.f32.gmra.mxu0 %v3827
        %v3935 = vpop.f32.mrf.mxu0
        %v3936 = vadd.f32 0.0, %v3935
        %3937 = vmatmul.f32.gmra.mxu0 %v3829
        %v3938 = vpop.f32.mrf.mxu0
        %v3939 = vadd.f32 0.0, %v3938
        %3940 = vmatmul.f32.gmra.mxu0 %v3831
        %v3941 = vpop.f32.mrf.mxu0
        %v3942 = vadd.f32 0.0, %v3941
        %3943 = vmatmul.f32.gmra.mxu0 %v3833
        %v3944 = vpop.f32.mrf.mxu0
        %v3945 = vadd.f32 0.0, %v3944
        %3946 = vmatmul.f32.gmra.mxu0 %v3835
        %v3947 = vpop.f32.mrf.mxu0
        %v3948 = vadd.f32 0.0, %v3947
        %3949 = vdwg.mxu0
        %v3950 = vadd.f32 %v3592, %v3855
        %v3951 = vadd.f32 %v3595, %v3858
        %v3952 = vadd.f32 %v3598, %v3861
        %v3953 = vadd.f32 %v3601, %v3864
        %v3954 = vadd.f32 %v3604, %v3867
        %v3955 = vadd.f32 %v3607, %v3870
        %v3956 = vadd.f32 %v3610, %v3873
        %v3957 = vadd.f32 %v3613, %v3876
        %v3958 = vadd.f32 %v3616, %v3879
        %v3959 = vadd.f32 %v3619, %v3882
        %v3960 = vadd.f32 %v3622, %v3885
        %v3961 = vadd.f32 %v3625, %v3888
        %v3962 = vadd.f32 %v3628, %v3891
        %v3963 = vadd.f32 %v3631, %v3894
        %v3964 = vadd.f32 %v3634, %v3897
        %v3965 = vadd.f32 %v3637, %v3900
        %v3966 = vadd.f32 %v3640, %v3903
        %v3967 = vadd.f32 %v3643, %v3906
        %v3968 = vadd.f32 %v3646, %v3909
        %v3969 = vadd.f32 %v3649, %v3912
        %v3970 = vadd.f32 %v3652, %v3915
        %v3971 = vadd.f32 %v3655, %v3918
        %v3972 = vadd.f32 %v3658, %v3921
        %v3973 = vadd.f32 %v3661, %v3924
        %v3974 = vadd.f32 %v3664, %v3927
        %v3975 = vadd.f32 %v3667, %v3930
        %v3976 = vadd.f32 %v3670, %v3933
        %v3977 = vadd.f32 %v3673, %v3936
        %v3978 = vadd.f32 %v3676, %v3939
        %v3979 = vadd.f32 %v3679, %v3942
        %v3980 = vadd.f32 %v3682, %v3945
        %v3981 = vadd.f32 %v3685, %v3948
        %s3982 = scalar_lea.vmem %s7, 96
        %v3983 = vld [vmem:[%s3982] sm:$0xff]
        %v3984 = vld [vmem:[%s3982 + $0x8] sm:$0xff]
        %v3985 = vld [vmem:[%s3982 + $0x10] sm:$0xff]
        %v3986 = vld [vmem:[%s3982 + $0x18] sm:$0xff]
        %v3988 = vsel %vm1031, %v3189, 0
        %v3991 = vsel %vm1031, %v3190, 0
        %3993 = vmatpush.msra.mxu0 0.0
        %3994 = vmatpush.msra.mxu0 0.0
        %3995 = vmatpush.msra.mxu0 0.0
        %3996 = vmatpush.msra.mxu0 0.0
        %3997 = vmatpush.msra.mxu0 0.0
        %3998 = vmatpush.msra.mxu0 0.0
        %3999 = vmatpush.msra.mxu0 0.0
        %4000 = vmatpush.msra.mxu0 0.0
        %4001 = vmatpush.msra.mxu0 0.0
        %4002 = vmatpush.msra.mxu0 0.0
        %4003 = vmatpush.msra.mxu0 0.0
        %4004 = vmatpush.msra.mxu0 0.0
        %4005 = vmatpush.msra.mxu0 %v3986
        %4006 = vmatpush.msra.mxu0 %v3985
        %4007 = vmatpush.msra.mxu0 %v3984
        %4008 = vmatpush.msra.mxu0 %v3983
        %4009 = vmatmul.f32.gmra.mxu0 %v3514
        %v4010 = vpop.f32.mrf.mxu0
        %v4011 = vadd.f32 0.0, %v4010
        %4012 = vmatmul.f32.gmra.mxu0 %v3516
        %v4013 = vpop.f32.mrf.mxu0
        %v4014 = vadd.f32 0.0, %v4013
        %4015 = vmatmul.f32.gmra.mxu0 %v3518
        %v4016 = vpop.f32.mrf.mxu0
        %v4017 = vadd.f32 0.0, %v4016
        %4018 = vmatmul.f32.gmra.mxu0 %v3520
        %v4019 = vpop.f32.mrf.mxu0
        %v4020 = vadd.f32 0.0, %v4019
        %4021 = vmatmul.f32.gmra.mxu0 %v3522
        %v4022 = vpop.f32.mrf.mxu0
        %v4023 = vadd.f32 0.0, %v4022
        %4024 = vmatmul.f32.gmra.mxu0 %v3524
        %v4025 = vpop.f32.mrf.mxu0
        %v4026 = vadd.f32 0.0, %v4025
        %4027 = vmatmul.f32.gmra.mxu0 %v3526
        %v4028 = vpop.f32.mrf.mxu0
        %v4029 = vadd.f32 0.0, %v4028
        %4030 = vmatmul.f32.gmra.mxu0 %v3528
        %v4031 = vpop.f32.mrf.mxu0
        %v4032 = vadd.f32 0.0, %v4031
        %4033 = vmatmul.f32.gmra.mxu0 %v3530
        %v4034 = vpop.f32.mrf.mxu0
        %v4035 = vadd.f32 0.0, %v4034
        %4036 = vmatmul.f32.gmra.mxu0 %v3532
        %v4037 = vpop.f32.mrf.mxu0
        %v4038 = vadd.f32 0.0, %v4037
        %4039 = vmatmul.f32.gmra.mxu0 %v3534
        %v4040 = vpop.f32.mrf.mxu0
        %v4041 = vadd.f32 0.0, %v4040
        %4042 = vmatmul.f32.gmra.mxu0 %v3536
        %v4043 = vpop.f32.mrf.mxu0
        %v4044 = vadd.f32 0.0, %v4043
        %4045 = vmatmul.f32.gmra.mxu0 %v3538
        %v4046 = vpop.f32.mrf.mxu0
        %v4047 = vadd.f32 0.0, %v4046
        %4048 = vmatmul.f32.gmra.mxu0 %v3540
        %v4049 = vpop.f32.mrf.mxu0
        %v4050 = vadd.f32 0.0, %v4049
        %4051 = vmatmul.f32.gmra.mxu0 %v3542
        %v4052 = vpop.f32.mrf.mxu0
        %v4053 = vadd.f32 0.0, %v4052
        %4054 = vmatmul.f32.gmra.mxu0 %v3544
        %v4055 = vpop.f32.mrf.mxu0
        %v4056 = vadd.f32 0.0, %v4055
        %4057 = vmatmul.f32.gmra.mxu0 %v3546
        %v4058 = vpop.f32.mrf.mxu0
        %v4059 = vadd.f32 0.0, %v4058
        %4060 = vmatmul.f32.gmra.mxu0 %v3548
        %v4061 = vpop.f32.mrf.mxu0
        %v4062 = vadd.f32 0.0, %v4061
        %4063 = vmatmul.f32.gmra.mxu0 %v3550
        %v4064 = vpop.f32.mrf.mxu0
        %v4065 = vadd.f32 0.0, %v4064
        %4066 = vmatmul.f32.gmra.mxu0 %v3552
        %v4067 = vpop.f32.mrf.mxu0
        %v4068 = vadd.f32 0.0, %v4067
        %4069 = vmatmul.f32.gmra.mxu0 %v3554
        %v4070 = vpop.f32.mrf.mxu0
        %v4071 = vadd.f32 0.0, %v4070
        %4072 = vmatmul.f32.gmra.mxu0 %v3556
        %v4073 = vpop.f32.mrf.mxu0
        %v4074 = vadd.f32 0.0, %v4073
        %4075 = vmatmul.f32.gmra.mxu0 %v3558
        %v4076 = vpop.f32.mrf.mxu0
        %v4077 = vadd.f32 0.0, %v4076
        %4078 = vmatmul.f32.gmra.mxu0 %v3560
        %v4079 = vpop.f32.mrf.mxu0
        %v4080 = vadd.f32 0.0, %v4079
        %4081 = vmatmul.f32.gmra.mxu0 %v3562
        %v4082 = vpop.f32.mrf.mxu0
        %v4083 = vadd.f32 0.0, %v4082
        %4084 = vmatmul.f32.gmra.mxu0 %v3564
        %v4085 = vpop.f32.mrf.mxu0
        %v4086 = vadd.f32 0.0, %v4085
        %4087 = vmatmul.f32.gmra.mxu0 %v3566
        %v4088 = vpop.f32.mrf.mxu0
        %v4089 = vadd.f32 0.0, %v4088
        %4090 = vmatmul.f32.gmra.mxu0 %v3568
        %v4091 = vpop.f32.mrf.mxu0
        %v4092 = vadd.f32 0.0, %v4091
        %4093 = vmatmul.f32.gmra.mxu0 %v3570
        %v4094 = vpop.f32.mrf.mxu0
        %v4095 = vadd.f32 0.0, %v4094
        %4096 = vmatmul.f32.gmra.mxu0 %v3572
        %v4097 = vpop.f32.mrf.mxu0
        %v4098 = vadd.f32 0.0, %v4097
        %4099 = vmatmul.f32.gmra.mxu0 %v3988
        %v4100 = vpop.f32.mrf.mxu0
        %v4101 = vadd.f32 0.0, %v4100
        %4102 = vmatmul.f32.gmra.mxu0 %v3991
        %v4103 = vpop.f32.mrf.mxu0
        %v4104 = vadd.f32 0.0, %v4103
        %4105 = vdwg.mxu0
        %v4106 = vadd.f32 %v3950, %v4011
        %v4107 = vadd.f32 %v3951, %v4014
        %v4108 = vadd.f32 %v3952, %v4017
        %v4109 = vadd.f32 %v3953, %v4020
        %v4110 = vadd.f32 %v3954, %v4023
        %v4111 = vadd.f32 %v3955, %v4026
        %v4112 = vadd.f32 %v3956, %v4029
        %v4113 = vadd.f32 %v3957, %v4032
        %v4114 = vadd.f32 %v3958, %v4035
        %v4115 = vadd.f32 %v3959, %v4038
        %v4116 = vadd.f32 %v3960, %v4041
        %v4117 = vadd.f32 %v3961, %v4044
        %v4118 = vadd.f32 %v3962, %v4047
        %v4119 = vadd.f32 %v3963, %v4050
        %v4120 = vadd.f32 %v3964, %v4053
        %v4121 = vadd.f32 %v3965, %v4056
        %v4122 = vadd.f32 %v3966, %v4059
        %v4123 = vadd.f32 %v3967, %v4062
        %v4124 = vadd.f32 %v3968, %v4065
        %v4125 = vadd.f32 %v3969, %v4068
        %v4126 = vadd.f32 %v3970, %v4071
        %v4127 = vadd.f32 %v3971, %v4074
        %v4128 = vadd.f32 %v3972, %v4077
        %v4129 = vadd.f32 %v3973, %v4080
        %v4130 = vadd.f32 %v3974, %v4083
        %v4131 = vadd.f32 %v3975, %v4086
        %v4132 = vadd.f32 %v3976, %v4089
        %v4133 = vadd.f32 %v3977, %v4092
        %v4134 = vadd.f32 %v3978, %v4095
        %v4135 = vadd.f32 %v3979, %v4098
        %v4136 = vadd.f32 %v3980, %v4101
        %v4137 = vadd.f32 %v3981, %v4104
        %v4139 = vrot.slane %v3189, 1
        %v4140 = vrot.slane %v3190, 1
        %v4141 = vsel %vm3247, %v4139, %v4140
        %v4142 = vrot.slane %v3191, 1
        %v4143 = vsel %vm3247, %v4140, %v4142
        %s4144 = scalar_lea.vmem %s7, 128
        %v4145 = vld [vmem:[%s4144] sm:$0xff]
        %v4146 = vld [vmem:[%s4144 + $0x8] sm:$0xff]
        %v4147 = vld [vmem:[%s4144 + $0x10] sm:$0xff]
        %v4148 = vld [vmem:[%s4144 + $0x18] sm:$0xff]
        %v4149 = vsel %vm1031, %v4141, 0
        %v4151 = vsel %vm1031, %v4143, 0
        %4153 = vmatpush.msra.mxu0 0.0
        %4154 = vmatpush.msra.mxu0 0.0
        %4155 = vmatpush.msra.mxu0 0.0
        %4156 = vmatpush.msra.mxu0 0.0
        %4157 = vmatpush.msra.mxu0 0.0
        %4158 = vmatpush.msra.mxu0 0.0
        %4159 = vmatpush.msra.mxu0 0.0
        %4160 = vmatpush.msra.mxu0 0.0
        %4161 = vmatpush.msra.mxu0 0.0
        %4162 = vmatpush.msra.mxu0 0.0
        %4163 = vmatpush.msra.mxu0 0.0
        %4164 = vmatpush.msra.mxu0 0.0
        %4165 = vmatpush.msra.mxu0 %v4148
        %4166 = vmatpush.msra.mxu0 %v4147
        %4167 = vmatpush.msra.mxu0 %v4146
        %4168 = vmatpush.msra.mxu0 %v4145
        %4169 = vmatmul.f32.gmra.mxu0 %v3337
        %v4170 = vpop.f32.mrf.mxu0
        %v4171 = vadd.f32 0.0, %v4170
        %4172 = vmatmul.f32.gmra.mxu0 %v3339
        %v4173 = vpop.f32.mrf.mxu0
        %v4174 = vadd.f32 0.0, %v4173
        %4175 = vmatmul.f32.gmra.mxu0 %v3341
        %v4176 = vpop.f32.mrf.mxu0
        %v4177 = vadd.f32 0.0, %v4176
        %4178 = vmatmul.f32.gmra.mxu0 %v3343
        %v4179 = vpop.f32.mrf.mxu0
        %v4180 = vadd.f32 0.0, %v4179
        %4181 = vmatmul.f32.gmra.mxu0 %v3345
        %v4182 = vpop.f32.mrf.mxu0
        %v4183 = vadd.f32 0.0, %v4182
        %4184 = vmatmul.f32.gmra.mxu0 %v3347
        %v4185 = vpop.f32.mrf.mxu0
        %v4186 = vadd.f32 0.0, %v4185
        %4187 = vmatmul.f32.gmra.mxu0 %v3349
        %v4188 = vpop.f32.mrf.mxu0
        %v4189 = vadd.f32 0.0, %v4188
        %4190 = vmatmul.f32.gmra.mxu0 %v3351
        %v4191 = vpop.f32.mrf.mxu0
        %v4192 = vadd.f32 0.0, %v4191
        %4193 = vmatmul.f32.gmra.mxu0 %v3353
        %v4194 = vpop.f32.mrf.mxu0
        %v4195 = vadd.f32 0.0, %v4194
        %4196 = vmatmul.f32.gmra.mxu0 %v3355
        %v4197 = vpop.f32.mrf.mxu0
        %v4198 = vadd.f32 0.0, %v4197
        %4199 = vmatmul.f32.gmra.mxu0 %v3357
        %v4200 = vpop.f32.mrf.mxu0
        %v4201 = vadd.f32 0.0, %v4200
        %4202 = vmatmul.f32.gmra.mxu0 %v3359
        %v4203 = vpop.f32.mrf.mxu0
        %v4204 = vadd.f32 0.0, %v4203
        %4205 = vmatmul.f32.gmra.mxu0 %v3361
        %v4206 = vpop.f32.mrf.mxu0
        %v4207 = vadd.f32 0.0, %v4206
        %4208 = vmatmul.f32.gmra.mxu0 %v3363
        %v4209 = vpop.f32.mrf.mxu0
        %v4210 = vadd.f32 0.0, %v4209
        %4211 = vmatmul.f32.gmra.mxu0 %v3365
        %v4212 = vpop.f32.mrf.mxu0
        %v4213 = vadd.f32 0.0, %v4212
        %4214 = vmatmul.f32.gmra.mxu0 %v3367
        %v4215 = vpop.f32.mrf.mxu0
        %v4216 = vadd.f32 0.0, %v4215
        %4217 = vmatmul.f32.gmra.mxu0 %v3369
        %v4218 = vpop.f32.mrf.mxu0
        %v4219 = vadd.f32 0.0, %v4218
        %4220 = vmatmul.f32.gmra.mxu0 %v3371
        %v4221 = vpop.f32.mrf.mxu0
        %v4222 = vadd.f32 0.0, %v4221
        %4223 = vmatmul.f32.gmra.mxu0 %v3373
        %v4224 = vpop.f32.mrf.mxu0
        %v4225 = vadd.f32 0.0, %v4224
        %4226 = vmatmul.f32.gmra.mxu0 %v3375
        %v4227 = vpop.f32.mrf.mxu0
        %v4228 = vadd.f32 0.0, %v4227
        %4229 = vmatmul.f32.gmra.mxu0 %v3377
        %v4230 = vpop.f32.mrf.mxu0
        %v4231 = vadd.f32 0.0, %v4230
        %4232 = vmatmul.f32.gmra.mxu0 %v3379
        %v4233 = vpop.f32.mrf.mxu0
        %v4234 = vadd.f32 0.0, %v4233
        %4235 = vmatmul.f32.gmra.mxu0 %v3381
        %v4236 = vpop.f32.mrf.mxu0
        %v4237 = vadd.f32 0.0, %v4236
        %4238 = vmatmul.f32.gmra.mxu0 %v3383
        %v4239 = vpop.f32.mrf.mxu0
        %v4240 = vadd.f32 0.0, %v4239
        %4241 = vmatmul.f32.gmra.mxu0 %v3385
        %v4242 = vpop.f32.mrf.mxu0
        %v4243 = vadd.f32 0.0, %v4242
        %4244 = vmatmul.f32.gmra.mxu0 %v3387
        %v4245 = vpop.f32.mrf.mxu0
        %v4246 = vadd.f32 0.0, %v4245
        %4247 = vmatmul.f32.gmra.mxu0 %v3389
        %v4248 = vpop.f32.mrf.mxu0
        %v4249 = vadd.f32 0.0, %v4248
        %4250 = vmatmul.f32.gmra.mxu0 %v3391
        %v4251 = vpop.f32.mrf.mxu0
        %v4252 = vadd.f32 0.0, %v4251
        %4253 = vmatmul.f32.gmra.mxu0 %v3393
        %v4254 = vpop.f32.mrf.mxu0
        %v4255 = vadd.f32 0.0, %v4254
        %4256 = vmatmul.f32.gmra.mxu0 %v3395
        %v4257 = vpop.f32.mrf.mxu0
        %v4258 = vadd.f32 0.0, %v4257
        %4259 = vmatmul.f32.gmra.mxu0 %v4149
        %v4260 = vpop.f32.mrf.mxu0
        %v4261 = vadd.f32 0.0, %v4260
        %4262 = vmatmul.f32.gmra.mxu0 %v4151
        %v4263 = vpop.f32.mrf.mxu0
        %v4264 = vadd.f32 0.0, %v4263
        %4265 = vdwg.mxu0
        %v4266 = vadd.f32 %v4106, %v4171
        %v4267 = vadd.f32 %v4107, %v4174
        %v4268 = vadd.f32 %v4108, %v4177
        %v4269 = vadd.f32 %v4109, %v4180
        %v4270 = vadd.f32 %v4110, %v4183
        %v4271 = vadd.f32 %v4111, %v4186
        %v4272 = vadd.f32 %v4112, %v4189
        %v4273 = vadd.f32 %v4113, %v4192
        %v4274 = vadd.f32 %v4114, %v4195
        %v4275 = vadd.f32 %v4115, %v4198
        %v4276 = vadd.f32 %v4116, %v4201
        %v4277 = vadd.f32 %v4117, %v4204
        %v4278 = vadd.f32 %v4118, %v4207
        %v4279 = vadd.f32 %v4119, %v4210
        %v4280 = vadd.f32 %v4120, %v4213
        %v4281 = vadd.f32 %v4121, %v4216
        %v4282 = vadd.f32 %v4122, %v4219
        %v4283 = vadd.f32 %v4123, %v4222
        %v4284 = vadd.f32 %v4124, %v4225
        %v4285 = vadd.f32 %v4125, %v4228
        %v4286 = vadd.f32 %v4126, %v4231
        %v4287 = vadd.f32 %v4127, %v4234
        %v4288 = vadd.f32 %v4128, %v4237
        %v4289 = vadd.f32 %v4129, %v4240
        %v4290 = vadd.f32 %v4130, %v4243
        %v4291 = vadd.f32 %v4131, %v4246
        %v4292 = vadd.f32 %v4132, %v4249
        %v4293 = vadd.f32 %v4133, %v4252
        %v4294 = vadd.f32 %v4134, %v4255
        %v4295 = vadd.f32 %v4135, %v4258
        %v4296 = vadd.f32 %v4136, %v4261
        %v4297 = vadd.f32 %v4137, %v4264
        %v4298 = vrot.slane %v3189, 2
        %v4299 = vrot.slane %v3190, 2
        %v4300 = vsel %vm3687, %v4298, %v4299
        %v4301 = vrot.slane %v3191, 2
        %v4302 = vsel %vm3687, %v4299, %v4301
        %s4303 = scalar_lea.vmem %s7, 160
        %v4304 = vld [vmem:[%s4303] sm:$0xff]
        %v4305 = vld [vmem:[%s4303 + $0x8] sm:$0xff]
        %v4306 = vld [vmem:[%s4303 + $0x10] sm:$0xff]
        %v4307 = vld [vmem:[%s4303 + $0x18] sm:$0xff]
        %v4308 = vsel %vm1031, %v4300, 0
        %v4310 = vsel %vm1031, %v4302, 0
        %4312 = vmatpush.msra.mxu0 0.0
        %4313 = vmatpush.msra.mxu0 0.0
        %4314 = vmatpush.msra.mxu0 0.0
        %4315 = vmatpush.msra.mxu0 0.0
        %4316 = vmatpush.msra.mxu0 0.0
        %4317 = vmatpush.msra.mxu0 0.0
        %4318 = vmatpush.msra.mxu0 0.0
        %4319 = vmatpush.msra.mxu0 0.0
        %4320 = vmatpush.msra.mxu0 0.0
        %4321 = vmatpush.msra.mxu0 0.0
        %4322 = vmatpush.msra.mxu0 0.0
        %4323 = vmatpush.msra.mxu0 0.0
        %4324 = vmatpush.msra.mxu0 %v4307
        %4325 = vmatpush.msra.mxu0 %v4306
        %4326 = vmatpush.msra.mxu0 %v4305
        %4327 = vmatpush.msra.mxu0 %v4304
        %4328 = vmatmul.f32.gmra.mxu0 %v3777
        %v4329 = vpop.f32.mrf.mxu0
        %v4330 = vadd.f32 0.0, %v4329
        %4331 = vmatmul.f32.gmra.mxu0 %v3779
        %v4332 = vpop.f32.mrf.mxu0
        %v4333 = vadd.f32 0.0, %v4332
        %4334 = vmatmul.f32.gmra.mxu0 %v3781
        %v4335 = vpop.f32.mrf.mxu0
        %v4336 = vadd.f32 0.0, %v4335
        %4337 = vmatmul.f32.gmra.mxu0 %v3783
        %v4338 = vpop.f32.mrf.mxu0
        %v4339 = vadd.f32 0.0, %v4338
        %4340 = vmatmul.f32.gmra.mxu0 %v3785
        %v4341 = vpop.f32.mrf.mxu0
        %v4342 = vadd.f32 0.0, %v4341
        %4343 = vmatmul.f32.gmra.mxu0 %v3787
        %v4344 = vpop.f32.mrf.mxu0
        %v4345 = vadd.f32 0.0, %v4344
        %4346 = vmatmul.f32.gmra.mxu0 %v3789
        %v4347 = vpop.f32.mrf.mxu0
        %v4348 = vadd.f32 0.0, %v4347
        %4349 = vmatmul.f32.gmra.mxu0 %v3791
        %v4350 = vpop.f32.mrf.mxu0
        %v4351 = vadd.f32 0.0, %v4350
        %4352 = vmatmul.f32.gmra.mxu0 %v3793
        %v4353 = vpop.f32.mrf.mxu0
        %v4354 = vadd.f32 0.0, %v4353
        %4355 = vmatmul.f32.gmra.mxu0 %v3795
        %v4356 = vpop.f32.mrf.mxu0
        %v4357 = vadd.f32 0.0, %v4356
        %4358 = vmatmul.f32.gmra.mxu0 %v3797
        %v4359 = vpop.f32.mrf.mxu0
        %v4360 = vadd.f32 0.0, %v4359
        %4361 = vmatmul.f32.gmra.mxu0 %v3799
        %v4362 = vpop.f32.mrf.mxu0
        %v4363 = vadd.f32 0.0, %v4362
        %4364 = vmatmul.f32.gmra.mxu0 %v3801
        %v4365 = vpop.f32.mrf.mxu0
        %v4366 = vadd.f32 0.0, %v4365
        %4367 = vmatmul.f32.gmra.mxu0 %v3803
        %v4368 = vpop.f32.mrf.mxu0
        %v4369 = vadd.f32 0.0, %v4368
        %4370 = vmatmul.f32.gmra.mxu0 %v3805
        %v4371 = vpop.f32.mrf.mxu0
        %v4372 = vadd.f32 0.0, %v4371
        %4373 = vmatmul.f32.gmra.mxu0 %v3807
        %v4374 = vpop.f32.mrf.mxu0
        %v4375 = vadd.f32 0.0, %v4374
        %4376 = vmatmul.f32.gmra.mxu0 %v3809
        %v4377 = vpop.f32.mrf.mxu0
        %v4378 = vadd.f32 0.0, %v4377
        %4379 = vmatmul.f32.gmra.mxu0 %v3811
        %v4380 = vpop.f32.mrf.mxu0
        %v4381 = vadd.f32 0.0, %v4380
        %4382 = vmatmul.f32.gmra.mxu0 %v3813
        %v4383 = vpop.f32.mrf.mxu0
        %v4384 = vadd.f32 0.0, %v4383
        %4385 = vmatmul.f32.gmra.mxu0 %v3815
        %v4386 = vpop.f32.mrf.mxu0
        %v4387 = vadd.f32 0.0, %v4386
        %4388 = vmatmul.f32.gmra.mxu0 %v3817
        %v4389 = vpop.f32.mrf.mxu0
        %v4390 = vadd.f32 0.0, %v4389
        %4391 = vmatmul.f32.gmra.mxu0 %v3819
        %v4392 = vpop.f32.mrf.mxu0
        %v4393 = vadd.f32 0.0, %v4392
        %4394 = vmatmul.f32.gmra.mxu0 %v3821
        %v4395 = vpop.f32.mrf.mxu0
        %v4396 = vadd.f32 0.0, %v4395
        %4397 = vmatmul.f32.gmra.mxu0 %v3823
        %v4398 = vpop.f32.mrf.mxu0
        %v4399 = vadd.f32 0.0, %v4398
        %4400 = vmatmul.f32.gmra.mxu0 %v3825
        %v4401 = vpop.f32.mrf.mxu0
        %v4402 = vadd.f32 0.0, %v4401
        %4403 = vmatmul.f32.gmra.mxu0 %v3827
        %v4404 = vpop.f32.mrf.mxu0
        %v4405 = vadd.f32 0.0, %v4404
        %4406 = vmatmul.f32.gmra.mxu0 %v3829
        %v4407 = vpop.f32.mrf.mxu0
        %v4408 = vadd.f32 0.0, %v4407
        %4409 = vmatmul.f32.gmra.mxu0 %v3831
        %v4410 = vpop.f32.mrf.mxu0
        %v4411 = vadd.f32 0.0, %v4410
        %4412 = vmatmul.f32.gmra.mxu0 %v3833
        %v4413 = vpop.f32.mrf.mxu0
        %v4414 = vadd.f32 0.0, %v4413
        %4415 = vmatmul.f32.gmra.mxu0 %v3835
        %v4416 = vpop.f32.mrf.mxu0
        %v4417 = vadd.f32 0.0, %v4416
        %4418 = vmatmul.f32.gmra.mxu0 %v4308
        %v4419 = vpop.f32.mrf.mxu0
        %v4420 = vadd.f32 0.0, %v4419
        %4421 = vmatmul.f32.gmra.mxu0 %v4310
        %v4422 = vpop.f32.mrf.mxu0
        %v4423 = vadd.f32 0.0, %v4422
        %4424 = vdwg.mxu0
        %v4425 = vadd.f32 %v4266, %v4330
        %v4426 = vadd.f32 %v4267, %v4333
        %v4427 = vadd.f32 %v4268, %v4336
        %v4428 = vadd.f32 %v4269, %v4339
        %v4429 = vadd.f32 %v4270, %v4342
        %v4430 = vadd.f32 %v4271, %v4345
        %v4431 = vadd.f32 %v4272, %v4348
        %v4432 = vadd.f32 %v4273, %v4351
        %v4433 = vadd.f32 %v4274, %v4354
        %v4434 = vadd.f32 %v4275, %v4357
        %v4435 = vadd.f32 %v4276, %v4360
        %v4436 = vadd.f32 %v4277, %v4363
        %v4437 = vadd.f32 %v4278, %v4366
        %v4438 = vadd.f32 %v4279, %v4369
        %v4439 = vadd.f32 %v4280, %v4372
        %v4440 = vadd.f32 %v4281, %v4375
        %v4441 = vadd.f32 %v4282, %v4378
        %v4442 = vadd.f32 %v4283, %v4381
        %v4443 = vadd.f32 %v4284, %v4384
        %v4444 = vadd.f32 %v4285, %v4387
        %v4445 = vadd.f32 %v4286, %v4390
        %v4446 = vadd.f32 %v4287, %v4393
        %v4447 = vadd.f32 %v4288, %v4396
        %v4448 = vadd.f32 %v4289, %v4399
        %v4449 = vadd.f32 %v4290, %v4402
        %v4450 = vadd.f32 %v4291, %v4405
        %v4451 = vadd.f32 %v4292, %v4408
        %v4452 = vadd.f32 %v4293, %v4411
        %v4453 = vadd.f32 %v4294, %v4414
        %v4454 = vadd.f32 %v4295, %v4417
        %v4455 = vadd.f32 %v4296, %v4420
        %v4456 = vadd.f32 %v4297, %v4423
        %s4457 = scalar_lea.vmem %s7, 192
        %v4458 = vld [vmem:[%s4457] sm:$0xff]
        %v4459 = vld [vmem:[%s4457 + $0x8] sm:$0xff]
        %v4460 = vld [vmem:[%s4457 + $0x10] sm:$0xff]
        %v4461 = vld [vmem:[%s4457 + $0x18] sm:$0xff]
        %v4463 = vsel %vm1031, %v3192, 0
        %v4466 = vsel %vm1031, %v3193, 0
        %4468 = vmatpush.msra.mxu0 0.0
        %4469 = vmatpush.msra.mxu0 0.0
        %4470 = vmatpush.msra.mxu0 0.0
        %4471 = vmatpush.msra.mxu0 0.0
        %4472 = vmatpush.msra.mxu0 0.0
        %4473 = vmatpush.msra.mxu0 0.0
        %4474 = vmatpush.msra.mxu0 0.0
        %4475 = vmatpush.msra.mxu0 0.0
        %4476 = vmatpush.msra.mxu0 0.0
        %4477 = vmatpush.msra.mxu0 0.0
        %4478 = vmatpush.msra.mxu0 0.0
        %4479 = vmatpush.msra.mxu0 0.0
        %4480 = vmatpush.msra.mxu0 %v4461
        %4481 = vmatpush.msra.mxu0 %v4460
        %4482 = vmatpush.msra.mxu0 %v4459
        %4483 = vmatpush.msra.mxu0 %v4458
        %4484 = vmatmul.f32.gmra.mxu0 %v3518
        %v4485 = vpop.f32.mrf.mxu0
        %v4486 = vadd.f32 0.0, %v4485
        %4487 = vmatmul.f32.gmra.mxu0 %v3520
        %v4488 = vpop.f32.mrf.mxu0
        %v4489 = vadd.f32 0.0, %v4488
        %4490 = vmatmul.f32.gmra.mxu0 %v3522
        %v4491 = vpop.f32.mrf.mxu0
        %v4492 = vadd.f32 0.0, %v4491
        %4493 = vmatmul.f32.gmra.mxu0 %v3524
        %v4494 = vpop.f32.mrf.mxu0
        %v4495 = vadd.f32 0.0, %v4494
        %4496 = vmatmul.f32.gmra.mxu0 %v3526
        %v4497 = vpop.f32.mrf.mxu0
        %v4498 = vadd.f32 0.0, %v4497
        %4499 = vmatmul.f32.gmra.mxu0 %v3528
        %v4500 = vpop.f32.mrf.mxu0
        %v4501 = vadd.f32 0.0, %v4500
        %4502 = vmatmul.f32.gmra.mxu0 %v3530
        %v4503 = vpop.f32.mrf.mxu0
        %v4504 = vadd.f32 0.0, %v4503
        %4505 = vmatmul.f32.gmra.mxu0 %v3532
        %v4506 = vpop.f32.mrf.mxu0
        %v4507 = vadd.f32 0.0, %v4506
        %4508 = vmatmul.f32.gmra.mxu0 %v3534
        %v4509 = vpop.f32.mrf.mxu0
        %v4510 = vadd.f32 0.0, %v4509
        %4511 = vmatmul.f32.gmra.mxu0 %v3536
        %v4512 = vpop.f32.mrf.mxu0
        %v4513 = vadd.f32 0.0, %v4512
        %4514 = vmatmul.f32.gmra.mxu0 %v3538
        %v4515 = vpop.f32.mrf.mxu0
        %v4516 = vadd.f32 0.0, %v4515
        %4517 = vmatmul.f32.gmra.mxu0 %v3540
        %v4518 = vpop.f32.mrf.mxu0
        %v4519 = vadd.f32 0.0, %v4518
        %4520 = vmatmul.f32.gmra.mxu0 %v3542
        %v4521 = vpop.f32.mrf.mxu0
        %v4522 = vadd.f32 0.0, %v4521
        %4523 = vmatmul.f32.gmra.mxu0 %v3544
        %v4524 = vpop.f32.mrf.mxu0
        %v4525 = vadd.f32 0.0, %v4524
        %4526 = vmatmul.f32.gmra.mxu0 %v3546
        %v4527 = vpop.f32.mrf.mxu0
        %v4528 = vadd.f32 0.0, %v4527
        %4529 = vmatmul.f32.gmra.mxu0 %v3548
        %v4530 = vpop.f32.mrf.mxu0
        %v4531 = vadd.f32 0.0, %v4530
        %4532 = vmatmul.f32.gmra.mxu0 %v3550
        %v4533 = vpop.f32.mrf.mxu0
        %v4534 = vadd.f32 0.0, %v4533
        %4535 = vmatmul.f32.gmra.mxu0 %v3552
        %v4536 = vpop.f32.mrf.mxu0
        %v4537 = vadd.f32 0.0, %v4536
        %4538 = vmatmul.f32.gmra.mxu0 %v3554
        %v4539 = vpop.f32.mrf.mxu0
        %v4540 = vadd.f32 0.0, %v4539
        %4541 = vmatmul.f32.gmra.mxu0 %v3556
        %v4542 = vpop.f32.mrf.mxu0
        %v4543 = vadd.f32 0.0, %v4542
        %4544 = vmatmul.f32.gmra.mxu0 %v3558
        %v4545 = vpop.f32.mrf.mxu0
        %v4546 = vadd.f32 0.0, %v4545
        %4547 = vmatmul.f32.gmra.mxu0 %v3560
        %v4548 = vpop.f32.mrf.mxu0
        %v4549 = vadd.f32 0.0, %v4548
        %4550 = vmatmul.f32.gmra.mxu0 %v3562
        %v4551 = vpop.f32.mrf.mxu0
        %v4552 = vadd.f32 0.0, %v4551
        %4553 = vmatmul.f32.gmra.mxu0 %v3564
        %v4554 = vpop.f32.mrf.mxu0
        %v4555 = vadd.f32 0.0, %v4554
        %4556 = vmatmul.f32.gmra.mxu0 %v3566
        %v4557 = vpop.f32.mrf.mxu0
        %v4558 = vadd.f32 0.0, %v4557
        %4559 = vmatmul.f32.gmra.mxu0 %v3568
        %v4560 = vpop.f32.mrf.mxu0
        %v4561 = vadd.f32 0.0, %v4560
        %4562 = vmatmul.f32.gmra.mxu0 %v3570
        %v4563 = vpop.f32.mrf.mxu0
        %v4564 = vadd.f32 0.0, %v4563
        %4565 = vmatmul.f32.gmra.mxu0 %v3572
        %v4566 = vpop.f32.mrf.mxu0
        %v4567 = vadd.f32 0.0, %v4566
        %4568 = vmatmul.f32.gmra.mxu0 %v3988
        %v4569 = vpop.f32.mrf.mxu0
        %v4570 = vadd.f32 0.0, %v4569
        %4571 = vmatmul.f32.gmra.mxu0 %v3991
        %v4572 = vpop.f32.mrf.mxu0
        %v4573 = vadd.f32 0.0, %v4572
        %4574 = vmatmul.f32.gmra.mxu0 %v4463
        %v4575 = vpop.f32.mrf.mxu0
        %v4576 = vadd.f32 0.0, %v4575
        %4577 = vmatmul.f32.gmra.mxu0 %v4466
        %v4578 = vpop.f32.mrf.mxu0
        %v4579 = vadd.f32 0.0, %v4578
        %4580 = vdwg.mxu0
        %v4581 = vadd.f32 %v4425, %v4486
        %v4582 = vadd.f32 %v4426, %v4489
        %v4583 = vadd.f32 %v4427, %v4492
        %v4584 = vadd.f32 %v4428, %v4495
        %v4585 = vadd.f32 %v4429, %v4498
        %v4586 = vadd.f32 %v4430, %v4501
        %v4587 = vadd.f32 %v4431, %v4504
        %v4588 = vadd.f32 %v4432, %v4507
        %v4589 = vadd.f32 %v4433, %v4510
        %v4590 = vadd.f32 %v4434, %v4513
        %v4591 = vadd.f32 %v4435, %v4516
        %v4592 = vadd.f32 %v4436, %v4519
        %v4593 = vadd.f32 %v4437, %v4522
        %v4594 = vadd.f32 %v4438, %v4525
        %v4595 = vadd.f32 %v4439, %v4528
        %v4596 = vadd.f32 %v4440, %v4531
        %v4597 = vadd.f32 %v4441, %v4534
        %v4598 = vadd.f32 %v4442, %v4537
        %v4599 = vadd.f32 %v4443, %v4540
        %v4600 = vadd.f32 %v4444, %v4543
        %v4601 = vadd.f32 %v4445, %v4546
        %v4602 = vadd.f32 %v4446, %v4549
        %v4603 = vadd.f32 %v4447, %v4552
        %v4604 = vadd.f32 %v4448, %v4555
        %v4605 = vadd.f32 %v4449, %v4558
        %v4606 = vadd.f32 %v4450, %v4561
        %v4607 = vadd.f32 %v4451, %v4564
        %v4608 = vadd.f32 %v4452, %v4567
        %v4609 = vadd.f32 %v4453, %v4570
        %v4610 = vadd.f32 %v4454, %v4573
        %v4611 = vadd.f32 %v4455, %v4576
        %v4612 = vadd.f32 %v4456, %v4579
        %v4614 = vrot.slane %v3192, 1
        %v4615 = vrot.slane %v3193, 1
        %v4616 = vsel %vm3247, %v4614, %v4615
        %v4617 = vrot.slane %v3194, 1
        %v4618 = vsel %vm3247, %v4615, %v4617
        %s4619 = scalar_lea.vmem %s7, 224
        %v4620 = vld [vmem:[%s4619] sm:$0xff]
        %v4621 = vld [vmem:[%s4619 + $0x8] sm:$0xff]
        %v4622 = vld [vmem:[%s4619 + $0x10] sm:$0xff]
        %v4623 = vld [vmem:[%s4619 + $0x18] sm:$0xff]
        %v4624 = vsel %vm1031, %v4616, 0
        %v4626 = vsel %vm1031, %v4618, 0
        %4628 = vmatpush.msra.mxu0 0.0
        %4629 = vmatpush.msra.mxu0 0.0
        %4630 = vmatpush.msra.mxu0 0.0
        %4631 = vmatpush.msra.mxu0 0.0
        %4632 = vmatpush.msra.mxu0 0.0
        %4633 = vmatpush.msra.mxu0 0.0
        %4634 = vmatpush.msra.mxu0 0.0
        %4635 = vmatpush.msra.mxu0 0.0
        %4636 = vmatpush.msra.mxu0 0.0
        %4637 = vmatpush.msra.mxu0 0.0
        %4638 = vmatpush.msra.mxu0 0.0
        %4639 = vmatpush.msra.mxu0 0.0
        %4640 = vmatpush.msra.mxu0 %v4623
        %4641 = vmatpush.msra.mxu0 %v4622
        %4642 = vmatpush.msra.mxu0 %v4621
        %4643 = vmatpush.msra.mxu0 %v4620
        %4644 = vmatmul.f32.gmra.mxu0 %v3341
        %v4645 = vpop.f32.mrf.mxu0
        %v4646 = vadd.f32 0.0, %v4645
        %4647 = vmatmul.f32.gmra.mxu0 %v3343
        %v4648 = vpop.f32.mrf.mxu0
        %v4649 = vadd.f32 0.0, %v4648
        %4650 = vmatmul.f32.gmra.mxu0 %v3345
        %v4651 = vpop.f32.mrf.mxu0
        %v4652 = vadd.f32 0.0, %v4651
        %4653 = vmatmul.f32.gmra.mxu0 %v3347
        %v4654 = vpop.f32.mrf.mxu0
        %v4655 = vadd.f32 0.0, %v4654
        %4656 = vmatmul.f32.gmra.mxu0 %v3349
        %v4657 = vpop.f32.mrf.mxu0
        %v4658 = vadd.f32 0.0, %v4657
        %4659 = vmatmul.f32.gmra.mxu0 %v3351
        %v4660 = vpop.f32.mrf.mxu0
        %v4661 = vadd.f32 0.0, %v4660
        %4662 = vmatmul.f32.gmra.mxu0 %v3353
        %v4663 = vpop.f32.mrf.mxu0
        %v4664 = vadd.f32 0.0, %v4663
        %4665 = vmatmul.f32.gmra.mxu0 %v3355
        %v4666 = vpop.f32.mrf.mxu0
        %v4667 = vadd.f32 0.0, %v4666
        %4668 = vmatmul.f32.gmra.mxu0 %v3357
        %v4669 = vpop.f32.mrf.mxu0
        %v4670 = vadd.f32 0.0, %v4669
        %4671 = vmatmul.f32.gmra.mxu0 %v3359
        %v4672 = vpop.f32.mrf.mxu0
        %v4673 = vadd.f32 0.0, %v4672
        %4674 = vmatmul.f32.gmra.mxu0 %v3361
        %v4675 = vpop.f32.mrf.mxu0
        %v4676 = vadd.f32 0.0, %v4675
        %4677 = vmatmul.f32.gmra.mxu0 %v3363
        %v4678 = vpop.f32.mrf.mxu0
        %v4679 = vadd.f32 0.0, %v4678
        %4680 = vmatmul.f32.gmra.mxu0 %v3365
        %v4681 = vpop.f32.mrf.mxu0
        %v4682 = vadd.f32 0.0, %v4681
        %4683 = vmatmul.f32.gmra.mxu0 %v3367
        %v4684 = vpop.f32.mrf.mxu0
        %v4685 = vadd.f32 0.0, %v4684
        %4686 = vmatmul.f32.gmra.mxu0 %v3369
        %v4687 = vpop.f32.mrf.mxu0
        %v4688 = vadd.f32 0.0, %v4687
        %4689 = vmatmul.f32.gmra.mxu0 %v3371
        %v4690 = vpop.f32.mrf.mxu0
        %v4691 = vadd.f32 0.0, %v4690
        %4692 = vmatmul.f32.gmra.mxu0 %v3373
        %v4693 = vpop.f32.mrf.mxu0
        %v4694 = vadd.f32 0.0, %v4693
        %4695 = vmatmul.f32.gmra.mxu0 %v3375
        %v4696 = vpop.f32.mrf.mxu0
        %v4697 = vadd.f32 0.0, %v4696
        %4698 = vmatmul.f32.gmra.mxu0 %v3377
        %v4699 = vpop.f32.mrf.mxu0
        %v4700 = vadd.f32 0.0, %v4699
        %4701 = vmatmul.f32.gmra.mxu0 %v3379
        %v4702 = vpop.f32.mrf.mxu0
        %v4703 = vadd.f32 0.0, %v4702
        %4704 = vmatmul.f32.gmra.mxu0 %v3381
        %v4705 = vpop.f32.mrf.mxu0
        %v4706 = vadd.f32 0.0, %v4705
        %4707 = vmatmul.f32.gmra.mxu0 %v3383
        %v4708 = vpop.f32.mrf.mxu0
        %v4709 = vadd.f32 0.0, %v4708
        %4710 = vmatmul.f32.gmra.mxu0 %v3385
        %v4711 = vpop.f32.mrf.mxu0
        %v4712 = vadd.f32 0.0, %v4711
        %4713 = vmatmul.f32.gmra.mxu0 %v3387
        %v4714 = vpop.f32.mrf.mxu0
        %v4715 = vadd.f32 0.0, %v4714
        %4716 = vmatmul.f32.gmra.mxu0 %v3389
        %v4717 = vpop.f32.mrf.mxu0
        %v4718 = vadd.f32 0.0, %v4717
        %4719 = vmatmul.f32.gmra.mxu0 %v3391
        %v4720 = vpop.f32.mrf.mxu0
        %v4721 = vadd.f32 0.0, %v4720
        %4722 = vmatmul.f32.gmra.mxu0 %v3393
        %v4723 = vpop.f32.mrf.mxu0
        %v4724 = vadd.f32 0.0, %v4723
        %4725 = vmatmul.f32.gmra.mxu0 %v3395
        %v4726 = vpop.f32.mrf.mxu0
        %v4727 = vadd.f32 0.0, %v4726
        %4728 = vmatmul.f32.gmra.mxu0 %v4149
        %v4729 = vpop.f32.mrf.mxu0
        %v4730 = vadd.f32 0.0, %v4729
        %4731 = vmatmul.f32.gmra.mxu0 %v4151
        %v4732 = vpop.f32.mrf.mxu0
        %v4733 = vadd.f32 0.0, %v4732
        %4734 = vmatmul.f32.gmra.mxu0 %v4624
        %v4735 = vpop.f32.mrf.mxu0
        %v4736 = vadd.f32 0.0, %v4735
        %4737 = vmatmul.f32.gmra.mxu0 %v4626
        %v4738 = vpop.f32.mrf.mxu0
        %v4739 = vadd.f32 0.0, %v4738
        %4740 = vdwg.mxu0
        %v4741 = vadd.f32 %v4581, %v4646
        %v4742 = vadd.f32 %v4582, %v4649
        %v4743 = vadd.f32 %v4583, %v4652
        %v4744 = vadd.f32 %v4584, %v4655
        %v4745 = vadd.f32 %v4585, %v4658
        %v4746 = vadd.f32 %v4586, %v4661
        %v4747 = vadd.f32 %v4587, %v4664
        %v4748 = vadd.f32 %v4588, %v4667
        %v4749 = vadd.f32 %v4589, %v4670
        %v4750 = vadd.f32 %v4590, %v4673
        %v4751 = vadd.f32 %v4591, %v4676
        %v4752 = vadd.f32 %v4592, %v4679
        %v4753 = vadd.f32 %v4593, %v4682
        %v4754 = vadd.f32 %v4594, %v4685
        %v4755 = vadd.f32 %v4595, %v4688
        %v4756 = vadd.f32 %v4596, %v4691
        %v4757 = vadd.f32 %v4597, %v4694
        %v4758 = vadd.f32 %v4598, %v4697
        %v4759 = vadd.f32 %v4599, %v4700
        %v4760 = vadd.f32 %v4600, %v4703
        %v4761 = vadd.f32 %v4601, %v4706
        %v4762 = vadd.f32 %v4602, %v4709
        %v4763 = vadd.f32 %v4603, %v4712
        %v4764 = vadd.f32 %v4604, %v4715
        %v4765 = vadd.f32 %v4605, %v4718
        %v4766 = vadd.f32 %v4606, %v4721
        %v4767 = vadd.f32 %v4607, %v4724
        %v4768 = vadd.f32 %v4608, %v4727
        %v4769 = vadd.f32 %v4609, %v4730
        %v4770 = vadd.f32 %v4610, %v4733
        %v4771 = vadd.f32 %v4611, %v4736
        %v4772 = vadd.f32 %v4612, %v4739
        %v4773 = vrot.slane %v3192, 2
        %v4774 = vrot.slane %v3193, 2
        %v4775 = vsel %vm3687, %v4773, %v4774
        %v4776 = vrot.slane %v3194, 2
        %v4777 = vsel %vm3687, %v4774, %v4776
        %s4778 = scalar_lea.vmem %s7, 256
        %v4779 = vld [vmem:[%s4778] sm:$0xff]
        %v4780 = vld [vmem:[%s4778 + $0x8] sm:$0xff]
        %v4781 = vld [vmem:[%s4778 + $0x10] sm:$0xff]
        %v4782 = vld [vmem:[%s4778 + $0x18] sm:$0xff]
        %v4783 = vsel %vm1031, %v4775, 0
        %v4785 = vsel %vm1031, %v4777, 0
        %4787 = vmatpush.msra.mxu0 0.0
        %4788 = vmatpush.msra.mxu0 0.0
        %4789 = vmatpush.msra.mxu0 0.0
        %4790 = vmatpush.msra.mxu0 0.0
        %4791 = vmatpush.msra.mxu0 0.0
        %4792 = vmatpush.msra.mxu0 0.0
        %4793 = vmatpush.msra.mxu0 0.0
        %4794 = vmatpush.msra.mxu0 0.0
        %4795 = vmatpush.msra.mxu0 0.0
        %4796 = vmatpush.msra.mxu0 0.0
        %4797 = vmatpush.msra.mxu0 0.0
        %4798 = vmatpush.msra.mxu0 0.0
        %4799 = vmatpush.msra.mxu0 %v4782
        %4800 = vmatpush.msra.mxu0 %v4781
        %4801 = vmatpush.msra.mxu0 %v4780
        %4802 = vmatpush.msra.mxu0 %v4779
        %4803 = vmatmul.f32.gmra.mxu0 %v3781
        %v4804 = vpop.f32.mrf.mxu0
        %v4805 = vadd.f32 0.0, %v4804
        %4806 = vmatmul.f32.gmra.mxu0 %v3783
        %v4807 = vpop.f32.mrf.mxu0
        %v4808 = vadd.f32 0.0, %v4807
        %4809 = vmatmul.f32.gmra.mxu0 %v3785
        %v4810 = vpop.f32.mrf.mxu0
        %v4811 = vadd.f32 0.0, %v4810
        %4812 = vmatmul.f32.gmra.mxu0 %v3787
        %v4813 = vpop.f32.mrf.mxu0
        %v4814 = vadd.f32 0.0, %v4813
        %4815 = vmatmul.f32.gmra.mxu0 %v3789
        %v4816 = vpop.f32.mrf.mxu0
        %v4817 = vadd.f32 0.0, %v4816
        %4818 = vmatmul.f32.gmra.mxu0 %v3791
        %v4819 = vpop.f32.mrf.mxu0
        %v4820 = vadd.f32 0.0, %v4819
        %4821 = vmatmul.f32.gmra.mxu0 %v3793
        %v4822 = vpop.f32.mrf.mxu0
        %v4823 = vadd.f32 0.0, %v4822
        %4824 = vmatmul.f32.gmra.mxu0 %v3795
        %v4825 = vpop.f32.mrf.mxu0
        %v4826 = vadd.f32 0.0, %v4825
        %4827 = vmatmul.f32.gmra.mxu0 %v3797
        %v4828 = vpop.f32.mrf.mxu0
        %v4829 = vadd.f32 0.0, %v4828
        %4830 = vmatmul.f32.gmra.mxu0 %v3799
        %v4831 = vpop.f32.mrf.mxu0
        %v4832 = vadd.f32 0.0, %v4831
        %4833 = vmatmul.f32.gmra.mxu0 %v3801
        %v4834 = vpop.f32.mrf.mxu0
        %v4835 = vadd.f32 0.0, %v4834
        %4836 = vmatmul.f32.gmra.mxu0 %v3803
        %v4837 = vpop.f32.mrf.mxu0
        %v4838 = vadd.f32 0.0, %v4837
        %4839 = vmatmul.f32.gmra.mxu0 %v3805
        %v4840 = vpop.f32.mrf.mxu0
        %v4841 = vadd.f32 0.0, %v4840
        %4842 = vmatmul.f32.gmra.mxu0 %v3807
        %v4843 = vpop.f32.mrf.mxu0
        %v4844 = vadd.f32 0.0, %v4843
        %4845 = vmatmul.f32.gmra.mxu0 %v3809
        %v4846 = vpop.f32.mrf.mxu0
        %v4847 = vadd.f32 0.0, %v4846
        %4848 = vmatmul.f32.gmra.mxu0 %v3811
        %v4849 = vpop.f32.mrf.mxu0
        %v4850 = vadd.f32 0.0, %v4849
        %4851 = vmatmul.f32.gmra.mxu0 %v3813
        %v4852 = vpop.f32.mrf.mxu0
        %v4853 = vadd.f32 0.0, %v4852
        %4854 = vmatmul.f32.gmra.mxu0 %v3815
        %v4855 = vpop.f32.mrf.mxu0
        %v4856 = vadd.f32 0.0, %v4855
        %4857 = vmatmul.f32.gmra.mxu0 %v3817
        %v4858 = vpop.f32.mrf.mxu0
        %v4859 = vadd.f32 0.0, %v4858
        %4860 = vmatmul.f32.gmra.mxu0 %v3819
        %v4861 = vpop.f32.mrf.mxu0
        %v4862 = vadd.f32 0.0, %v4861
        %4863 = vmatmul.f32.gmra.mxu0 %v3821
        %v4864 = vpop.f32.mrf.mxu0
        %v4865 = vadd.f32 0.0, %v4864
        %4866 = vmatmul.f32.gmra.mxu0 %v3823
        %v4867 = vpop.f32.mrf.mxu0
        %v4868 = vadd.f32 0.0, %v4867
        %4869 = vmatmul.f32.gmra.mxu0 %v3825
        %v4870 = vpop.f32.mrf.mxu0
        %v4871 = vadd.f32 0.0, %v4870
        %4872 = vmatmul.f32.gmra.mxu0 %v3827
        %v4873 = vpop.f32.mrf.mxu0
        %v4874 = vadd.f32 0.0, %v4873
        %4875 = vmatmul.f32.gmra.mxu0 %v3829
        %v4876 = vpop.f32.mrf.mxu0
        %v4877 = vadd.f32 0.0, %v4876
        %4878 = vmatmul.f32.gmra.mxu0 %v3831
        %v4879 = vpop.f32.mrf.mxu0
        %v4880 = vadd.f32 0.0, %v4879
        %4881 = vmatmul.f32.gmra.mxu0 %v3833
        %v4882 = vpop.f32.mrf.mxu0
        %v4883 = vadd.f32 0.0, %v4882
        %4884 = vmatmul.f32.gmra.mxu0 %v3835
        %v4885 = vpop.f32.mrf.mxu0
        %v4886 = vadd.f32 0.0, %v4885
        %4887 = vmatmul.f32.gmra.mxu0 %v4308
        %v4888 = vpop.f32.mrf.mxu0
        %v4889 = vadd.f32 0.0, %v4888
        %4890 = vmatmul.f32.gmra.mxu0 %v4310
        %v4891 = vpop.f32.mrf.mxu0
        %v4892 = vadd.f32 0.0, %v4891
        %4893 = vmatmul.f32.gmra.mxu0 %v4783
        %v4894 = vpop.f32.mrf.mxu0
        %v4895 = vadd.f32 0.0, %v4894
        %4896 = vmatmul.f32.gmra.mxu0 %v4785
        %v4897 = vpop.f32.mrf.mxu0
        %v4898 = vadd.f32 0.0, %v4897
        %4899 = vdwg.mxu0
        %v4900 = vadd.f32 %v4741, %v4805
        %v4901 = vadd.f32 %v4742, %v4808
        %v4902 = vadd.f32 %v4743, %v4811
        %v4903 = vadd.f32 %v4744, %v4814
        %v4904 = vadd.f32 %v4745, %v4817
        %v4905 = vadd.f32 %v4746, %v4820
        %v4906 = vadd.f32 %v4747, %v4823
        %v4907 = vadd.f32 %v4748, %v4826
        %v4908 = vadd.f32 %v4749, %v4829
        %v4909 = vadd.f32 %v4750, %v4832
        %v4910 = vadd.f32 %v4751, %v4835
        %v4911 = vadd.f32 %v4752, %v4838
        %v4912 = vadd.f32 %v4753, %v4841
        %v4913 = vadd.f32 %v4754, %v4844
        %v4914 = vadd.f32 %v4755, %v4847
        %v4915 = vadd.f32 %v4756, %v4850
        %v4916 = vadd.f32 %v4757, %v4853
        %v4917 = vadd.f32 %v4758, %v4856
        %v4918 = vadd.f32 %v4759, %v4859
        %v4919 = vadd.f32 %v4760, %v4862
        %v4920 = vadd.f32 %v4761, %v4865
        %v4921 = vadd.f32 %v4762, %v4868
        %v4922 = vadd.f32 %v4763, %v4871
        %v4923 = vadd.f32 %v4764, %v4874
        %v4924 = vadd.f32 %v4765, %v4877
        %v4925 = vadd.f32 %v4766, %v4880
        %v4926 = vadd.f32 %v4767, %v4883
        %v4927 = vadd.f32 %v4768, %v4886
        %v4928 = vadd.f32 %v4769, %v4889
        %v4929 = vadd.f32 %v4770, %v4892
        %v4930 = vadd.f32 %v4771, %v4895
        %v4931 = vadd.f32 %v4772, %v4898
        %v4932 = vld [vmem:[%s8] sm:$0x1]
        %v4934 = vperm.slane %v4932, 0
        %v4936 = vadd.f32 %v4900, %v4934
        %v4937 = vadd.f32 %v4901, %v4934
        %v4938 = vadd.f32 %v4902, %v4934
        %v4939 = vadd.f32 %v4903, %v4934
        %v4940 = vadd.f32 %v4904, %v4934
        %v4941 = vadd.f32 %v4905, %v4934
        %v4942 = vadd.f32 %v4906, %v4934
        %v4943 = vadd.f32 %v4907, %v4934
        %v4944 = vadd.f32 %v4908, %v4934
        %v4945 = vadd.f32 %v4909, %v4934
        %v4946 = vadd.f32 %v4910, %v4934
        %v4947 = vadd.f32 %v4911, %v4934
        %v4948 = vadd.f32 %v4912, %v4934
        %v4949 = vadd.f32 %v4913, %v4934
        %v4950 = vadd.f32 %v4914, %v4934
        %v4951 = vadd.f32 %v4915, %v4934
        %v4952 = vadd.f32 %v4916, %v4934
        %v4953 = vadd.f32 %v4917, %v4934
        %v4954 = vadd.f32 %v4918, %v4934
        %v4955 = vadd.f32 %v4919, %v4934
        %v4956 = vadd.f32 %v4920, %v4934
        %v4957 = vadd.f32 %v4921, %v4934
        %v4958 = vadd.f32 %v4922, %v4934
        %v4959 = vadd.f32 %v4923, %v4934
        %v4960 = vadd.f32 %v4924, %v4934
        %v4961 = vadd.f32 %v4925, %v4934
        %v4962 = vadd.f32 %v4926, %v4934
        %v4963 = vadd.f32 %v4927, %v4934
        %v4964 = vadd.f32 %v4928, %v4934
        %v4965 = vadd.f32 %v4929, %v4934
        %v4966 = vadd.f32 %v4930, %v4934
        %v4967 = vadd.f32 %v4931, %v4934
        %4968 = vst.msk [vmem:[%s425] sm:$0xff] %vm1031, %v4936
        %4969 = vst.msk [vmem:[%s425 + $0x8] sm:$0xff] %vm1031, %v4937
        %4970 = vst.msk [vmem:[%s425 + $0x10] sm:$0xff] %vm1031, %v4938
        %4971 = vst.msk [vmem:[%s425 + $0x18] sm:$0xff] %vm1031, %v4939
        %4972 = vst.msk [vmem:[%s425 + $0x20] sm:$0xff] %vm1031, %v4940
        %4973 = vst.msk [vmem:[%s425 + $0x28] sm:$0xff] %vm1031, %v4941
        %4974 = vst.msk [vmem:[%s425 + $0x30] sm:$0xff] %vm1031, %v4942
        %4975 = vst.msk [vmem:[%s425 + $0x38] sm:$0xff] %vm1031, %v4943
        %4976 = vst.msk [vmem:[%s425 + $0x40] sm:$0xff] %vm1031, %v4944
        %4977 = vst.msk [vmem:[%s425 + $0x48] sm:$0xff] %vm1031, %v4945
        %4978 = vst.msk [vmem:[%s425 + $0x50] sm:$0xff] %vm1031, %v4946
        %4979 = vst.msk [vmem:[%s425 + $0x58] sm:$0xff] %vm1031, %v4947
        %4980 = vst.msk [vmem:[%s425 + $0x60] sm:$0xff] %vm1031, %v4948
        %4981 = vst.msk [vmem:[%s425 + $0x68] sm:$0xff] %vm1031, %v4949
        %4982 = vst.msk [vmem:[%s425 + $0x70] sm:$0xff] %vm1031, %v4950
        %4983 = vst.msk [vmem:[%s425 + $0x78] sm:$0xff] %vm1031, %v4951
        %4984 = vst.msk [vmem:[%s425 + $0x80] sm:$0xff] %vm1031, %v4952
        %4985 = vst.msk [vmem:[%s425 + $0x88] sm:$0xff] %vm1031, %v4953
        %4986 = vst.msk [vmem:[%s425 + $0x90] sm:$0xff] %vm1031, %v4954
        %4987 = vst.msk [vmem:[%s425 + $0x98] sm:$0xff] %vm1031, %v4955
        %4988 = vst.msk [vmem:[%s425 + $0xa0] sm:$0xff] %vm1031, %v4956
        %4989 = vst.msk [vmem:[%s425 + $0xa8] sm:$0xff] %vm1031, %v4957
        %4990 = vst.msk [vmem:[%s425 + $0xb0] sm:$0xff] %vm1031, %v4958
        %4991 = vst.msk [vmem:[%s425 + $0xb8] sm:$0xff] %vm1031, %v4959
        %4992 = vst.msk [vmem:[%s425 + $0xc0] sm:$0xff] %vm1031, %v4960
        %4993 = vst.msk [vmem:[%s425 + $0xc8] sm:$0xff] %vm1031, %v4961
        %4994 = vst.msk [vmem:[%s425 + $0xd0] sm:$0xff] %vm1031, %v4962
        %4995 = vst.msk [vmem:[%s425 + $0xd8] sm:$0xff] %vm1031, %v4963
        %4996 = vst.msk [vmem:[%s425 + $0xe0] sm:$0xff] %vm1031, %v4964
        %4997 = vst.msk [vmem:[%s425 + $0xe8] sm:$0xff] %vm1031, %v4965
        %4998 = vst.msk [vmem:[%s425 + $0xf0] sm:$0xff] %vm1031, %v4966
        %4999 = vst.msk [vmem:[%s425 + $0xf8] sm:$0xff] %vm1031, %v4967
        %s5000 = sand.u32 %s241, 1
        %s5001 = scalar_lea.sflag [#allocation5], %s5000
        %s5002 = sand.u32 %s241, 1
        %s5003 = smul.addr %s5002, 256
        %s5004 = scalar_lea.vmem [#allocation8], %s5003
        %s5005 = sand.u32 %s267, 1
        %s5006 = scalar_lea.sflag [#allocation10], %s5005
        %s5007 = sand.u32 %s267, 1
        %s5008 = smul.addr %s5007, 256
        %s5009 = scalar_lea.vmem [#allocation9], %s5008
        // Predicated region
        $region65: #{tpu_custom_call.1} parent=55 // pred_check
          %p5010 = pneg %p251
        $region66: #{tpu_custom_call.1} parent=55 // pred_check_branch
          %5012 = sbr.rel (%p5010) target = $region68
        $region67: #{tpu_custom_call.1} parent=55 // pred_region
          %5014 = vsyncadd %s5001, 0
          %s5015 = smul.addr %s34, 32
          %s5016 = smul.addr %s5015, 8
          %s5017 = scalar_lea.hbm %s9, %s5016
          %s5018 = sshll.u32 %s5004, 4
          %s5019 = int_to_ptr.vmem [resolvable:$true] %s5018
          %s5020 = sshll.u32 %s5017, 4
          %s5021 = int_to_ptr.hbm [resolvable:$true] %s5020
          %5026 = dma.vmem_to_hbm [thread:$0]  %s5019, 4096, %s5021, %s5001, 128, 128, 8
        $region68: #{tpu_custom_call.1} parent=55 // pred_fallthru
          _
        // Predicated region
        $region69: #{tpu_custom_call.1} parent=55 // pred_check
          %p5027 = pneg %p277
        $region70: #{tpu_custom_call.1} parent=55 // pred_check_branch
          %5029 = sbr.rel (%p5027) target = $region72
        $region71: #{tpu_custom_call.1} parent=55 // pred_region
          %5031 = vsyncadd %s5006, 0
          %s5032 = smul.addr %s34, 32
          %s5033 = smul.addr %s5032, 8
          %s5034 = scalar_lea.hbm %s10, %s5033
          %s5035 = sshll.u32 %s5009, 4
          %s5036 = int_to_ptr.vmem [resolvable:$true] %s5035
          %s5037 = sshll.u32 %s5034, 4
          %s5038 = int_to_ptr.hbm [resolvable:$true] %s5037
          %5043 = dma.vmem_to_hbm [thread:$0]  %s5036, 4096, %s5038, %s5006, 128, 128, 8
        $region72: #{tpu_custom_call.1} parent=55 // pred_fallthru
          _
      $region56: #{tpu_custom_call.1} parent=5 // pred_fallthru
        _
      %p5044 = scmp.le.s32.totalorder 2, %s29
      // Predicated region
      $region73: #{tpu_custom_call.1} parent=5 // pred_check
        %p5045 = pneg %p5044
      $region74: #{tpu_custom_call.1} parent=5 // pred_check_branch
        %5047 = sbr.rel (%p5045) target = $region76
      $region75: #{tpu_custom_call.1} parent=5 // pred_region
        %s5048 = ssub.s32 %s29, 2
        // Predicated region
        $region77: #{tpu_custom_call.1} parent=75 // pred_check
          %p5049 = pneg %p257
        $region78: #{tpu_custom_call.1} parent=75 // pred_check_branch
          %5051 = sbr.rel (%p5049) target = $region80
        $region79: #{tpu_custom_call.1} parent=75 // pred_region
          %s5052 = sand.u32 %s242, 1
          %s5053 = scalar_lea.sflag [#allocation5], %s5052
          %s5054 = sand.u32 %s242, 1
          %s5055 = smul.addr %s5054, 256
          %s5056 = scalar_lea.vmem [#allocation8], %s5055
          %5058 = dma.done %s5053, 4096
        $region80: #{tpu_custom_call.1} parent=75 // pred_fallthru
          _
        // Predicated region
        $region81: #{tpu_custom_call.1} parent=75 // pred_check
          %p5059 = pneg %p283
        $region82: #{tpu_custom_call.1} parent=75 // pred_check_branch
          %5061 = sbr.rel (%p5059) target = $region84
        $region83: #{tpu_custom_call.1} parent=75 // pred_region
          %s5062 = sand.u32 %s268, 1
          %s5063 = scalar_lea.sflag [#allocation10], %s5062
          %s5064 = sand.u32 %s268, 1
          %s5065 = smul.addr %s5064, 256
          %s5066 = scalar_lea.vmem [#allocation9], %s5065
          %5068 = dma.done %s5063, 4096
        $region84: #{tpu_custom_call.1} parent=75 // pred_fallthru
          _
      $region76: #{tpu_custom_call.1} parent=5 // pred_fallthru
        _
    $region6: #{tpu_custom_call.1} parent=1 // loop_footer
      %s33 = sadd.s32 1, %s29
    $region7: #{tpu_custom_call.1} parent=1 // loop_footer_branch
      %28 = sbr.rel target = $region3
    $region8: #{tpu_custom_call.1} parent=1 // loop_exit
      _
    %5069 = vsyncpa [#allocation4], 1
    %s5070 = scalar_lea.sflag [#allocation4], 1
    %5071 = vsyncpa %s5070, 1
    %5072 = vsyncpa [#allocation7], 1
    %s5073 = scalar_lea.sflag [#allocation7], 1
    %5074 = vsyncpa %s5073, 1
    %5075 = vsyncpa [#allocation5], 1
    %s5076 = scalar_lea.sflag [#allocation5], 1
    %5077 = vsyncpa %s5076, 1
    %5078 = vsyncpa [#allocation10], 1
    %s5079 = scalar_lea.sflag [#allocation10], 1
    %5080 = vsyncpa %s5079, 1

</llo_original>
